<compile_context>
chip_gen: v5e
topology: v5e:2x2
jax: 0.10.0
libtpu: 0.0.40
codegen_flags: <defaults>
</compile_context>

<pallas_src>
import jax
import jax.numpy as jnp
from jax.experimental import pallas as pl
from jax.experimental.pallas import tpu as pltpu

# ----------------------------- config ---------------------------------------
SEQ_LEN = 8                    # args.seq_len
T = SEQ_LEN + 2                # +2 for CLS/SEP (head uses 32 * (seq_len + 2))
HIDDEN = 32                    # bert.hidden
HEADS = 2
HEAD_DIM = HIDDEN // HEADS
FFN = 4 * HIDDEN               # 128
LAYERS = 2
VOCAB = 100
VOCAB_PAD = 128                # lane-pad vocab for the one-hot gather matmul
BATCH = 2
BT = BATCH * T                 # 20 : batch stacked along sublanes
EPS = 1e-12
SCALE = 1.0 / (HEAD_DIM ** 0.5)
LANES = 128
NEG_INF = -1e30


# ----------------------------- packed weight slab layout --------------------
def _entries():
    """(name, rows) for every parameter; all are stored at lane offset 0."""
    e = [("tok_emb", VOCAB_PAD), ("pos_emb", BT), ("emb_ln_g", 1), ("emb_ln_b", 1)]
    for l in range(LAYERS):
        e += [(f"wq{l}", HIDDEN), (f"bq{l}", 1),
              (f"wk{l}", HIDDEN), (f"bk{l}", 1),
              (f"wv{l}", HIDDEN), (f"bv{l}", 1),
              (f"wo{l}", HIDDEN), (f"bo{l}", 1),
              (f"ln1g{l}", 1), (f"ln1b{l}", 1),
              (f"w1{l}", HIDDEN), (f"b1{l}", 1),
              (f"w2{l}", FFN), (f"b2{l}", 1),
              (f"ln2g{l}", 1), (f"ln2b{l}", 1)]
    e += [("dr_w", HIDDEN), ("dr_b", 1),
          ("h1_w", 32 * T), ("h1_b", 1),
          ("h2_w", FFN), ("h2_b", 1),
          ("h3_w", 64), ("h3_b", 1)]
    return e


def _round8(n):
    return (n + 7) // 8 * 8


SLAB_OFF = {}
_off = 0
for _name, _rows in _entries():
    SLAB_OFF[_name] = _off           # every entry starts on an 8-row boundary
    _off += _round8(_rows)
SLAB_ROWS = _off                     # 1480 rows -> ~740 KiB f32


def pack_slab(params):
    """Pack every weight/bias into one (SLAB_ROWS, 128) f32 slab (done once)."""
    tensors = dict(params)
    tensors["pos_emb"] = jnp.tile(params["pos_emb"], (BATCH, 1))   # pre-tile over batch
    slab = jnp.zeros((SLAB_ROWS, LANES), jnp.float32)
    for name, _rows in _entries():
        a = jnp.asarray(tensors[name], jnp.float32)
        r0 = SLAB_OFF[name]
        slab = slab.at[r0:r0 + a.shape[0], :a.shape[1]].set(a)
    return slab


# ----------------------------- fused Pallas kernel --------------------------
def _layernorm(x, g, b):
    mu = jnp.mean(x, axis=-1, keepdims=True)
    var = jnp.mean((x - mu) ** 2, axis=-1, keepdims=True)
    return (x - mu) * jax.lax.rsqrt(var + EPS) * g + b


def bert_fused_kernel(tok_ref, slab_ref, out_ref):
    """Whole forward pass for both (sublane-stacked) batch elements."""
    f32 = jnp.float32
    D, H, dh = HIDDEN, HEADS, HEAD_DIM

    def w(name, rows, cols=LANES):
        r0 = SLAB_OFF[name]
        return slab_ref[r0:r0 + rows, 0:cols]

    # ---- one-hot embedding gather; tokens come from SMEM scalar prefetch ----
    row = jax.lax.broadcasted_iota(jnp.int32, (BT, 1), 0)
    tok_col = jnp.zeros((BT, 1), jnp.int32)
    for i in range(BT):
        tok_col = jnp.where(row == i, tok_ref[i], tok_col)
    vocab_lane = jax.lax.broadcasted_iota(jnp.int32, (BT, VOCAB_PAD), 1)
    onehot = (tok_col == vocab_lane).astype(f32)                     # (BT, 128)

    x = jnp.dot(onehot, w("tok_emb", VOCAB_PAD, D), preferred_element_type=f32)
    x = x + w("pos_emb", BT, D)                                      # pre-tiled over batch
    x = _layernorm(x, w("emb_ln_g", 1, D), w("emb_ln_b", 1, D))      # (BT, D)

    # ---- hoisted masks (computed once) ----
    lane_d = jax.lax.broadcasted_iota(jnp.int32, (1, D), 1)
    head_mask = [((lane_d >= h * dh) & (lane_d < (h + 1) * dh)).astype(f32)
                 for h in range(H)]
    ri = jax.lax.broadcasted_iota(jnp.int32, (BT, BT), 0)
    ci = jax.lax.broadcasted_iota(jnp.int32, (BT, BT), 1)
    same = None
    for b in range(BATCH):
        rb = (ri >= b * T) & (ri < (b + 1) * T)
        cb = (ci >= b * T) & (ci < (b + 1) * T)
        same = (rb & cb) if same is None else (same | (rb & cb))
    attn_bias = jnp.where(same, 0.0, NEG_INF)                        # block-diagonal

    # ---- encoder layers (statically unrolled, LAYERS = 2) ----
    for l in range(LAYERS):
        q = jnp.dot(x, w(f"wq{l}", D, D), preferred_element_type=f32) + w(f"bq{l}", 1, D)
        k = jnp.dot(x, w(f"wk{l}", D, D), preferred_element_type=f32) + w(f"bk{l}", 1, D)
        v = jnp.dot(x, w(f"wv{l}", D, D), preferred_element_type=f32) + w(f"bv{l}", 1, D)
        kt = k.T                                                     # (D, BT), once per layer

        ctx = jnp.zeros((BT, D), f32)
        for h in range(H):
            # lane-masked head selection: no compacting slices, off-head lanes are 0
            s = jnp.dot(q * head_mask[h], kt, preferred_element_type=f32) * SCALE + attn_bias
            s = s - jnp.max(s, axis=-1, keepdims=True)
            p = jnp.exp(s)
            p = p * pl.reciprocal(jnp.sum(p, axis=-1, keepdims=True), approx=True)
            ctx = ctx + jnp.dot(p, v * head_mask[h], preferred_element_type=f32)
        # heads landed in disjoint lanes of ctx -> single folded output projection
        attn = jnp.dot(ctx, w(f"wo{l}", D, D), preferred_element_type=f32) + w(f"bo{l}", 1, D)
        x = _layernorm(x + attn, w(f"ln1g{l}", 1, D), w(f"ln1b{l}", 1, D))

        ff = jnp.dot(x, w(f"w1{l}", D, FFN), preferred_element_type=f32) + w(f"b1{l}", 1, FFN)
        # TODO(synk): PyTorch nn.GELU defaults to exact erf; tanh approximation used here.
        ff = jax.nn.gelu(ff)
        ff = jnp.dot(ff, w(f"w2{l}", FFN, D), preferred_element_type=f32) + w(f"b2{l}", 1, D)
        x = _layernorm(x + ff, w(f"ln2g{l}", 1, D), w(f"ln2b{l}", 1, D))

    # ---- dim_reduct + ReLU + (flatten @ h1_w) with no reshape / serial chain ----
    xr = jnp.dot(x, w("dr_w", D, 32), preferred_element_type=f32) + w("dr_b", 1, 32)
    r = jnp.maximum(xr, 0.0)                                         # (BT, 32)

    h1_off = SLAB_OFF["h1_w"]
    d_acc = jnp.zeros((BT, FFN), f32)
    for t in range(T):
        blk = slab_ref[h1_off + t * 32: h1_off + (t + 1) * 32, :]    # (32, 128), 8-aligned rows
        c_t = jnp.dot(r, blk, preferred_element_type=f32)            # independent matmuls
        sel = None
        for b in range(BATCH):
            m = (row == b * T + t)
            sel = m if sel is None else (sel | m)
        d_acc = d_acc + jnp.where(sel, c_t, 0.0)                     # keep row's own t-block
    rb2 = jax.lax.broadcasted_iota(jnp.int32, (BATCH, BT), 0)
    cb2 = jax.lax.broadcasted_iota(jnp.int32, (BATCH, BT), 1)
    bsel = ((cb2 >= rb2 * T) & (cb2 < (rb2 + 1) * T)).astype(f32)    # (B, BT) row-sum selector
    h1 = jnp.dot(bsel, d_acc, preferred_element_type=f32) + w("h1_b", 1, FFN)
    h1 = jnp.maximum(h1, 0.0)                                        # (B, 128)

    h2 = jnp.dot(h1, w("h2_w", FFN, 64), preferred_element_type=f32) + w("h2_b", 1, 64)
    h2 = jnp.maximum(h2, 0.0)                                        # (B, 64)

    # h3 weight is stored zero-padded to 128 lanes -> lane-dense output store
    out = jnp.dot(h2, w("h3_w", 64), preferred_element_type=f32) + w("h3_b", 1)
    out_ref[...] = out                                               # (B, 128); lane 0 = result


# ----------------------------- wrapper ---------------------------------------
def bert_forward(slab, tokens):
    tok_flat = tokens.reshape(-1).astype(jnp.int32)                  # (BT,) -> SMEM prefetch
    out = pl.pallas_call(
        bert_fused_kernel,
        out_shape=jax.ShapeDtypeStruct((BATCH, LANES), jnp.float32),
        grid_spec=pltpu.PrefetchScalarGridSpec(
            num_scalar_prefetch=1,
            grid=(1,),
            in_specs=[pl.BlockSpec((SLAB_ROWS, LANES), lambda i, tok: (0, 0))],
            out_specs=pl.BlockSpec((BATCH, LANES), lambda i, tok: (0, 0)),
        ),
        compiler_params=pltpu.CompilerParams(dimension_semantics=("arbitrary",)),
    )(tok_flat, slab)
    return out[:, :1]                                                # (B, 1)


# ----------------------------- parameters -----------------------------------
def init_params(key):
    def nrm(k, shape, scale=0.02):
        return (scale * jax.random.normal(k, shape)).astype(jnp.float32)

    ks = iter(jax.random.split(key, 64))
    D = HIDDEN
    p = {
        "tok_emb": nrm(next(ks), (VOCAB, D)),
        "pos_emb": nrm(next(ks), (T, D)),
        "emb_ln_g": jnp.ones((1, D), jnp.float32),
        "emb_ln_b": jnp.zeros((1, D), jnp.float32),
    }
    for l in range(LAYERS):
        p[f"wq{l}"] = nrm(next(ks), (D, D)); p[f"bq{l}"] = nrm(next(ks), (1, D))
        p[f"wk{l}"] = nrm(next(ks), (D, D)); p[f"bk{l}"] = nrm(next(ks), (1, D))
        p[f"wv{l}"] = nrm(next(ks), (D, D)); p[f"bv{l}"] = nrm(next(ks), (1, D))
        p[f"wo{l}"] = nrm(next(ks), (D, D)); p[f"bo{l}"] = nrm(next(ks), (1, D))
        p[f"ln1g{l}"] = jnp.ones((1, D), jnp.float32)
        p[f"ln1b{l}"] = jnp.zeros((1, D), jnp.float32)
        p[f"w1{l}"] = nrm(next(ks), (D, FFN)); p[f"b1{l}"] = nrm(next(ks), (1, FFN))
        p[f"w2{l}"] = nrm(next(ks), (FFN, D)); p[f"b2{l}"] = nrm(next(ks), (1, D))
        p[f"ln2g{l}"] = jnp.ones((1, D), jnp.float32)
        p[f"ln2b{l}"] = jnp.zeros((1, D), jnp.float32)
    p["dr_w"] = nrm(next(ks), (D, 32)); p["dr_b"] = nrm(next(ks), (1, 32))
    p["h1_w"] = nrm(next(ks), (32 * T, FFN)); p["h1_b"] = nrm(next(ks), (1, FFN))
    p["h2_w"] = nrm(next(ks), (FFN, 64)); p["h2_b"] = nrm(next(ks), (1, 64))
    p["h3_w"] = nrm(next(ks), (64, 1)); p["h3_b"] = nrm(next(ks), (1, 1))
    return p


# ----------------------------- pure-JAX reference ----------------------------
def bert_forward_ref(params, tokens):
    B = tokens.shape[0]
    D, H, dh = HIDDEN, HEADS, HEAD_DIM

    def ln(x, g, b):
        mu = jnp.mean(x, axis=-1, keepdims=True)
        var = jnp.mean((x - mu) ** 2, axis=-1, keepdims=True)
        return (x - mu) * jax.lax.rsqrt(var + EPS) * g + b

    x = params["tok_emb"][tokens] + params["pos_emb"][None]                 # (B, T, D)
    x = ln(x, params["emb_ln_g"], params["emb_ln_b"])
    for l in range(LAYERS):
        q = x @ params[f"wq{l}"] + params[f"bq{l}"]
        k = x @ params[f"wk{l}"] + params[f"bk{l}"]
        v = x @ params[f"wv{l}"] + params[f"bv{l}"]

        def heads(a):
            return a.reshape(B, T, H, dh).transpose(0, 2, 1, 3)

        qh, kh, vh = heads(q), heads(k), heads(v)
        s = jnp.einsum("bhqd,bhkd->bhqk", qh, kh) * SCALE
        p = jax.nn.softmax(s, axis=-1)
        o = jnp.einsum("bhqk,bhkd->bhqd", p, vh).transpose(0, 2, 1, 3).reshape(B, T, D)
        x = ln(x + o @ params[f"wo{l}"] + params[f"bo{l}"],
               params[f"ln1g{l}"], params[f"ln1b{l}"])
        ff = jax.nn.gelu(x @ params[f"w1{l}"] + params[f"b1{l}"])
        ff = ff @ params[f"w2{l}"] + params[f"b2{l}"]
        x = ln(x + ff, params[f"ln2g{l}"], params[f"ln2b{l}"])

    xr = x @ params["dr_w"] + params["dr_b"]                                # (B, T, 32)
    flat = jnp.maximum(xr, 0.0).reshape(B, T * 32)
    h = jnp.maximum(flat @ params["h1_w"] + params["h1_b"], 0.0)
    h = jnp.maximum(h @ params["h2_w"] + params["h2_b"], 0.0)
    return h @ params["h3_w"] + params["h3_b"]                              # (B, 1)


# ----------------------------- main ------------------------------------------
if __name__ == "__main__":
    key = jax.random.PRNGKey(0)
    pkey, dkey = jax.random.split(key)
    params = init_params(pkey)
    tokens = jax.random.randint(dkey, (BATCH, T), 0, VOCAB, dtype=jnp.int32)
    assert int(tokens.max()) < VOCAB  # ids in [VOCAB, VOCAB_PAD) would map to a zero embedding

    slab = pack_slab(params)          # one-time weight packing (kept out of the per-call path)
    fwd = jax.jit(bert_forward)
    out = jax.block_until_ready(fwd(slab, tokens))
    assert out.shape == (BATCH, 1) and out.dtype == jnp.float32
    assert bool(jnp.all(jnp.isfinite(out)))

    # sanity-check against a pure-JAX reference (loose tolerance: guards against
    # structural/logic errors, not MXU / approx-reciprocal precision differences).
    with jax.default_matmul_precision("highest"):
        ref = bert_forward_ref(params, tokens)
    rel_err = float(jnp.max(jnp.abs(out - ref)) / (jnp.max(jnp.abs(ref)) + 1e-8))
    assert rel_err < 0.1, (rel_err, out, ref)

    print("KERNEL_OK")
</pallas_src>

<mosaic_0001>
module attributes {stable_mosaic.version = 11 : i64} {
  func.func @bert_fused_kernel(%arg0: i32, %arg1: memref<20xi32, #tpu.memory_space<smem>>, %arg2: memref<1480x128xf32, #tpu.memory_space<vmem>>, %arg3: memref<2x128xf32, #tpu.memory_space<vmem>>) attributes {dimension_semantics = [#tpu.dimension_semantics<arbitrary>], iteration_bounds = array<i64: 1>, scalar_prefetch = 1 : i64, scratch_operands = 0 : i64, tpu.core_type = #tpu.core_type<tc>, window_params = [{pipeline_mode = #tpu.pipeline_mode<synchronous>, transform_indices = @transform_0, window_bounds = array<i64: 1480, 128>}, {pipeline_mode = #tpu.pipeline_mode<synchronous>, transform_indices = @transform_1, window_bounds = array<i64: 2, 128>}]} {
    %0 = tpu.iota {dimensions = array<i32: 0>} : vector<20x1xi32>
    %c0_i32 = arith.constant 0 : i32
    %1 = vector.broadcast %c0_i32 : i32 to vector<20x1xi32>
    %c0_i32_0 = arith.constant 0 : i32
    %2 = vector.broadcast %c0_i32_0 : i32 to vector<20x1xi32>
    %3 = arith.cmpi eq, %0, %2 : vector<20x1xi32>
    %c0 = arith.constant 0 : index
    %4 = memref.load %arg1[%c0] : memref<20xi32, #tpu.memory_space<smem>>
    %5 = vector.broadcast %4 : i32 to vector<20x1xi32>
    %6 = arith.select %3, %5, %1 : vector<20x1xi1>, vector<20x1xi32>
    %c1_i32 = arith.constant 1 : i32
    %7 = vector.broadcast %c1_i32 : i32 to vector<20x1xi32>
    %8 = arith.cmpi eq, %0, %7 : vector<20x1xi32>
    %c1 = arith.constant 1 : index
    %9 = memref.load %arg1[%c1] : memref<20xi32, #tpu.memory_space<smem>>
    %10 = vector.broadcast %9 : i32 to vector<20x1xi32>
    %11 = arith.select %8, %10, %6 : vector<20x1xi1>, vector<20x1xi32>
    %c2_i32 = arith.constant 2 : i32
    %12 = vector.broadcast %c2_i32 : i32 to vector<20x1xi32>
    %13 = arith.cmpi eq, %0, %12 : vector<20x1xi32>
    %c2 = arith.constant 2 : index
    %14 = memref.load %arg1[%c2] : memref<20xi32, #tpu.memory_space<smem>>
    %15 = vector.broadcast %14 : i32 to vector<20x1xi32>
    %16 = arith.select %13, %15, %11 : vector<20x1xi1>, vector<20x1xi32>
    %c3_i32 = arith.constant 3 : i32
    %17 = vector.broadcast %c3_i32 : i32 to vector<20x1xi32>
    %18 = arith.cmpi eq, %0, %17 : vector<20x1xi32>
    %c3 = arith.constant 3 : index
    %19 = memref.load %arg1[%c3] : memref<20xi32, #tpu.memory_space<smem>>
    %20 = vector.broadcast %19 : i32 to vector<20x1xi32>
    %21 = arith.select %18, %20, %16 : vector<20x1xi1>, vector<20x1xi32>
    %c4_i32 = arith.constant 4 : i32
    %22 = vector.broadcast %c4_i32 : i32 to vector<20x1xi32>
    %23 = arith.cmpi eq, %0, %22 : vector<20x1xi32>
    %c4 = arith.constant 4 : index
    %24 = memref.load %arg1[%c4] : memref<20xi32, #tpu.memory_space<smem>>
    %25 = vector.broadcast %24 : i32 to vector<20x1xi32>
    %26 = arith.select %23, %25, %21 : vector<20x1xi1>, vector<20x1xi32>
    %c5_i32 = arith.constant 5 : i32
    %27 = vector.broadcast %c5_i32 : i32 to vector<20x1xi32>
    %28 = arith.cmpi eq, %0, %27 : vector<20x1xi32>
    %c5 = arith.constant 5 : index
    %29 = memref.load %arg1[%c5] : memref<20xi32, #tpu.memory_space<smem>>
    %30 = vector.broadcast %29 : i32 to vector<20x1xi32>
    %31 = arith.select %28, %30, %26 : vector<20x1xi1>, vector<20x1xi32>
    %c6_i32 = arith.constant 6 : i32
    %32 = vector.broadcast %c6_i32 : i32 to vector<20x1xi32>
    %33 = arith.cmpi eq, %0, %32 : vector<20x1xi32>
    %c6 = arith.constant 6 : index
    %34 = memref.load %arg1[%c6] : memref<20xi32, #tpu.memory_space<smem>>
    %35 = vector.broadcast %34 : i32 to vector<20x1xi32>
    %36 = arith.select %33, %35, %31 : vector<20x1xi1>, vector<20x1xi32>
    %c7_i32 = arith.constant 7 : i32
    %37 = vector.broadcast %c7_i32 : i32 to vector<20x1xi32>
    %38 = arith.cmpi eq, %0, %37 : vector<20x1xi32>
    %c7 = arith.constant 7 : index
    %39 = memref.load %arg1[%c7] : memref<20xi32, #tpu.memory_space<smem>>
    %40 = vector.broadcast %39 : i32 to vector<20x1xi32>
    %41 = arith.select %38, %40, %36 : vector<20x1xi1>, vector<20x1xi32>
    %c8_i32 = arith.constant 8 : i32
    %42 = vector.broadcast %c8_i32 : i32 to vector<20x1xi32>
    %43 = arith.cmpi eq, %0, %42 : vector<20x1xi32>
    %c8 = arith.constant 8 : index
    %44 = memref.load %arg1[%c8] : memref<20xi32, #tpu.memory_space<smem>>
    %45 = vector.broadcast %44 : i32 to vector<20x1xi32>
    %46 = arith.select %43, %45, %41 : vector<20x1xi1>, vector<20x1xi32>
    %c9_i32 = arith.constant 9 : i32
    %47 = vector.broadcast %c9_i32 : i32 to vector<20x1xi32>
    %48 = arith.cmpi eq, %0, %47 : vector<20x1xi32>
    %c9 = arith.constant 9 : index
    %49 = memref.load %arg1[%c9] : memref<20xi32, #tpu.memory_space<smem>>
    %50 = vector.broadcast %49 : i32 to vector<20x1xi32>
    %51 = arith.select %48, %50, %46 : vector<20x1xi1>, vector<20x1xi32>
    %c10_i32 = arith.constant 10 : i32
    %52 = vector.broadcast %c10_i32 : i32 to vector<20x1xi32>
    %53 = arith.cmpi eq, %0, %52 : vector<20x1xi32>
    %c10 = arith.constant 10 : index
    %54 = memref.load %arg1[%c10] : memref<20xi32, #tpu.memory_space<smem>>
    %55 = vector.broadcast %54 : i32 to vector<20x1xi32>
    %56 = arith.select %53, %55, %51 : vector<20x1xi1>, vector<20x1xi32>
    %c11_i32 = arith.constant 11 : i32
    %57 = vector.broadcast %c11_i32 : i32 to vector<20x1xi32>
    %58 = arith.cmpi eq, %0, %57 : vector<20x1xi32>
    %c11 = arith.constant 11 : index
    %59 = memref.load %arg1[%c11] : memref<20xi32, #tpu.memory_space<smem>>
    %60 = vector.broadcast %59 : i32 to vector<20x1xi32>
    %61 = arith.select %58, %60, %56 : vector<20x1xi1>, vector<20x1xi32>
    %c12_i32 = arith.constant 12 : i32
    %62 = vector.broadcast %c12_i32 : i32 to vector<20x1xi32>
    %63 = arith.cmpi eq, %0, %62 : vector<20x1xi32>
    %c12 = arith.constant 12 : index
    %64 = memref.load %arg1[%c12] : memref<20xi32, #tpu.memory_space<smem>>
    %65 = vector.broadcast %64 : i32 to vector<20x1xi32>
    %66 = arith.select %63, %65, %61 : vector<20x1xi1>, vector<20x1xi32>
    %c13_i32 = arith.constant 13 : i32
    %67 = vector.broadcast %c13_i32 : i32 to vector<20x1xi32>
    %68 = arith.cmpi eq, %0, %67 : vector<20x1xi32>
    %c13 = arith.constant 13 : index
    %69 = memref.load %arg1[%c13] : memref<20xi32, #tpu.memory_space<smem>>
    %70 = vector.broadcast %69 : i32 to vector<20x1xi32>
    %71 = arith.select %68, %70, %66 : vector<20x1xi1>, vector<20x1xi32>
    %c14_i32 = arith.constant 14 : i32
    %72 = vector.broadcast %c14_i32 : i32 to vector<20x1xi32>
    %73 = arith.cmpi eq, %0, %72 : vector<20x1xi32>
    %c14 = arith.constant 14 : index
    %74 = memref.load %arg1[%c14] : memref<20xi32, #tpu.memory_space<smem>>
    %75 = vector.broadcast %74 : i32 to vector<20x1xi32>
    %76 = arith.select %73, %75, %71 : vector<20x1xi1>, vector<20x1xi32>
    %c15_i32 = arith.constant 15 : i32
    %77 = vector.broadcast %c15_i32 : i32 to vector<20x1xi32>
    %78 = arith.cmpi eq, %0, %77 : vector<20x1xi32>
    %c15 = arith.constant 15 : index
    %79 = memref.load %arg1[%c15] : memref<20xi32, #tpu.memory_space<smem>>
    %80 = vector.broadcast %79 : i32 to vector<20x1xi32>
    %81 = arith.select %78, %80, %76 : vector<20x1xi1>, vector<20x1xi32>
    %c16_i32 = arith.constant 16 : i32
    %82 = vector.broadcast %c16_i32 : i32 to vector<20x1xi32>
    %83 = arith.cmpi eq, %0, %82 : vector<20x1xi32>
    %c16 = arith.constant 16 : index
    %84 = memref.load %arg1[%c16] : memref<20xi32, #tpu.memory_space<smem>>
    %85 = vector.broadcast %84 : i32 to vector<20x1xi32>
    %86 = arith.select %83, %85, %81 : vector<20x1xi1>, vector<20x1xi32>
    %c17_i32 = arith.constant 17 : i32
    %87 = vector.broadcast %c17_i32 : i32 to vector<20x1xi32>
    %88 = arith.cmpi eq, %0, %87 : vector<20x1xi32>
    %c17 = arith.constant 17 : index
    %89 = memref.load %arg1[%c17] : memref<20xi32, #tpu.memory_space<smem>>
    %90 = vector.broadcast %89 : i32 to vector<20x1xi32>
    %91 = arith.select %88, %90, %86 : vector<20x1xi1>, vector<20x1xi32>
    %c18_i32 = arith.constant 18 : i32
    %92 = vector.broadcast %c18_i32 : i32 to vector<20x1xi32>
    %93 = arith.cmpi eq, %0, %92 : vector<20x1xi32>
    %c18 = arith.constant 18 : index
    %94 = memref.load %arg1[%c18] : memref<20xi32, #tpu.memory_space<smem>>
    %95 = vector.broadcast %94 : i32 to vector<20x1xi32>
    %96 = arith.select %93, %95, %91 : vector<20x1xi1>, vector<20x1xi32>
    %c19_i32 = arith.constant 19 : i32
    %97 = vector.broadcast %c19_i32 : i32 to vector<20x1xi32>
    %98 = arith.cmpi eq, %0, %97 : vector<20x1xi32>
    %c19 = arith.constant 19 : index
    %99 = memref.load %arg1[%c19] : memref<20xi32, #tpu.memory_space<smem>>
    %100 = vector.broadcast %99 : i32 to vector<20x1xi32>
    %101 = arith.select %98, %100, %96 : vector<20x1xi1>, vector<20x1xi32>
    %102 = tpu.iota {dimensions = array<i32: 1>} : vector<20x128xi32>
    %103 = vector.broadcast %101 : vector<20x1xi32> to vector<20x128xi32>
    %104 = arith.cmpi eq, %103, %102 : vector<20x128xi32>
    %105 = arith.extui %104 : vector<20x128xi1> to vector<20x128xi32>
    %106 = arith.sitofp %105 : vector<20x128xi32> to vector<20x128xf32>
    %c0_1 = arith.constant 0 : index
    %c0_2 = arith.constant 0 : index
    %107 = vector.load %arg2[%c0_1, %c0_2] : memref<1480x128xf32, #tpu.memory_space<vmem>>, vector<128x32xf32>
    %cst = arith.constant dense<0.000000e+00> : vector<20x32xf32>
    %108 = tpu.matmul %106, %107, %cst {dimension_numbers = #tpu.dot_dimension_numbers<[1], [0], [0], [1], [0, 0, 1, 1], [], []>} : vector<20x128xf32>, vector<128x32xf32>, vector<20x32xf32> -> vector<20x32xf32>
    %c128 = arith.constant 128 : index
    %c0_3 = arith.constant 0 : index
    %109 = vector.load %arg2[%c128, %c0_3] : memref<1480x128xf32, #tpu.memory_space<vmem>>, vector<20x32xf32>
    %110 = arith.addf %108, %109 : vector<20x32xf32>
    %c152 = arith.constant 152 : index
    %c0_4 = arith.constant 0 : index
    %111 = vector.load %arg2[%c152, %c0_4] : memref<1480x128xf32, #tpu.memory_space<vmem>>, vector<1x32xf32>
    %c160 = arith.constant 160 : index
    %c0_5 = arith.constant 0 : index
    %112 = vector.load %arg2[%c160, %c0_5] : memref<1480x128xf32, #tpu.memory_space<vmem>>, vector<1x32xf32>
    %cst_6 = arith.constant dense<0.000000e+00> : vector<20xf32>
    %113 = vector.multi_reduction <add>, %110, %cst_6 [1] : vector<20x32xf32> to vector<20xf32>
    %114 = vector.shape_cast %113 : vector<20xf32> to vector<20x1xf32>
    %cst_7 = arith.constant 3.200000e+01 : f32
    %115 = vector.broadcast %cst_7 : f32 to vector<20x1xf32>
    %116 = arith.divf %114, %115 : vector<20x1xf32>
    %117 = vector.broadcast %116 : vector<20x1xf32> to vector<20x32xf32>
    %118 = arith.subf %110, %117 : vector<20x32xf32>
    %119 = arith.mulf %118, %118 : vector<20x32xf32>
    %cst_8 = arith.constant dense<0.000000e+00> : vector<20xf32>
    %120 = vector.multi_reduction <add>, %119, %cst_8 [1] : vector<20x32xf32> to vector<20xf32>
    %121 = vector.shape_cast %120 : vector<20xf32> to vector<20x1xf32>
    %cst_9 = arith.constant 3.200000e+01 : f32
    %122 = vector.broadcast %cst_9 : f32 to vector<20x1xf32>
    %123 = arith.divf %121, %122 : vector<20x1xf32>
    %124 = vector.broadcast %116 : vector<20x1xf32> to vector<20x32xf32>
    %125 = arith.subf %110, %124 : vector<20x32xf32>
    %cst_10 = arith.constant 9.99999996E-13 : f32
    %126 = vector.broadcast %cst_10 : f32 to vector<20x1xf32>
    %127 = arith.addf %123, %126 : vector<20x1xf32>
    %128 = math.rsqrt %127 : vector<20x1xf32>
    %129 = vector.broadcast %128 : vector<20x1xf32> to vector<20x32xf32>
    %130 = arith.mulf %125, %129 : vector<20x32xf32>
    %131 = vector.broadcast %111 : vector<1x32xf32> to vector<20x32xf32>
    %132 = arith.mulf %130, %131 : vector<20x32xf32>
    %133 = vector.broadcast %112 : vector<1x32xf32> to vector<20x32xf32>
    %134 = arith.addf %132, %133 : vector<20x32xf32>
    %135 = tpu.iota {dimensions = array<i32: 1>} : vector<1x32xi32>
    %c0_i32_11 = arith.constant 0 : i32
    %136 = vector.broadcast %c0_i32_11 : i32 to vector<1x32xi32>
    %137 = arith.cmpi sge, %135, %136 : vector<1x32xi32>
    %c16_i32_12 = arith.constant 16 : i32
    %138 = vector.broadcast %c16_i32_12 : i32 to vector<1x32xi32>
    %139 = arith.cmpi slt, %135, %138 : vector<1x32xi32>
    %140 = arith.andi %137, %139 : vector<1x32xi1>
    %141 = arith.extui %140 : vector<1x32xi1> to vector<1x32xi32>
    %142 = arith.sitofp %141 : vector<1x32xi32> to vector<1x32xf32>
    %c16_i32_13 = arith.constant 16 : i32
    %143 = vector.broadcast %c16_i32_13 : i32 to vector<1x32xi32>
    %144 = arith.cmpi sge, %135, %143 : vector<1x32xi32>
    %c32_i32 = arith.constant 32 : i32
    %145 = vector.broadcast %c32_i32 : i32 to vector<1x32xi32>
    %146 = arith.cmpi slt, %135, %145 : vector<1x32xi32>
    %147 = arith.andi %144, %146 : vector<1x32xi1>
    %148 = arith.extui %147 : vector<1x32xi1> to vector<1x32xi32>
    %149 = arith.sitofp %148 : vector<1x32xi32> to vector<1x32xf32>
    %150 = tpu.iota {dimensions = array<i32: 0>} : vector<20x20xi32>
    %151 = tpu.iota {dimensions = array<i32: 1>} : vector<20x20xi32>
    %c0_i32_14 = arith.constant 0 : i32
    %152 = vector.broadcast %c0_i32_14 : i32 to vector<20x20xi32>
    %153 = arith.cmpi sge, %150, %152 : vector<20x20xi32>
    %c10_i32_15 = arith.constant 10 : i32
    %154 = vector.broadcast %c10_i32_15 : i32 to vector<20x20xi32>
    %155 = arith.cmpi slt, %150, %154 : vector<20x20xi32>
    %156 = arith.andi %153, %155 : vector<20x20xi1>
    %c0_i32_16 = arith.constant 0 : i32
    %157 = vector.broadcast %c0_i32_16 : i32 to vector<20x20xi32>
    %158 = arith.cmpi sge, %151, %157 : vector<20x20xi32>
    %c10_i32_17 = arith.constant 10 : i32
    %159 = vector.broadcast %c10_i32_17 : i32 to vector<20x20xi32>
    %160 = arith.cmpi slt, %151, %159 : vector<20x20xi32>
    %161 = arith.andi %158, %160 : vector<20x20xi1>
    %162 = arith.andi %156, %161 : vector<20x20xi1>
    %c10_i32_18 = arith.constant 10 : i32
    %163 = vector.broadcast %c10_i32_18 : i32 to vector<20x20xi32>
    %164 = arith.cmpi sge, %150, %163 : vector<20x20xi32>
    %c20_i32 = arith.constant 20 : i32
    %165 = vector.broadcast %c20_i32 : i32 to vector<20x20xi32>
    %166 = arith.cmpi slt, %150, %165 : vector<20x20xi32>
    %167 = arith.andi %164, %166 : vector<20x20xi1>
    %c10_i32_19 = arith.constant 10 : i32
    %168 = vector.broadcast %c10_i32_19 : i32 to vector<20x20xi32>
    %169 = arith.cmpi sge, %151, %168 : vector<20x20xi32>
    %c20_i32_20 = arith.constant 20 : i32
    %170 = vector.broadcast %c20_i32_20 : i32 to vector<20x20xi32>
    %171 = arith.cmpi slt, %151, %170 : vector<20x20xi32>
    %172 = arith.andi %169, %171 : vector<20x20xi1>
    %173 = arith.andi %167, %172 : vector<20x20xi1>
    %174 = arith.ori %162, %173 : vector<20x20xi1>
    %cst_21 = arith.constant 0.000000e+00 : f32
    %cst_22 = arith.constant -1.000000e+30 : f32
    %175 = vector.broadcast %cst_21 : f32 to vector<20x20xf32>
    %176 = vector.broadcast %cst_22 : f32 to vector<20x20xf32>
    %177 = arith.select %174, %175, %176 : vector<20x20xi1>, vector<20x20xf32>
    %c168 = arith.constant 168 : index
    %c0_23 = arith.constant 0 : index
    %178 = vector.load %arg2[%c168, %c0_23] : memref<1480x128xf32, #tpu.memory_space<vmem>>, vector<32x32xf32>
    %cst_24 = arith.constant dense<0.000000e+00> : vector<20x32xf32>
    %179 = tpu.matmul %134, %178, %cst_24 {dimension_numbers = #tpu.dot_dimension_numbers<[1], [0], [0], [1], [0, 0, 1, 1], [], []>} : vector<20x32xf32>, vector<32x32xf32>, vector<20x32xf32> -> vector<20x32xf32>
    %c200 = arith.constant 200 : index
    %c0_25 = arith.constant 0 : index
    %180 = vector.load %arg2[%c200, %c0_25] : memref<1480x128xf32, #tpu.memory_space<vmem>>, vector<1x32xf32>
    %181 = vector.broadcast %180 : vector<1x32xf32> to vector<20x32xf32>
    %182 = arith.addf %179, %181 : vector<20x32xf32>
    %c208 = arith.constant 208 : index
    %c0_26 = arith.constant 0 : index
    %183 = vector.load %arg2[%c208, %c0_26] : memref<1480x128xf32, #tpu.memory_space<vmem>>, vector<32x32xf32>
    %cst_27 = arith.constant dense<0.000000e+00> : vector<20x32xf32>
    %184 = tpu.matmul %134, %183, %cst_27 {dimension_numbers = #tpu.dot_dimension_numbers<[1], [0], [0], [1], [0, 0, 1, 1], [], []>} : vector<20x32xf32>, vector<32x32xf32>, vector<20x32xf32> -> vector<20x32xf32>
    %c240 = arith.constant 240 : index
    %c0_28 = arith.constant 0 : index
    %185 = vector.load %arg2[%c240, %c0_28] : memref<1480x128xf32, #tpu.memory_space<vmem>>, vector<1x32xf32>
    %186 = vector.broadcast %185 : vector<1x32xf32> to vector<20x32xf32>
    %187 = arith.addf %184, %186 : vector<20x32xf32>
    %c248 = arith.constant 248 : index
    %c0_29 = arith.constant 0 : index
    %188 = vector.load %arg2[%c248, %c0_29] : memref<1480x128xf32, #tpu.memory_space<vmem>>, vector<32x32xf32>
    %cst_30 = arith.constant dense<0.000000e+00> : vector<20x32xf32>
    %189 = tpu.matmul %134, %188, %cst_30 {dimension_numbers = #tpu.dot_dimension_numbers<[1], [0], [0], [1], [0, 0, 1, 1], [], []>} : vector<20x32xf32>, vector<32x32xf32>, vector<20x32xf32> -> vector<20x32xf32>
    %c280 = arith.constant 280 : index
    %c0_31 = arith.constant 0 : index
    %190 = vector.load %arg2[%c280, %c0_31] : memref<1480x128xf32, #tpu.memory_space<vmem>>, vector<1x32xf32>
    %191 = vector.broadcast %190 : vector<1x32xf32> to vector<20x32xf32>
    %192 = arith.addf %189, %191 : vector<20x32xf32>
    %193 = tpu.transpose %187, [1, 0] : vector<20x32xf32> -> vector<32x20xf32>
    %cst_32 = arith.constant 0.000000e+00 : f32
    %194 = vector.broadcast %cst_32 : f32 to vector<20x32xf32>
    %195 = vector.broadcast %142 : vector<1x32xf32> to vector<20x32xf32>
    %196 = arith.mulf %182, %195 : vector<20x32xf32>
    %cst_33 = arith.constant dense<0.000000e+00> : vector<20x20xf32>
    %197 = tpu.matmul %196, %193, %cst_33 {dimension_numbers = #tpu.dot_dimension_numbers<[1], [0], [0], [1], [0, 0, 1, 1], [], []>} : vector<20x32xf32>, vector<32x20xf32>, vector<20x20xf32> -> vector<20x20xf32>
    %cst_34 = arith.constant 2.500000e-01 : f32
    %198 = vector.broadcast %cst_34 : f32 to vector<20x20xf32>
    %199 = arith.mulf %197, %198 : vector<20x20xf32>
    %200 = arith.addf %199, %177 : vector<20x20xf32>
    %cst_35 = arith.constant dense<0xFF800000> : vector<20xf32>
    %201 = vector.multi_reduction <maximumf>, %200, %cst_35 [1] : vector<20x20xf32> to vector<20xf32>
    %202 = vector.shape_cast %201 : vector<20xf32> to vector<20x1xf32>
    %203 = vector.broadcast %202 : vector<20x1xf32> to vector<20x20xf32>
    %204 = arith.subf %200, %203 : vector<20x20xf32>
    %205 = math.exp %204 : vector<20x20xf32>
    %cst_36 = arith.constant dense<0.000000e+00> : vector<20xf32>
    %206 = vector.multi_reduction <add>, %205, %cst_36 [1] : vector<20x20xf32> to vector<20xf32>
    %207 = vector.shape_cast %206 : vector<20xf32> to vector<20x1xf32>
    %208 = tpu.reciprocal %207 {approx = true} : vector<20x1xf32> -> vector<20x1xf32>
    %209 = vector.broadcast %208 : vector<20x1xf32> to vector<20x20xf32>
    %210 = arith.mulf %205, %209 : vector<20x20xf32>
    %211 = vector.broadcast %142 : vector<1x32xf32> to vector<20x32xf32>
    %212 = arith.mulf %192, %211 : vector<20x32xf32>
    %cst_37 = arith.constant dense<0.000000e+00> : vector<20x32xf32>
    %213 = tpu.matmul %210, %212, %cst_37 {dimension_numbers = #tpu.dot_dimension_numbers<[1], [0], [0], [1], [0, 0, 1, 1], [], []>} : vector<20x20xf32>, vector<20x32xf32>, vector<20x32xf32> -> vector<20x32xf32>
    %214 = arith.addf %194, %213 : vector<20x32xf32>
    %215 = vector.broadcast %149 : vector<1x32xf32> to vector<20x32xf32>
    %216 = arith.mulf %182, %215 : vector<20x32xf32>
    %cst_38 = arith.constant dense<0.000000e+00> : vector<20x20xf32>
    %217 = tpu.matmul %216, %193, %cst_38 {dimension_numbers = #tpu.dot_dimension_numbers<[1], [0], [0], [1], [0, 0, 1, 1], [], []>} : vector<20x32xf32>, vector<32x20xf32>, vector<20x20xf32> -> vector<20x20xf32>
    %cst_39 = arith.constant 2.500000e-01 : f32
    %218 = vector.broadcast %cst_39 : f32 to vector<20x20xf32>
    %219 = arith.mulf %217, %218 : vector<20x20xf32>
    %220 = arith.addf %219, %177 : vector<20x20xf32>
    %cst_40 = arith.constant dense<0xFF800000> : vector<20xf32>
    %221 = vector.multi_reduction <maximumf>, %220, %cst_40 [1] : vector<20x20xf32> to vector<20xf32>
    %222 = vector.shape_cast %221 : vector<20xf32> to vector<20x1xf32>
    %223 = vector.broadcast %222 : vector<20x1xf32> to vector<20x20xf32>
    %224 = arith.subf %220, %223 : vector<20x20xf32>
    %225 = math.exp %224 : vector<20x20xf32>
    %cst_41 = arith.constant dense<0.000000e+00> : vector<20xf32>
    %226 = vector.multi_reduction <add>, %225, %cst_41 [1] : vector<20x20xf32> to vector<20xf32>
    %227 = vector.shape_cast %226 : vector<20xf32> to vector<20x1xf32>
    %228 = tpu.reciprocal %227 {approx = true} : vector<20x1xf32> -> vector<20x1xf32>
    %229 = vector.broadcast %228 : vector<20x1xf32> to vector<20x20xf32>
    %230 = arith.mulf %225, %229 : vector<20x20xf32>
    %231 = vector.broadcast %149 : vector<1x32xf32> to vector<20x32xf32>
    %232 = arith.mulf %192, %231 : vector<20x32xf32>
    %cst_42 = arith.constant dense<0.000000e+00> : vector<20x32xf32>
    %233 = tpu.matmul %230, %232, %cst_42 {dimension_numbers = #tpu.dot_dimension_numbers<[1], [0], [0], [1], [0, 0, 1, 1], [], []>} : vector<20x20xf32>, vector<20x32xf32>, vector<20x32xf32> -> vector<20x32xf32>
    %234 = arith.addf %214, %233 : vector<20x32xf32>
    %c288 = arith.constant 288 : index
    %c0_43 = arith.constant 0 : index
    %235 = vector.load %arg2[%c288, %c0_43] : memref<1480x128xf32, #tpu.memory_space<vmem>>, vector<32x32xf32>
    %cst_44 = arith.constant dense<0.000000e+00> : vector<20x32xf32>
    %236 = tpu.matmul %234, %235, %cst_44 {dimension_numbers = #tpu.dot_dimension_numbers<[1], [0], [0], [1], [0, 0, 1, 1], [], []>} : vector<20x32xf32>, vector<32x32xf32>, vector<20x32xf32> -> vector<20x32xf32>
    %c320 = arith.constant 320 : index
    %c0_45 = arith.constant 0 : index
    %237 = vector.load %arg2[%c320, %c0_45] : memref<1480x128xf32, #tpu.memory_space<vmem>>, vector<1x32xf32>
    %238 = vector.broadcast %237 : vector<1x32xf32> to vector<20x32xf32>
    %239 = arith.addf %236, %238 : vector<20x32xf32>
    %240 = arith.addf %134, %239 : vector<20x32xf32>
    %c328 = arith.constant 328 : index
    %c0_46 = arith.constant 0 : index
    %241 = vector.load %arg2[%c328, %c0_46] : memref<1480x128xf32, #tpu.memory_space<vmem>>, vector<1x32xf32>
    %c336 = arith.constant 336 : index
    %c0_47 = arith.constant 0 : index
    %242 = vector.load %arg2[%c336, %c0_47] : memref<1480x128xf32, #tpu.memory_space<vmem>>, vector<1x32xf32>
    %cst_48 = arith.constant dense<0.000000e+00> : vector<20xf32>
    %243 = vector.multi_reduction <add>, %240, %cst_48 [1] : vector<20x32xf32> to vector<20xf32>
    %244 = vector.shape_cast %243 : vector<20xf32> to vector<20x1xf32>
    %cst_49 = arith.constant 3.200000e+01 : f32
    %245 = vector.broadcast %cst_49 : f32 to vector<20x1xf32>
    %246 = arith.divf %244, %245 : vector<20x1xf32>
    %247 = vector.broadcast %246 : vector<20x1xf32> to vector<20x32xf32>
    %248 = arith.subf %240, %247 : vector<20x32xf32>
    %249 = arith.mulf %248, %248 : vector<20x32xf32>
    %cst_50 = arith.constant dense<0.000000e+00> : vector<20xf32>
    %250 = vector.multi_reduction <add>, %249, %cst_50 [1] : vector<20x32xf32> to vector<20xf32>
    %251 = vector.shape_cast %250 : vector<20xf32> to vector<20x1xf32>
    %cst_51 = arith.constant 3.200000e+01 : f32
    %252 = vector.broadcast %cst_51 : f32 to vector<20x1xf32>
    %253 = arith.divf %251, %252 : vector<20x1xf32>
    %254 = vector.broadcast %246 : vector<20x1xf32> to vector<20x32xf32>
    %255 = arith.subf %240, %254 : vector<20x32xf32>
    %cst_52 = arith.constant 9.99999996E-13 : f32
    %256 = vector.broadcast %cst_52 : f32 to vector<20x1xf32>
    %257 = arith.addf %253, %256 : vector<20x1xf32>
    %258 = math.rsqrt %257 : vector<20x1xf32>
    %259 = vector.broadcast %258 : vector<20x1xf32> to vector<20x32xf32>
    %260 = arith.mulf %255, %259 : vector<20x32xf32>
    %261 = vector.broadcast %241 : vector<1x32xf32> to vector<20x32xf32>
    %262 = arith.mulf %260, %261 : vector<20x32xf32>
    %263 = vector.broadcast %242 : vector<1x32xf32> to vector<20x32xf32>
    %264 = arith.addf %262, %263 : vector<20x32xf32>
    %c344 = arith.constant 344 : index
    %c0_53 = arith.constant 0 : index
    %265 = vector.load %arg2[%c344, %c0_53] : memref<1480x128xf32, #tpu.memory_space<vmem>>, vector<32x128xf32>
    %cst_54 = arith.constant dense<0.000000e+00> : vector<20x128xf32>
    %266 = tpu.matmul %264, %265, %cst_54 {dimension_numbers = #tpu.dot_dimension_numbers<[1], [0], [0], [1], [0, 0, 1, 1], [], []>} : vector<20x32xf32>, vector<32x128xf32>, vector<20x128xf32> -> vector<20x128xf32>
    %c376 = arith.constant 376 : index
    %c0_55 = arith.constant 0 : index
    %267 = vector.load %arg2[%c376, %c0_55] : memref<1480x128xf32, #tpu.memory_space<vmem>>, vector<1x128xf32>
    %268 = vector.broadcast %267 : vector<1x128xf32> to vector<20x128xf32>
    %269 = arith.addf %266, %268 : vector<20x128xf32>
    %270 = arith.mulf %269, %269 : vector<20x128xf32>
    %271 = arith.mulf %269, %270 : vector<20x128xf32>
    %cst_56 = arith.constant 4.471500e-02 : f32
    %272 = vector.broadcast %cst_56 : f32 to vector<20x128xf32>
    %273 = arith.mulf %272, %271 : vector<20x128xf32>
    %274 = arith.addf %269, %273 : vector<20x128xf32>
    %cst_57 = arith.constant 0.797884583 : f32
    %275 = vector.broadcast %cst_57 : f32 to vector<20x128xf32>
    %276 = arith.mulf %275, %274 : vector<20x128xf32>
    %277 = math.tanh %276 : vector<20x128xf32>
    %cst_58 = arith.constant 1.000000e+00 : f32
    %278 = vector.broadcast %cst_58 : f32 to vector<20x128xf32>
    %279 = arith.addf %278, %277 : vector<20x128xf32>
    %cst_59 = arith.constant 5.000000e-01 : f32
    %280 = vector.broadcast %cst_59 : f32 to vector<20x128xf32>
    %281 = arith.mulf %280, %279 : vector<20x128xf32>
    %282 = arith.mulf %269, %281 : vector<20x128xf32>
    %c384 = arith.constant 384 : index
    %c0_60 = arith.constant 0 : index
    %283 = vector.load %arg2[%c384, %c0_60] : memref<1480x128xf32, #tpu.memory_space<vmem>>, vector<128x32xf32>
    %cst_61 = arith.constant dense<0.000000e+00> : vector<20x32xf32>
    %284 = tpu.matmul %282, %283, %cst_61 {dimension_numbers = #tpu.dot_dimension_numbers<[1], [0], [0], [1], [0, 0, 1, 1], [], []>} : vector<20x128xf32>, vector<128x32xf32>, vector<20x32xf32> -> vector<20x32xf32>
    %c512 = arith.constant 512 : index
    %c0_62 = arith.constant 0 : index
    %285 = vector.load %arg2[%c512, %c0_62] : memref<1480x128xf32, #tpu.memory_space<vmem>>, vector<1x32xf32>
    %286 = vector.broadcast %285 : vector<1x32xf32> to vector<20x32xf32>
    %287 = arith.addf %284, %286 : vector<20x32xf32>
    %288 = arith.addf %264, %287 : vector<20x32xf32>
    %c520 = arith.constant 520 : index
    %c0_63 = arith.constant 0 : index
    %289 = vector.load %arg2[%c520, %c0_63] : memref<1480x128xf32, #tpu.memory_space<vmem>>, vector<1x32xf32>
    %c528 = arith.constant 528 : index
    %c0_64 = arith.constant 0 : index
    %290 = vector.load %arg2[%c528, %c0_64] : memref<1480x128xf32, #tpu.memory_space<vmem>>, vector<1x32xf32>
    %cst_65 = arith.constant dense<0.000000e+00> : vector<20xf32>
    %291 = vector.multi_reduction <add>, %288, %cst_65 [1] : vector<20x32xf32> to vector<20xf32>
    %292 = vector.shape_cast %291 : vector<20xf32> to vector<20x1xf32>
    %cst_66 = arith.constant 3.200000e+01 : f32
    %293 = vector.broadcast %cst_66 : f32 to vector<20x1xf32>
    %294 = arith.divf %292, %293 : vector<20x1xf32>
    %295 = vector.broadcast %294 : vector<20x1xf32> to vector<20x32xf32>
    %296 = arith.subf %288, %295 : vector<20x32xf32>
    %297 = arith.mulf %296, %296 : vector<20x32xf32>
    %cst_67 = arith.constant dense<0.000000e+00> : vector<20xf32>
    %298 = vector.multi_reduction <add>, %297, %cst_67 [1] : vector<20x32xf32> to vector<20xf32>
    %299 = vector.shape_cast %298 : vector<20xf32> to vector<20x1xf32>
    %cst_68 = arith.constant 3.200000e+01 : f32
    %300 = vector.broadcast %cst_68 : f32 to vector<20x1xf32>
    %301 = arith.divf %299, %300 : vector<20x1xf32>
    %302 = vector.broadcast %294 : vector<20x1xf32> to vector<20x32xf32>
    %303 = arith.subf %288, %302 : vector<20x32xf32>
    %cst_69 = arith.constant 9.99999996E-13 : f32
    %304 = vector.broadcast %cst_69 : f32 to vector<20x1xf32>
    %305 = arith.addf %301, %304 : vector<20x1xf32>
    %306 = math.rsqrt %305 : vector<20x1xf32>
    %307 = vector.broadcast %306 : vector<20x1xf32> to vector<20x32xf32>
    %308 = arith.mulf %303, %307 : vector<20x32xf32>
    %309 = vector.broadcast %289 : vector<1x32xf32> to vector<20x32xf32>
    %310 = arith.mulf %308, %309 : vector<20x32xf32>
    %311 = vector.broadcast %290 : vector<1x32xf32> to vector<20x32xf32>
    %312 = arith.addf %310, %311 : vector<20x32xf32>
    %c536 = arith.constant 536 : index
    %c0_70 = arith.constant 0 : index
    %313 = vector.load %arg2[%c536, %c0_70] : memref<1480x128xf32, #tpu.memory_space<vmem>>, vector<32x32xf32>
    %cst_71 = arith.constant dense<0.000000e+00> : vector<20x32xf32>
    %314 = tpu.matmul %312, %313, %cst_71 {dimension_numbers = #tpu.dot_dimension_numbers<[1], [0], [0], [1], [0, 0, 1, 1], [], []>} : vector<20x32xf32>, vector<32x32xf32>, vector<20x32xf32> -> vector<20x32xf32>
    %c568 = arith.constant 568 : index
    %c0_72 = arith.constant 0 : index
    %315 = vector.load %arg2[%c568, %c0_72] : memref<1480x128xf32, #tpu.memory_space<vmem>>, vector<1x32xf32>
    %316 = vector.broadcast %315 : vector<1x32xf32> to vector<20x32xf32>
    %317 = arith.addf %314, %316 : vector<20x32xf32>
    %c576 = arith.constant 576 : index
    %c0_73 = arith.constant 0 : index
    %318 = vector.load %arg2[%c576, %c0_73] : memref<1480x128xf32, #tpu.memory_space<vmem>>, vector<32x32xf32>
    %cst_74 = arith.constant dense<0.000000e+00> : vector<20x32xf32>
    %319 = tpu.matmul %312, %318, %cst_74 {dimension_numbers = #tpu.dot_dimension_numbers<[1], [0], [0], [1], [0, 0, 1, 1], [], []>} : vector<20x32xf32>, vector<32x32xf32>, vector<20x32xf32> -> vector<20x32xf32>
    %c608 = arith.constant 608 : index
    %c0_75 = arith.constant 0 : index
    %320 = vector.load %arg2[%c608, %c0_75] : memref<1480x128xf32, #tpu.memory_space<vmem>>, vector<1x32xf32>
    %321 = vector.broadcast %320 : vector<1x32xf32> to vector<20x32xf32>
    %322 = arith.addf %319, %321 : vector<20x32xf32>
    %c616 = arith.constant 616 : index
    %c0_76 = arith.constant 0 : index
    %323 = vector.load %arg2[%c616, %c0_76] : memref<1480x128xf32, #tpu.memory_space<vmem>>, vector<32x32xf32>
    %cst_77 = arith.constant dense<0.000000e+00> : vector<20x32xf32>
    %324 = tpu.matmul %312, %323, %cst_77 {dimension_numbers = #tpu.dot_dimension_numbers<[1], [0], [0], [1], [0, 0, 1, 1], [], []>} : vector<20x32xf32>, vector<32x32xf32>, vector<20x32xf32> -> vector<20x32xf32>
    %c648 = arith.constant 648 : index
    %c0_78 = arith.constant 0 : index
    %325 = vector.load %arg2[%c648, %c0_78] : memref<1480x128xf32, #tpu.memory_space<vmem>>, vector<1x32xf32>
    %326 = vector.broadcast %325 : vector<1x32xf32> to vector<20x32xf32>
    %327 = arith.addf %324, %326 : vector<20x32xf32>
    %328 = tpu.transpose %322, [1, 0] : vector<20x32xf32> -> vector<32x20xf32>
    %cst_79 = arith.constant 0.000000e+00 : f32
    %329 = vector.broadcast %cst_79 : f32 to vector<20x32xf32>
    %330 = vector.broadcast %142 : vector<1x32xf32> to vector<20x32xf32>
    %331 = arith.mulf %317, %330 : vector<20x32xf32>
    %cst_80 = arith.constant dense<0.000000e+00> : vector<20x20xf32>
    %332 = tpu.matmul %331, %328, %cst_80 {dimension_numbers = #tpu.dot_dimension_numbers<[1], [0], [0], [1], [0, 0, 1, 1], [], []>} : vector<20x32xf32>, vector<32x20xf32>, vector<20x20xf32> -> vector<20x20xf32>
    %cst_81 = arith.constant 2.500000e-01 : f32
    %333 = vector.broadcast %cst_81 : f32 to vector<20x20xf32>
    %334 = arith.mulf %332, %333 : vector<20x20xf32>
    %335 = arith.addf %334, %177 : vector<20x20xf32>
    %cst_82 = arith.constant dense<0xFF800000> : vector<20xf32>
    %336 = vector.multi_reduction <maximumf>, %335, %cst_82 [1] : vector<20x20xf32> to vector<20xf32>
    %337 = vector.shape_cast %336 : vector<20xf32> to vector<20x1xf32>
    %338 = vector.broadcast %337 : vector<20x1xf32> to vector<20x20xf32>
    %339 = arith.subf %335, %338 : vector<20x20xf32>
    %340 = math.exp %339 : vector<20x20xf32>
    %cst_83 = arith.constant dense<0.000000e+00> : vector<20xf32>
    %341 = vector.multi_reduction <add>, %340, %cst_83 [1] : vector<20x20xf32> to vector<20xf32>
    %342 = vector.shape_cast %341 : vector<20xf32> to vector<20x1xf32>
    %343 = tpu.reciprocal %342 {approx = true} : vector<20x1xf32> -> vector<20x1xf32>
    %344 = vector.broadcast %343 : vector<20x1xf32> to vector<20x20xf32>
    %345 = arith.mulf %340, %344 : vector<20x20xf32>
    %346 = vector.broadcast %142 : vector<1x32xf32> to vector<20x32xf32>
    %347 = arith.mulf %327, %346 : vector<20x32xf32>
    %cst_84 = arith.constant dense<0.000000e+00> : vector<20x32xf32>
    %348 = tpu.matmul %345, %347, %cst_84 {dimension_numbers = #tpu.dot_dimension_numbers<[1], [0], [0], [1], [0, 0, 1, 1], [], []>} : vector<20x20xf32>, vector<20x32xf32>, vector<20x32xf32> -> vector<20x32xf32>
    %349 = arith.addf %329, %348 : vector<20x32xf32>
    %350 = vector.broadcast %149 : vector<1x32xf32> to vector<20x32xf32>
    %351 = arith.mulf %317, %350 : vector<20x32xf32>
    %cst_85 = arith.constant dense<0.000000e+00> : vector<20x20xf32>
    %352 = tpu.matmul %351, %328, %cst_85 {dimension_numbers = #tpu.dot_dimension_numbers<[1], [0], [0], [1], [0, 0, 1, 1], [], []>} : vector<20x32xf32>, vector<32x20xf32>, vector<20x20xf32> -> vector<20x20xf32>
    %cst_86 = arith.constant 2.500000e-01 : f32
    %353 = vector.broadcast %cst_86 : f32 to vector<20x20xf32>
    %354 = arith.mulf %352, %353 : vector<20x20xf32>
    %355 = arith.addf %354, %177 : vector<20x20xf32>
    %cst_87 = arith.constant dense<0xFF800000> : vector<20xf32>
    %356 = vector.multi_reduction <maximumf>, %355, %cst_87 [1] : vector<20x20xf32> to vector<20xf32>
    %357 = vector.shape_cast %356 : vector<20xf32> to vector<20x1xf32>
    %358 = vector.broadcast %357 : vector<20x1xf32> to vector<20x20xf32>
    %359 = arith.subf %355, %358 : vector<20x20xf32>
    %360 = math.exp %359 : vector<20x20xf32>
    %cst_88 = arith.constant dense<0.000000e+00> : vector<20xf32>
    %361 = vector.multi_reduction <add>, %360, %cst_88 [1] : vector<20x20xf32> to vector<20xf32>
    %362 = vector.shape_cast %361 : vector<20xf32> to vector<20x1xf32>
    %363 = tpu.reciprocal %362 {approx = true} : vector<20x1xf32> -> vector<20x1xf32>
    %364 = vector.broadcast %363 : vector<20x1xf32> to vector<20x20xf32>
    %365 = arith.mulf %360, %364 : vector<20x20xf32>
    %366 = vector.broadcast %149 : vector<1x32xf32> to vector<20x32xf32>
    %367 = arith.mulf %327, %366 : vector<20x32xf32>
    %cst_89 = arith.constant dense<0.000000e+00> : vector<20x32xf32>
    %368 = tpu.matmul %365, %367, %cst_89 {dimension_numbers = #tpu.dot_dimension_numbers<[1], [0], [0], [1], [0, 0, 1, 1], [], []>} : vector<20x20xf32>, vector<20x32xf32>, vector<20x32xf32> -> vector<20x32xf32>
    %369 = arith.addf %349, %368 : vector<20x32xf32>
    %c656 = arith.constant 656 : index
    %c0_90 = arith.constant 0 : index
    %370 = vector.load %arg2[%c656, %c0_90] : memref<1480x128xf32, #tpu.memory_space<vmem>>, vector<32x32xf32>
    %cst_91 = arith.constant dense<0.000000e+00> : vector<20x32xf32>
    %371 = tpu.matmul %369, %370, %cst_91 {dimension_numbers = #tpu.dot_dimension_numbers<[1], [0], [0], [1], [0, 0, 1, 1], [], []>} : vector<20x32xf32>, vector<32x32xf32>, vector<20x32xf32> -> vector<20x32xf32>
    %c688 = arith.constant 688 : index
    %c0_92 = arith.constant 0 : index
    %372 = vector.load %arg2[%c688, %c0_92] : memref<1480x128xf32, #tpu.memory_space<vmem>>, vector<1x32xf32>
    %373 = vector.broadcast %372 : vector<1x32xf32> to vector<20x32xf32>
    %374 = arith.addf %371, %373 : vector<20x32xf32>
    %375 = arith.addf %312, %374 : vector<20x32xf32>
    %c696 = arith.constant 696 : index
    %c0_93 = arith.constant 0 : index
    %376 = vector.load %arg2[%c696, %c0_93] : memref<1480x128xf32, #tpu.memory_space<vmem>>, vector<1x32xf32>
    %c704 = arith.constant 704 : index
    %c0_94 = arith.constant 0 : index
    %377 = vector.load %arg2[%c704, %c0_94] : memref<1480x128xf32, #tpu.memory_space<vmem>>, vector<1x32xf32>
    %cst_95 = arith.constant dense<0.000000e+00> : vector<20xf32>
    %378 = vector.multi_reduction <add>, %375, %cst_95 [1] : vector<20x32xf32> to vector<20xf32>
    %379 = vector.shape_cast %378 : vector<20xf32> to vector<20x1xf32>
    %cst_96 = arith.constant 3.200000e+01 : f32
    %380 = vector.broadcast %cst_96 : f32 to vector<20x1xf32>
    %381 = arith.divf %379, %380 : vector<20x1xf32>
    %382 = vector.broadcast %381 : vector<20x1xf32> to vector<20x32xf32>
    %383 = arith.subf %375, %382 : vector<20x32xf32>
    %384 = arith.mulf %383, %383 : vector<20x32xf32>
    %cst_97 = arith.constant dense<0.000000e+00> : vector<20xf32>
    %385 = vector.multi_reduction <add>, %384, %cst_97 [1] : vector<20x32xf32> to vector<20xf32>
    %386 = vector.shape_cast %385 : vector<20xf32> to vector<20x1xf32>
    %cst_98 = arith.constant 3.200000e+01 : f32
    %387 = vector.broadcast %cst_98 : f32 to vector<20x1xf32>
    %388 = arith.divf %386, %387 : vector<20x1xf32>
    %389 = vector.broadcast %381 : vector<20x1xf32> to vector<20x32xf32>
    %390 = arith.subf %375, %389 : vector<20x32xf32>
    %cst_99 = arith.constant 9.99999996E-13 : f32
    %391 = vector.broadcast %cst_99 : f32 to vector<20x1xf32>
    %392 = arith.addf %388, %391 : vector<20x1xf32>
    %393 = math.rsqrt %392 : vector<20x1xf32>
    %394 = vector.broadcast %393 : vector<20x1xf32> to vector<20x32xf32>
    %395 = arith.mulf %390, %394 : vector<20x32xf32>
    %396 = vector.broadcast %376 : vector<1x32xf32> to vector<20x32xf32>
    %397 = arith.mulf %395, %396 : vector<20x32xf32>
    %398 = vector.broadcast %377 : vector<1x32xf32> to vector<20x32xf32>
    %399 = arith.addf %397, %398 : vector<20x32xf32>
    %c712 = arith.constant 712 : index
    %c0_100 = arith.constant 0 : index
    %400 = vector.load %arg2[%c712, %c0_100] : memref<1480x128xf32, #tpu.memory_space<vmem>>, vector<32x128xf32>
    %cst_101 = arith.constant dense<0.000000e+00> : vector<20x128xf32>
    %401 = tpu.matmul %399, %400, %cst_101 {dimension_numbers = #tpu.dot_dimension_numbers<[1], [0], [0], [1], [0, 0, 1, 1], [], []>} : vector<20x32xf32>, vector<32x128xf32>, vector<20x128xf32> -> vector<20x128xf32>
    %c744 = arith.constant 744 : index
    %c0_102 = arith.constant 0 : index
    %402 = vector.load %arg2[%c744, %c0_102] : memref<1480x128xf32, #tpu.memory_space<vmem>>, vector<1x128xf32>
    %403 = vector.broadcast %402 : vector<1x128xf32> to vector<20x128xf32>
    %404 = arith.addf %401, %403 : vector<20x128xf32>
    %405 = arith.mulf %404, %404 : vector<20x128xf32>
    %406 = arith.mulf %404, %405 : vector<20x128xf32>
    %cst_103 = arith.constant 4.471500e-02 : f32
    %407 = vector.broadcast %cst_103 : f32 to vector<20x128xf32>
    %408 = arith.mulf %407, %406 : vector<20x128xf32>
    %409 = arith.addf %404, %408 : vector<20x128xf32>
    %cst_104 = arith.constant 0.797884583 : f32
    %410 = vector.broadcast %cst_104 : f32 to vector<20x128xf32>
    %411 = arith.mulf %410, %409 : vector<20x128xf32>
    %412 = math.tanh %411 : vector<20x128xf32>
    %cst_105 = arith.constant 1.000000e+00 : f32
    %413 = vector.broadcast %cst_105 : f32 to vector<20x128xf32>
    %414 = arith.addf %413, %412 : vector<20x128xf32>
    %cst_106 = arith.constant 5.000000e-01 : f32
    %415 = vector.broadcast %cst_106 : f32 to vector<20x128xf32>
    %416 = arith.mulf %415, %414 : vector<20x128xf32>
    %417 = arith.mulf %404, %416 : vector<20x128xf32>
    %c752 = arith.constant 752 : index
    %c0_107 = arith.constant 0 : index
    %418 = vector.load %arg2[%c752, %c0_107] : memref<1480x128xf32, #tpu.memory_space<vmem>>, vector<128x32xf32>
    %cst_108 = arith.constant dense<0.000000e+00> : vector<20x32xf32>
    %419 = tpu.matmul %417, %418, %cst_108 {dimension_numbers = #tpu.dot_dimension_numbers<[1], [0], [0], [1], [0, 0, 1, 1], [], []>} : vector<20x128xf32>, vector<128x32xf32>, vector<20x32xf32> -> vector<20x32xf32>
    %c880 = arith.constant 880 : index
    %c0_109 = arith.constant 0 : index
    %420 = vector.load %arg2[%c880, %c0_109] : memref<1480x128xf32, #tpu.memory_space<vmem>>, vector<1x32xf32>
    %421 = vector.broadcast %420 : vector<1x32xf32> to vector<20x32xf32>
    %422 = arith.addf %419, %421 : vector<20x32xf32>
    %423 = arith.addf %399, %422 : vector<20x32xf32>
    %c888 = arith.constant 888 : index
    %c0_110 = arith.constant 0 : index
    %424 = vector.load %arg2[%c888, %c0_110] : memref<1480x128xf32, #tpu.memory_space<vmem>>, vector<1x32xf32>
    %c896 = arith.constant 896 : index
    %c0_111 = arith.constant 0 : index
    %425 = vector.load %arg2[%c896, %c0_111] : memref<1480x128xf32, #tpu.memory_space<vmem>>, vector<1x32xf32>
    %cst_112 = arith.constant dense<0.000000e+00> : vector<20xf32>
    %426 = vector.multi_reduction <add>, %423, %cst_112 [1] : vector<20x32xf32> to vector<20xf32>
    %427 = vector.shape_cast %426 : vector<20xf32> to vector<20x1xf32>
    %cst_113 = arith.constant 3.200000e+01 : f32
    %428 = vector.broadcast %cst_113 : f32 to vector<20x1xf32>
    %429 = arith.divf %427, %428 : vector<20x1xf32>
    %430 = vector.broadcast %429 : vector<20x1xf32> to vector<20x32xf32>
    %431 = arith.subf %423, %430 : vector<20x32xf32>
    %432 = arith.mulf %431, %431 : vector<20x32xf32>
    %cst_114 = arith.constant dense<0.000000e+00> : vector<20xf32>
    %433 = vector.multi_reduction <add>, %432, %cst_114 [1] : vector<20x32xf32> to vector<20xf32>
    %434 = vector.shape_cast %433 : vector<20xf32> to vector<20x1xf32>
    %cst_115 = arith.constant 3.200000e+01 : f32
    %435 = vector.broadcast %cst_115 : f32 to vector<20x1xf32>
    %436 = arith.divf %434, %435 : vector<20x1xf32>
    %437 = vector.broadcast %429 : vector<20x1xf32> to vector<20x32xf32>
    %438 = arith.subf %423, %437 : vector<20x32xf32>
    %cst_116 = arith.constant 9.99999996E-13 : f32
    %439 = vector.broadcast %cst_116 : f32 to vector<20x1xf32>
    %440 = arith.addf %436, %439 : vector<20x1xf32>
    %441 = math.rsqrt %440 : vector<20x1xf32>
    %442 = vector.broadcast %441 : vector<20x1xf32> to vector<20x32xf32>
    %443 = arith.mulf %438, %442 : vector<20x32xf32>
    %444 = vector.broadcast %424 : vector<1x32xf32> to vector<20x32xf32>
    %445 = arith.mulf %443, %444 : vector<20x32xf32>
    %446 = vector.broadcast %425 : vector<1x32xf32> to vector<20x32xf32>
    %447 = arith.addf %445, %446 : vector<20x32xf32>
    %c904 = arith.constant 904 : index
    %c0_117 = arith.constant 0 : index
    %448 = vector.load %arg2[%c904, %c0_117] : memref<1480x128xf32, #tpu.memory_space<vmem>>, vector<32x32xf32>
    %cst_118 = arith.constant dense<0.000000e+00> : vector<20x32xf32>
    %449 = tpu.matmul %447, %448, %cst_118 {dimension_numbers = #tpu.dot_dimension_numbers<[1], [0], [0], [1], [0, 0, 1, 1], [], []>} : vector<20x32xf32>, vector<32x32xf32>, vector<20x32xf32> -> vector<20x32xf32>
    %c936 = arith.constant 936 : index
    %c0_119 = arith.constant 0 : index
    %450 = vector.load %arg2[%c936, %c0_119] : memref<1480x128xf32, #tpu.memory_space<vmem>>, vector<1x32xf32>
    %451 = vector.broadcast %450 : vector<1x32xf32> to vector<20x32xf32>
    %452 = arith.addf %449, %451 : vector<20x32xf32>
    %cst_120 = arith.constant 0.000000e+00 : f32
    %453 = vector.broadcast %cst_120 : f32 to vector<20x32xf32>
    %454 = arith.maximumf %452, %453 : vector<20x32xf32>
    %cst_121 = arith.constant 0.000000e+00 : f32
    %455 = vector.broadcast %cst_121 : f32 to vector<20x128xf32>
    %c944 = arith.constant 944 : index
    %c0_122 = arith.constant 0 : index
    %456 = vector.load %arg2[%c944, %c0_122] : memref<1480x128xf32, #tpu.memory_space<vmem>>, vector<32x128xf32>
    %cst_123 = arith.constant dense<0.000000e+00> : vector<20x128xf32>
    %457 = tpu.matmul %454, %456, %cst_123 {dimension_numbers = #tpu.dot_dimension_numbers<[1], [0], [0], [1], [0, 0, 1, 1], [], []>} : vector<20x32xf32>, vector<32x128xf32>, vector<20x128xf32> -> vector<20x128xf32>
    %c0_i32_124 = arith.constant 0 : i32
    %458 = vector.broadcast %c0_i32_124 : i32 to vector<20x1xi32>
    %459 = arith.cmpi eq, %0, %458 : vector<20x1xi32>
    %c10_i32_125 = arith.constant 10 : i32
    %460 = vector.broadcast %c10_i32_125 : i32 to vector<20x1xi32>
    %461 = arith.cmpi eq, %0, %460 : vector<20x1xi32>
    %462 = arith.ori %459, %461 : vector<20x1xi1>
    %cst_126 = arith.constant 0.000000e+00 : f32
    %463 = vector.shape_cast %462 : vector<20x1xi1> to vector<20x1xi1>
    %464 = vector.broadcast %463 : vector<20x1xi1> to vector<20x128xi1>
    %465 = vector.broadcast %cst_126 : f32 to vector<20x128xf32>
    %466 = arith.select %464, %457, %465 : vector<20x128xi1>, vector<20x128xf32>
    %467 = arith.addf %455, %466 : vector<20x128xf32>
    %c976 = arith.constant 976 : index
    %c0_127 = arith.constant 0 : index
    %468 = vector.load %arg2[%c976, %c0_127] : memref<1480x128xf32, #tpu.memory_space<vmem>>, vector<32x128xf32>
    %cst_128 = arith.constant dense<0.000000e+00> : vector<20x128xf32>
    %469 = tpu.matmul %454, %468, %cst_128 {dimension_numbers = #tpu.dot_dimension_numbers<[1], [0], [0], [1], [0, 0, 1, 1], [], []>} : vector<20x32xf32>, vector<32x128xf32>, vector<20x128xf32> -> vector<20x128xf32>
    %c1_i32_129 = arith.constant 1 : i32
    %470 = vector.broadcast %c1_i32_129 : i32 to vector<20x1xi32>
    %471 = arith.cmpi eq, %0, %470 : vector<20x1xi32>
    %c11_i32_130 = arith.constant 11 : i32
    %472 = vector.broadcast %c11_i32_130 : i32 to vector<20x1xi32>
    %473 = arith.cmpi eq, %0, %472 : vector<20x1xi32>
    %474 = arith.ori %471, %473 : vector<20x1xi1>
    %cst_131 = arith.constant 0.000000e+00 : f32
    %475 = vector.shape_cast %474 : vector<20x1xi1> to vector<20x1xi1>
    %476 = vector.broadcast %475 : vector<20x1xi1> to vector<20x128xi1>
    %477 = vector.broadcast %cst_131 : f32 to vector<20x128xf32>
    %478 = arith.select %476, %469, %477 : vector<20x128xi1>, vector<20x128xf32>
    %479 = arith.addf %467, %478 : vector<20x128xf32>
    %c1008 = arith.constant 1008 : index
    %c0_132 = arith.constant 0 : index
    %480 = vector.load %arg2[%c1008, %c0_132] : memref<1480x128xf32, #tpu.memory_space<vmem>>, vector<32x128xf32>
    %cst_133 = arith.constant dense<0.000000e+00> : vector<20x128xf32>
    %481 = tpu.matmul %454, %480, %cst_133 {dimension_numbers = #tpu.dot_dimension_numbers<[1], [0], [0], [1], [0, 0, 1, 1], [], []>} : vector<20x32xf32>, vector<32x128xf32>, vector<20x128xf32> -> vector<20x128xf32>
    %c2_i32_134 = arith.constant 2 : i32
    %482 = vector.broadcast %c2_i32_134 : i32 to vector<20x1xi32>
    %483 = arith.cmpi eq, %0, %482 : vector<20x1xi32>
    %c12_i32_135 = arith.constant 12 : i32
    %484 = vector.broadcast %c12_i32_135 : i32 to vector<20x1xi32>
    %485 = arith.cmpi eq, %0, %484 : vector<20x1xi32>
    %486 = arith.ori %483, %485 : vector<20x1xi1>
    %cst_136 = arith.constant 0.000000e+00 : f32
    %487 = vector.shape_cast %486 : vector<20x1xi1> to vector<20x1xi1>
    %488 = vector.broadcast %487 : vector<20x1xi1> to vector<20x128xi1>
    %489 = vector.broadcast %cst_136 : f32 to vector<20x128xf32>
    %490 = arith.select %488, %481, %489 : vector<20x128xi1>, vector<20x128xf32>
    %491 = arith.addf %479, %490 : vector<20x128xf32>
    %c1040 = arith.constant 1040 : index
    %c0_137 = arith.constant 0 : index
    %492 = vector.load %arg2[%c1040, %c0_137] : memref<1480x128xf32, #tpu.memory_space<vmem>>, vector<32x128xf32>
    %cst_138 = arith.constant dense<0.000000e+00> : vector<20x128xf32>
    %493 = tpu.matmul %454, %492, %cst_138 {dimension_numbers = #tpu.dot_dimension_numbers<[1], [0], [0], [1], [0, 0, 1, 1], [], []>} : vector<20x32xf32>, vector<32x128xf32>, vector<20x128xf32> -> vector<20x128xf32>
    %c3_i32_139 = arith.constant 3 : i32
    %494 = vector.broadcast %c3_i32_139 : i32 to vector<20x1xi32>
    %495 = arith.cmpi eq, %0, %494 : vector<20x1xi32>
    %c13_i32_140 = arith.constant 13 : i32
    %496 = vector.broadcast %c13_i32_140 : i32 to vector<20x1xi32>
    %497 = arith.cmpi eq, %0, %496 : vector<20x1xi32>
    %498 = arith.ori %495, %497 : vector<20x1xi1>
    %cst_141 = arith.constant 0.000000e+00 : f32
    %499 = vector.shape_cast %498 : vector<20x1xi1> to vector<20x1xi1>
    %500 = vector.broadcast %499 : vector<20x1xi1> to vector<20x128xi1>
    %501 = vector.broadcast %cst_141 : f32 to vector<20x128xf32>
    %502 = arith.select %500, %493, %501 : vector<20x128xi1>, vector<20x128xf32>
    %503 = arith.addf %491, %502 : vector<20x128xf32>
    %c1072 = arith.constant 1072 : index
    %c0_142 = arith.constant 0 : index
    %504 = vector.load %arg2[%c1072, %c0_142] : memref<1480x128xf32, #tpu.memory_space<vmem>>, vector<32x128xf32>
    %cst_143 = arith.constant dense<0.000000e+00> : vector<20x128xf32>
    %505 = tpu.matmul %454, %504, %cst_143 {dimension_numbers = #tpu.dot_dimension_numbers<[1], [0], [0], [1], [0, 0, 1, 1], [], []>} : vector<20x32xf32>, vector<32x128xf32>, vector<20x128xf32> -> vector<20x128xf32>
    %c4_i32_144 = arith.constant 4 : i32
    %506 = vector.broadcast %c4_i32_144 : i32 to vector<20x1xi32>
    %507 = arith.cmpi eq, %0, %506 : vector<20x1xi32>
    %c14_i32_145 = arith.constant 14 : i32
    %508 = vector.broadcast %c14_i32_145 : i32 to vector<20x1xi32>
    %509 = arith.cmpi eq, %0, %508 : vector<20x1xi32>
    %510 = arith.ori %507, %509 : vector<20x1xi1>
    %cst_146 = arith.constant 0.000000e+00 : f32
    %511 = vector.shape_cast %510 : vector<20x1xi1> to vector<20x1xi1>
    %512 = vector.broadcast %511 : vector<20x1xi1> to vector<20x128xi1>
    %513 = vector.broadcast %cst_146 : f32 to vector<20x128xf32>
    %514 = arith.select %512, %505, %513 : vector<20x128xi1>, vector<20x128xf32>
    %515 = arith.addf %503, %514 : vector<20x128xf32>
    %c1104 = arith.constant 1104 : index
    %c0_147 = arith.constant 0 : index
    %516 = vector.load %arg2[%c1104, %c0_147] : memref<1480x128xf32, #tpu.memory_space<vmem>>, vector<32x128xf32>
    %cst_148 = arith.constant dense<0.000000e+00> : vector<20x128xf32>
    %517 = tpu.matmul %454, %516, %cst_148 {dimension_numbers = #tpu.dot_dimension_numbers<[1], [0], [0], [1], [0, 0, 1, 1], [], []>} : vector<20x32xf32>, vector<32x128xf32>, vector<20x128xf32> -> vector<20x128xf32>
    %c5_i32_149 = arith.constant 5 : i32
    %518 = vector.broadcast %c5_i32_149 : i32 to vector<20x1xi32>
    %519 = arith.cmpi eq, %0, %518 : vector<20x1xi32>
    %c15_i32_150 = arith.constant 15 : i32
    %520 = vector.broadcast %c15_i32_150 : i32 to vector<20x1xi32>
    %521 = arith.cmpi eq, %0, %520 : vector<20x1xi32>
    %522 = arith.ori %519, %521 : vector<20x1xi1>
    %cst_151 = arith.constant 0.000000e+00 : f32
    %523 = vector.shape_cast %522 : vector<20x1xi1> to vector<20x1xi1>
    %524 = vector.broadcast %523 : vector<20x1xi1> to vector<20x128xi1>
    %525 = vector.broadcast %cst_151 : f32 to vector<20x128xf32>
    %526 = arith.select %524, %517, %525 : vector<20x128xi1>, vector<20x128xf32>
    %527 = arith.addf %515, %526 : vector<20x128xf32>
    %c1136 = arith.constant 1136 : index
    %c0_152 = arith.constant 0 : index
    %528 = vector.load %arg2[%c1136, %c0_152] : memref<1480x128xf32, #tpu.memory_space<vmem>>, vector<32x128xf32>
    %cst_153 = arith.constant dense<0.000000e+00> : vector<20x128xf32>
    %529 = tpu.matmul %454, %528, %cst_153 {dimension_numbers = #tpu.dot_dimension_numbers<[1], [0], [0], [1], [0, 0, 1, 1], [], []>} : vector<20x32xf32>, vector<32x128xf32>, vector<20x128xf32> -> vector<20x128xf32>
    %c6_i32_154 = arith.constant 6 : i32
    %530 = vector.broadcast %c6_i32_154 : i32 to vector<20x1xi32>
    %531 = arith.cmpi eq, %0, %530 : vector<20x1xi32>
    %c16_i32_155 = arith.constant 16 : i32
    %532 = vector.broadcast %c16_i32_155 : i32 to vector<20x1xi32>
    %533 = arith.cmpi eq, %0, %532 : vector<20x1xi32>
    %534 = arith.ori %531, %533 : vector<20x1xi1>
    %cst_156 = arith.constant 0.000000e+00 : f32
    %535 = vector.shape_cast %534 : vector<20x1xi1> to vector<20x1xi1>
    %536 = vector.broadcast %535 : vector<20x1xi1> to vector<20x128xi1>
    %537 = vector.broadcast %cst_156 : f32 to vector<20x128xf32>
    %538 = arith.select %536, %529, %537 : vector<20x128xi1>, vector<20x128xf32>
    %539 = arith.addf %527, %538 : vector<20x128xf32>
    %c1168 = arith.constant 1168 : index
    %c0_157 = arith.constant 0 : index
    %540 = vector.load %arg2[%c1168, %c0_157] : memref<1480x128xf32, #tpu.memory_space<vmem>>, vector<32x128xf32>
    %cst_158 = arith.constant dense<0.000000e+00> : vector<20x128xf32>
    %541 = tpu.matmul %454, %540, %cst_158 {dimension_numbers = #tpu.dot_dimension_numbers<[1], [0], [0], [1], [0, 0, 1, 1], [], []>} : vector<20x32xf32>, vector<32x128xf32>, vector<20x128xf32> -> vector<20x128xf32>
    %c7_i32_159 = arith.constant 7 : i32
    %542 = vector.broadcast %c7_i32_159 : i32 to vector<20x1xi32>
    %543 = arith.cmpi eq, %0, %542 : vector<20x1xi32>
    %c17_i32_160 = arith.constant 17 : i32
    %544 = vector.broadcast %c17_i32_160 : i32 to vector<20x1xi32>
    %545 = arith.cmpi eq, %0, %544 : vector<20x1xi32>
    %546 = arith.ori %543, %545 : vector<20x1xi1>
    %cst_161 = arith.constant 0.000000e+00 : f32
    %547 = vector.shape_cast %546 : vector<20x1xi1> to vector<20x1xi1>
    %548 = vector.broadcast %547 : vector<20x1xi1> to vector<20x128xi1>
    %549 = vector.broadcast %cst_161 : f32 to vector<20x128xf32>
    %550 = arith.select %548, %541, %549 : vector<20x128xi1>, vector<20x128xf32>
    %551 = arith.addf %539, %550 : vector<20x128xf32>
    %c1200 = arith.constant 1200 : index
    %c0_162 = arith.constant 0 : index
    %552 = vector.load %arg2[%c1200, %c0_162] : memref<1480x128xf32, #tpu.memory_space<vmem>>, vector<32x128xf32>
    %cst_163 = arith.constant dense<0.000000e+00> : vector<20x128xf32>
    %553 = tpu.matmul %454, %552, %cst_163 {dimension_numbers = #tpu.dot_dimension_numbers<[1], [0], [0], [1], [0, 0, 1, 1], [], []>} : vector<20x32xf32>, vector<32x128xf32>, vector<20x128xf32> -> vector<20x128xf32>
    %c8_i32_164 = arith.constant 8 : i32
    %554 = vector.broadcast %c8_i32_164 : i32 to vector<20x1xi32>
    %555 = arith.cmpi eq, %0, %554 : vector<20x1xi32>
    %c18_i32_165 = arith.constant 18 : i32
    %556 = vector.broadcast %c18_i32_165 : i32 to vector<20x1xi32>
    %557 = arith.cmpi eq, %0, %556 : vector<20x1xi32>
    %558 = arith.ori %555, %557 : vector<20x1xi1>
    %cst_166 = arith.constant 0.000000e+00 : f32
    %559 = vector.shape_cast %558 : vector<20x1xi1> to vector<20x1xi1>
    %560 = vector.broadcast %559 : vector<20x1xi1> to vector<20x128xi1>
    %561 = vector.broadcast %cst_166 : f32 to vector<20x128xf32>
    %562 = arith.select %560, %553, %561 : vector<20x128xi1>, vector<20x128xf32>
    %563 = arith.addf %551, %562 : vector<20x128xf32>
    %c1232 = arith.constant 1232 : index
    %c0_167 = arith.constant 0 : index
    %564 = vector.load %arg2[%c1232, %c0_167] : memref<1480x128xf32, #tpu.memory_space<vmem>>, vector<32x128xf32>
    %cst_168 = arith.constant dense<0.000000e+00> : vector<20x128xf32>
    %565 = tpu.matmul %454, %564, %cst_168 {dimension_numbers = #tpu.dot_dimension_numbers<[1], [0], [0], [1], [0, 0, 1, 1], [], []>} : vector<20x32xf32>, vector<32x128xf32>, vector<20x128xf32> -> vector<20x128xf32>
    %c9_i32_169 = arith.constant 9 : i32
    %566 = vector.broadcast %c9_i32_169 : i32 to vector<20x1xi32>
    %567 = arith.cmpi eq, %0, %566 : vector<20x1xi32>
    %c19_i32_170 = arith.constant 19 : i32
    %568 = vector.broadcast %c19_i32_170 : i32 to vector<20x1xi32>
    %569 = arith.cmpi eq, %0, %568 : vector<20x1xi32>
    %570 = arith.ori %567, %569 : vector<20x1xi1>
    %cst_171 = arith.constant 0.000000e+00 : f32
    %571 = vector.shape_cast %570 : vector<20x1xi1> to vector<20x1xi1>
    %572 = vector.broadcast %571 : vector<20x1xi1> to vector<20x128xi1>
    %573 = vector.broadcast %cst_171 : f32 to vector<20x128xf32>
    %574 = arith.select %572, %565, %573 : vector<20x128xi1>, vector<20x128xf32>
    %575 = arith.addf %563, %574 : vector<20x128xf32>
    %576 = tpu.iota {dimensions = array<i32: 0>} : vector<2x20xi32>
    %577 = tpu.iota {dimensions = array<i32: 1>} : vector<2x20xi32>
    %c10_i32_172 = arith.constant 10 : i32
    %578 = vector.broadcast %c10_i32_172 : i32 to vector<2x20xi32>
    %579 = arith.muli %576, %578 : vector<2x20xi32>
    %580 = arith.cmpi sge, %577, %579 : vector<2x20xi32>
    %c1_i32_173 = arith.constant 1 : i32
    %581 = vector.broadcast %c1_i32_173 : i32 to vector<2x20xi32>
    %582 = arith.addi %576, %581 : vector<2x20xi32>
    %c10_i32_174 = arith.constant 10 : i32
    %583 = vector.broadcast %c10_i32_174 : i32 to vector<2x20xi32>
    %584 = arith.muli %582, %583 : vector<2x20xi32>
    %585 = arith.cmpi slt, %577, %584 : vector<2x20xi32>
    %586 = arith.andi %580, %585 : vector<2x20xi1>
    %587 = arith.extui %586 : vector<2x20xi1> to vector<2x20xi32>
    %588 = arith.sitofp %587 : vector<2x20xi32> to vector<2x20xf32>
    %cst_175 = arith.constant dense<0.000000e+00> : vector<2x128xf32>
    %589 = tpu.matmul %588, %575, %cst_175 {dimension_numbers = #tpu.dot_dimension_numbers<[1], [0], [0], [1], [0, 0, 1, 1], [], []>} : vector<2x20xf32>, vector<20x128xf32>, vector<2x128xf32> -> vector<2x128xf32>
    %c1264 = arith.constant 1264 : index
    %c0_176 = arith.constant 0 : index
    %590 = vector.load %arg2[%c1264, %c0_176] : memref<1480x128xf32, #tpu.memory_space<vmem>>, vector<1x128xf32>
    %591 = vector.broadcast %590 : vector<1x128xf32> to vector<2x128xf32>
    %592 = arith.addf %589, %591 : vector<2x128xf32>
    %cst_177 = arith.constant 0.000000e+00 : f32
    %593 = vector.broadcast %cst_177 : f32 to vector<2x128xf32>
    %594 = arith.maximumf %592, %593 : vector<2x128xf32>
    %c1272 = arith.constant 1272 : index
    %c0_178 = arith.constant 0 : index
    %595 = vector.load %arg2[%c1272, %c0_178] : memref<1480x128xf32, #tpu.memory_space<vmem>>, vector<128x64xf32>
    %cst_179 = arith.constant dense<0.000000e+00> : vector<2x64xf32>
    %596 = tpu.matmul %594, %595, %cst_179 {dimension_numbers = #tpu.dot_dimension_numbers<[1], [0], [0], [1], [0, 0, 1, 1], [], []>} : vector<2x128xf32>, vector<128x64xf32>, vector<2x64xf32> -> vector<2x64xf32>
    %c1400 = arith.constant 1400 : index
    %c0_180 = arith.constant 0 : index
    %597 = vector.load %arg2[%c1400, %c0_180] : memref<1480x128xf32, #tpu.memory_space<vmem>>, vector<1x64xf32>
    %598 = vector.broadcast %597 : vector<1x64xf32> to vector<2x64xf32>
    %599 = arith.addf %596, %598 : vector<2x64xf32>
    %cst_181 = arith.constant 0.000000e+00 : f32
    %600 = vector.broadcast %cst_181 : f32 to vector<2x64xf32>
    %601 = arith.maximumf %599, %600 : vector<2x64xf32>
    %c1408 = arith.constant 1408 : index
    %c0_182 = arith.constant 0 : index
    %602 = vector.load %arg2[%c1408, %c0_182] : memref<1480x128xf32, #tpu.memory_space<vmem>>, vector<64x128xf32>
    %cst_183 = arith.constant dense<0.000000e+00> : vector<2x128xf32>
    %603 = tpu.matmul %601, %602, %cst_183 {dimension_numbers = #tpu.dot_dimension_numbers<[1], [0], [0], [1], [0, 0, 1, 1], [], []>} : vector<2x64xf32>, vector<64x128xf32>, vector<2x128xf32> -> vector<2x128xf32>
    %c1472 = arith.constant 1472 : index
    %c0_184 = arith.constant 0 : index
    %604 = vector.load %arg2[%c1472, %c0_184] : memref<1480x128xf32, #tpu.memory_space<vmem>>, vector<1x128xf32>
    %605 = vector.broadcast %604 : vector<1x128xf32> to vector<2x128xf32>
    %606 = arith.addf %603, %605 : vector<2x128xf32>
    %c0_185 = arith.constant 0 : index
    %c0_186 = arith.constant 0 : index
    %607 = vector.load %arg3[%c0_185, %c0_186] : memref<2x128xf32, #tpu.memory_space<vmem>>, vector<2x128xf32>
    tpu.vector_store %arg3[%c0_185, %c0_186], %606 {strides = array<i32>} : memref<2x128xf32, #tpu.memory_space<vmem>>, vector<2x128xf32>,
    return
  }
  func.func @transform_0(%arg0: i32, %arg1: memref<20xi32, #tpu.memory_space<smem>>) -> (i32, i32) {
    %c0_i32 = arith.constant 0 : i32
    %c0_i32_0 = arith.constant 0 : i32
    %c0_i32_1 = arith.constant 0 : i32
    return %c0_i32, %c0_i32_0 : i32, i32
  }
  func.func @transform_1(%arg0: i32, %arg1: memref<20xi32, #tpu.memory_space<smem>>) -> (i32, i32) {
    %c0_i32 = arith.constant 0 : i32
    %c0_i32_0 = arith.constant 0 : i32
    %c0_i32_1 = arith.constant 0 : i32
    return %c0_i32, %c0_i32_0 : i32, i32
  }
}

</mosaic_0001>

<llo_original>
// kernel: bert_forward.1
$region0: #{bert_forward.1}
  #allocation0 [shape = 'u32[]', space=smem, size = 0x4, offset = 0x4, fixed_abs, tag = 'smem constant byte address 0x4 - core index']
  #allocation1 [shape = 'u32[72,128]{1,0:T(1,128)}', space=vmem, size = 0x9000, scoped, tag = 'internal scratch']
  #allocation2 [shape = 's32[1]{0}', space=sflag, size = 0x4, scoped, tag = 'scoped memory for bert_forward.1']
  #allocation3 [shape = 'u8[512]{0}', space=smem, size = 0x200, scoped, tag = 'prefetched SMEM operand 0']
  %s0 = inlined_call_operand.vmem [shape: s32[20], index: 0, kind: input, shape index: {}]
  %s1 = inlined_call_operand.hbm [shape: f32[1480,128], index: 1, kind: input, shape index: {}]
  %s2 = inlined_call_operand.vmem [shape: f32[2,128], index: 2, kind: output, shape index: {}]
  %s3 = sld [smem:[#allocation0]]
  $region18: #{bert_forward.1} parent=0
    _
  %s5 = ssub.s32 1, %s3
  %s6 = scalar_select 0, %s5, %s3
  %s8 = sshll.u32 %s0, 4
  %s9 = int_to_ptr.vmem [resolvable:$true] %s8
  %11 = dma.vmem_to_smem %s9, 16, [#allocation3], [#allocation2]
  %13 = dma.done [#allocation2], 16
  %14 = sfence
  $region1: #{bert_forward.1} parent=0
    #allocation4 [shape = 'u8[757760]{0}', space=vmem, size = 0xb9000, scoped, tag = 'input window, operand 1, single buffered']
    #allocation5 [shape = 's32[1]{0}', space=sflag, size = 0x4, scoped, tag = 'scoped memory for bert_forward.1']
    %15 = vsyncpa [#allocation5], 0
    // Predicated region
    $region2: #{bert_forward.1} parent=1 // pred_check
      _
    $region3: #{bert_forward.1} parent=1 // pred_check_branch
      %17 = sbr.rel (0) target = $region5
    $region4: #{bert_forward.1} parent=1 // pred_region
      %19 = vsyncadd [#allocation5], 0
      %s20 = sshll.u32 %s1, 4
      %s21 = int_to_ptr.hbm [resolvable:$true] %s20
      %s22 = sshll.u32 [#allocation4], 4
      %s23 = int_to_ptr.vmem [resolvable:$true] %s22
      %28 = dma.hbm_to_vmem [thread:$0]  %s21, 23680, %s23, [#allocation5], 128, 128, 8
    $region5: #{bert_forward.1} parent=1 // pred_fallthru
      _
    // Predicated region
    $region6: #{bert_forward.1} parent=1 // pred_check
      _
    $region7: #{bert_forward.1} parent=1 // pred_check_branch
      %30 = sbr.rel (0) target = $region9
    $region8: #{bert_forward.1} parent=1 // pred_region
      %32 = dma.done [#allocation5], 23680
    $region9: #{bert_forward.1} parent=1 // pred_fallthru
      _
    %v33 = vlaneseq
    %v34 = vshrl.u32 %v33, 7
    %v35 = vadd.s32 %v34, 8
    %v36 = vadd.s32 %v34, 16
    %vm37 = vcmp.eq.s32.totalorder %v34, 0
    %vm38 = vcmp.eq.s32.totalorder %v35, 0
    %vm39 = vcmp.eq.s32.totalorder %v36, 0
    %s40 = sld [smem:[#allocation3]]
    %v41 = vstv %s40
    %v42 = vsel %vm37, %v41, 0
    %v43 = vsel %vm38, %v41, 0
    %v44 = vsel %vm39, %v41, 0
    %vm45 = vcmp.eq.s32.totalorder %v34, 1
    %vm46 = vcmp.eq.s32.totalorder %v35, 1
    %vm47 = vcmp.eq.s32.totalorder %v36, 1
    %s48 = sld [smem:[#allocation3 + $0x1]]
    %v49 = vstv %s48
    %v50 = vsel %vm45, %v49, %v42
    %v51 = vsel %vm46, %v49, %v43
    %v52 = vsel %vm47, %v49, %v44
    %vm53 = vcmp.eq.s32.totalorder %v34, 2
    %vm54 = vcmp.eq.s32.totalorder %v35, 2
    %vm55 = vcmp.eq.s32.totalorder %v36, 2
    %s56 = sld [smem:[#allocation3 + $0x2]]
    %v57 = vstv %s56
    %v58 = vsel %vm53, %v57, %v50
    %v59 = vsel %vm54, %v57, %v51
    %v60 = vsel %vm55, %v57, %v52
    %vm61 = vcmp.eq.s32.totalorder %v34, 3
    %vm62 = vcmp.eq.s32.totalorder %v35, 3
    %vm63 = vcmp.eq.s32.totalorder %v36, 3
    %s64 = sld [smem:[#allocation3 + $0x3]]
    %v65 = vstv %s64
    %v66 = vsel %vm61, %v65, %v58
    %v67 = vsel %vm62, %v65, %v59
    %v68 = vsel %vm63, %v65, %v60
    %vm69 = vcmp.eq.s32.totalorder %v34, 4
    %vm70 = vcmp.eq.s32.totalorder %v35, 4
    %vm71 = vcmp.eq.s32.totalorder %v36, 4
    %s72 = sld [smem:[#allocation3 + $0x4]]
    %v73 = vstv %s72
    %v74 = vsel %vm69, %v73, %v66
    %v75 = vsel %vm70, %v73, %v67
    %v76 = vsel %vm71, %v73, %v68
    %vm77 = vcmp.eq.s32.totalorder %v34, 5
    %vm78 = vcmp.eq.s32.totalorder %v35, 5
    %vm79 = vcmp.eq.s32.totalorder %v36, 5
    %s80 = sld [smem:[#allocation3 + $0x5]]
    %v81 = vstv %s80
    %v82 = vsel %vm77, %v81, %v74
    %v83 = vsel %vm78, %v81, %v75
    %v84 = vsel %vm79, %v81, %v76
    %vm85 = vcmp.eq.s32.totalorder %v34, 6
    %vm86 = vcmp.eq.s32.totalorder %v35, 6
    %vm87 = vcmp.eq.s32.totalorder %v36, 6
    %s88 = sld [smem:[#allocation3 + $0x6]]
    %v89 = vstv %s88
    %v90 = vsel %vm85, %v89, %v82
    %v91 = vsel %vm86, %v89, %v83
    %v92 = vsel %vm87, %v89, %v84
    %vm93 = vcmp.eq.s32.totalorder %v34, 7
    %vm94 = vcmp.eq.s32.totalorder %v35, 7
    %vm95 = vcmp.eq.s32.totalorder %v36, 7
    %s96 = sld [smem:[#allocation3 + $0x7]]
    %v97 = vstv %s96
    %v98 = vsel %vm93, %v97, %v90
    %v99 = vsel %vm94, %v97, %v91
    %v100 = vsel %vm95, %v97, %v92
    %vm101 = vcmp.eq.s32.totalorder %v34, 8
    %vm102 = vcmp.eq.s32.totalorder %v35, 8
    %vm103 = vcmp.eq.s32.totalorder %v36, 8
    %s104 = sld [smem:[#allocation3 + $0x8]]
    %v105 = vstv %s104
    %v106 = vsel %vm101, %v105, %v98
    %v107 = vsel %vm102, %v105, %v99
    %v108 = vsel %vm103, %v105, %v100
    %vm109 = vcmp.eq.s32.totalorder %v34, 9
    %vm110 = vcmp.eq.s32.totalorder %v35, 9
    %vm111 = vcmp.eq.s32.totalorder %v36, 9
    %s112 = sld [smem:[#allocation3 + $0x9]]
    %v113 = vstv %s112
    %v114 = vsel %vm109, %v113, %v106
    %v115 = vsel %vm110, %v113, %v107
    %v116 = vsel %vm111, %v113, %v108
    %vm117 = vcmp.eq.s32.totalorder %v34, 10
    %vm118 = vcmp.eq.s32.totalorder %v35, 10
    %vm119 = vcmp.eq.s32.totalorder %v36, 10
    %s120 = sld [smem:[#allocation3 + $0xa]]
    %v121 = vstv %s120
    %v122 = vsel %vm117, %v121, %v114
    %v123 = vsel %vm118, %v121, %v115
    %v124 = vsel %vm119, %v121, %v116
    %vm125 = vcmp.eq.s32.totalorder %v34, 11
    %vm126 = vcmp.eq.s32.totalorder %v35, 11
    %vm127 = vcmp.eq.s32.totalorder %v36, 11
    %s128 = sld [smem:[#allocation3 + $0xb]]
    %v129 = vstv %s128
    %v130 = vsel %vm125, %v129, %v122
    %v131 = vsel %vm126, %v129, %v123
    %v132 = vsel %vm127, %v129, %v124
    %vm133 = vcmp.eq.s32.totalorder %v34, 12
    %vm134 = vcmp.eq.s32.totalorder %v35, 12
    %vm135 = vcmp.eq.s32.totalorder %v36, 12
    %s136 = sld [smem:[#allocation3 + $0xc]]
    %v137 = vstv %s136
    %v138 = vsel %vm133, %v137, %v130
    %v139 = vsel %vm134, %v137, %v131
    %v140 = vsel %vm135, %v137, %v132
    %vm141 = vcmp.eq.s32.totalorder %v34, 13
    %vm142 = vcmp.eq.s32.totalorder %v35, 13
    %vm143 = vcmp.eq.s32.totalorder %v36, 13
    %s144 = sld [smem:[#allocation3 + $0xd]]
    %v145 = vstv %s144
    %v146 = vsel %vm141, %v145, %v138
    %v147 = vsel %vm142, %v145, %v139
    %v148 = vsel %vm143, %v145, %v140
    %vm149 = vcmp.eq.s32.totalorder %v34, 14
    %vm150 = vcmp.eq.s32.totalorder %v35, 14
    %vm151 = vcmp.eq.s32.totalorder %v36, 14
    %s152 = sld [smem:[#allocation3 + $0xe]]
    %v153 = vstv %s152
    %v154 = vsel %vm149, %v153, %v146
    %v155 = vsel %vm150, %v153, %v147
    %v156 = vsel %vm151, %v153, %v148
    %vm157 = vcmp.eq.s32.totalorder %v34, 15
    %vm158 = vcmp.eq.s32.totalorder %v35, 15
    %vm159 = vcmp.eq.s32.totalorder %v36, 15
    %s160 = sld [smem:[#allocation3 + $0xf]]
    %v161 = vstv %s160
    %v162 = vsel %vm157, %v161, %v154
    %v163 = vsel %vm158, %v161, %v155
    %v164 = vsel %vm159, %v161, %v156
    %vm165 = vcmp.eq.s32.totalorder %v34, 16
    %vm166 = vcmp.eq.s32.totalorder %v35, 16
    %vm167 = vcmp.eq.s32.totalorder %v36, 16
    %s168 = sld [smem:[#allocation3 + $0x10]]
    %v169 = vstv %s168
    %v170 = vsel %vm165, %v169, %v162
    %v171 = vsel %vm166, %v169, %v163
    %v172 = vsel %vm167, %v169, %v164
    %vm173 = vcmp.eq.s32.totalorder %v34, 17
    %vm174 = vcmp.eq.s32.totalorder %v35, 17
    %vm175 = vcmp.eq.s32.totalorder %v36, 17
    %s176 = sld [smem:[#allocation3 + $0x11]]
    %v177 = vstv %s176
    %v178 = vsel %vm173, %v177, %v170
    %v179 = vsel %vm174, %v177, %v171
    %v180 = vsel %vm175, %v177, %v172
    %vm181 = vcmp.eq.s32.totalorder %v34, 18
    %vm182 = vcmp.eq.s32.totalorder %v35, 18
    %vm183 = vcmp.eq.s32.totalorder %v36, 18
    %s184 = sld [smem:[#allocation3 + $0x12]]
    %v185 = vstv %s184
    %v186 = vsel %vm181, %v185, %v178
    %v187 = vsel %vm182, %v185, %v179
    %v188 = vsel %vm183, %v185, %v180
    %vm189 = vcmp.eq.s32.totalorder %v34, 19
    %vm190 = vcmp.eq.s32.totalorder %v35, 19
    %vm191 = vcmp.eq.s32.totalorder %v36, 19
    %s192 = sld [smem:[#allocation3 + $0x13]]
    %v193 = vstv %s192
    %v194 = vsel %vm189, %v193, %v186
    %v195 = vsel %vm190, %v193, %v187
    %v196 = vsel %vm191, %v193, %v188
    %v197 = vlaneseq
    %v198 = vand.u32 %v197, 127
    %vm199 = vcmp.eq.s32.totalorder %v194, %v198
    %vm200 = vcmp.eq.s32.totalorder %v195, %v198
    %vm201 = vcmp.eq.s32.totalorder %v196, %v198
    %v202 = vsel %vm199, 1, 0
    %v203 = vsel %vm200, 1, 0
    %v204 = vsel %vm201, 1, 0
    %v205 = vcvt.s32.f32 %v202
    %v206 = vcvt.s32.f32 %v203
    %v207 = vcvt.s32.f32 %v204
    %v208 = vld [vmem:[#allocation4] sm:$0xff]
    %v209 = vld [vmem:[#allocation4 + $0x8] sm:$0xff]
    %v210 = vld [vmem:[#allocation4 + $0x10] sm:$0xff]
    %v211 = vld [vmem:[#allocation4 + $0x18] sm:$0xff]
    %v212 = vld [vmem:[#allocation4 + $0x20] sm:$0xff]
    %v213 = vld [vmem:[#allocation4 + $0x28] sm:$0xff]
    %v214 = vld [vmem:[#allocation4 + $0x30] sm:$0xff]
    %v215 = vld [vmem:[#allocation4 + $0x38] sm:$0xff]
    %v216 = vld [vmem:[#allocation4 + $0x40] sm:$0xff]
    %v217 = vld [vmem:[#allocation4 + $0x48] sm:$0xff]
    %v218 = vld [vmem:[#allocation4 + $0x50] sm:$0xff]
    %v219 = vld [vmem:[#allocation4 + $0x58] sm:$0xff]
    %v220 = vld [vmem:[#allocation4 + $0x60] sm:$0xff]
    %v221 = vld [vmem:[#allocation4 + $0x68] sm:$0xff]
    %v222 = vld [vmem:[#allocation4 + $0x70] sm:$0xff]
    %v223 = vld [vmem:[#allocation4 + $0x78] sm:$0xff]
    %v224 = vld [vmem:[#allocation4 + $0x80] sm:$0xff]
    %v225 = vld [vmem:[#allocation4 + $0x88] sm:$0xff]
    %v226 = vld [vmem:[#allocation4 + $0x90] sm:$0xf]
    %227 = vmatpush.msra.mxu0 %v223
    %228 = vmatpush.msra.mxu0 %v222
    %229 = vmatpush.msra.mxu0 %v221
    %230 = vmatpush.msra.mxu0 %v220
    %231 = vmatpush.msra.mxu0 %v219
    %232 = vmatpush.msra.mxu0 %v218
    %233 = vmatpush.msra.mxu0 %v217
    %234 = vmatpush.msra.mxu0 %v216
    %235 = vmatpush.msra.mxu0 %v215
    %236 = vmatpush.msra.mxu0 %v214
    %237 = vmatpush.msra.mxu0 %v213
    %238 = vmatpush.msra.mxu0 %v212
    %239 = vmatpush.msra.mxu0 %v211
    %240 = vmatpush.msra.mxu0 %v210
    %241 = vmatpush.msra.mxu0 %v209
    %242 = vmatpush.msra.mxu0 %v208
    %243 = vmatmul.f32.gmra.mxu0 %v205
    %v244 = vpop.f32.mrf.mxu0
    %v245 = vadd.f32 %v224, %v244
    %246 = vmatmul.f32.gmra.mxu0 %v206
    %v247 = vpop.f32.mrf.mxu0
    %v248 = vadd.f32 %v225, %v247
    %249 = vmatmul.f32.gmra.mxu0 %v207
    %v250 = vpop.f32.mrf.mxu0
    %v251 = vadd.f32 %v226, %v250
    %252 = vdwg.mxu0
    %v253 = vld [vmem:[#allocation4 + $0x98] sm:$0x1]
    %v254 = vld [vmem:[#allocation4 + $0xa0] sm:$0x1]
    %vm255 = vcmask 261120
    %v256 = vsel %vm255, %v245, 0.0
    %257 = vadd.xlane.f32.xlu0 %v256
    %v258 = vpop.xlane.xlu0 %257
    %v259 = vsel %vm255, %v248, 0.0
    %260 = vadd.xlane.f32.xlu0 %v259
    %v261 = vpop.xlane.xlu0 %260
    %vm262 = vcmask 257024
    %v263 = vsel %vm262, %v251, 0.0
    %264 = vadd.xlane.f32.xlu0 %v263
    %v265 = vpop.xlane.xlu0 %264
    %v266 = vrcp.pop 32.0
    %v267 = vmul.f32 32.0, %v266
    %v268 = vsub.f32 1.0, %v267
    %v269 = vmul.f32 %v266, %v268
    %v270 = vadd.f32 %v266, %v269
    %vm271 = vweird.f32 %v266
    %v272 = vsel %vm271, %v266, %v270
    %v273 = vmul.f32 %v258, %v272
    %v274 = vmul.f32 %v261, %v272
    %v275 = vmul.f32 %v265, %v272
    %v276 = vsub.f32 %v245, %v273
    %v277 = vsub.f32 %v248, %v274
    %v278 = vsub.f32 %v251, %v275
    %v279 = vmul.f32 %v276, %v276
    %v280 = vmul.f32 %v277, %v277
    %v281 = vmul.f32 %v278, %v278
    %v282 = vsel %vm255, %v279, 0.0
    %283 = vadd.xlane.f32.xlu0 %v282
    %v284 = vpop.xlane.xlu0 %283
    %v285 = vsel %vm255, %v280, 0.0
    %286 = vadd.xlane.f32.xlu0 %v285
    %v287 = vpop.xlane.xlu0 %286
    %v288 = vsel %vm262, %v281, 0.0
    %289 = vadd.xlane.f32.xlu0 %v288
    %v290 = vpop.xlane.xlu0 %289
    %v291 = vmul.f32 %v284, %v272
    %v292 = vmul.f32 %v287, %v272
    %v293 = vmul.f32 %v290, %v272
    %v294 = vadd.f32 %v291, 1e-12
    %v295 = vadd.f32 %v292, 1e-12
    %v296 = vadd.f32 %v293, 1e-12
    %v297 = vrsqrt.pop %v294
    %v298 = vmul.f32 %v297, %v294
    %v299 = vmul.f32 %v298, %v297
    %v300 = vmul.f32 0.5, %v299
    %v301 = vsub.f32 1.5, %v300
    %v302 = vmul.f32 %v297, %v301
    %vm303 = vweird.f32 %v294
    %vm304 = vweird.f32 %v297
    %vm305 = vmor %vm303, %vm304
    %v306 = vsel %vm305, %v297, %v302
    %v307 = vrsqrt.pop %v295
    %v308 = vmul.f32 %v307, %v295
    %v309 = vmul.f32 %v308, %v307
    %v310 = vmul.f32 0.5, %v309
    %v311 = vsub.f32 1.5, %v310
    %v312 = vmul.f32 %v307, %v311
    %vm313 = vweird.f32 %v295
    %vm314 = vweird.f32 %v307
    %vm315 = vmor %vm313, %vm314
    %v316 = vsel %vm315, %v307, %v312
    %v317 = vrsqrt.pop %v296
    %v318 = vmul.f32 %v317, %v296
    %v319 = vmul.f32 %v318, %v317
    %v320 = vmul.f32 0.5, %v319
    %v321 = vsub.f32 1.5, %v320
    %v322 = vmul.f32 %v317, %v321
    %vm323 = vweird.f32 %v296
    %vm324 = vweird.f32 %v317
    %vm325 = vmor %vm323, %vm324
    %v326 = vsel %vm325, %v317, %v322
    %v327 = vmul.f32 %v276, %v306
    %v328 = vmul.f32 %v277, %v316
    %v329 = vmul.f32 %v278, %v326
    %v330 = vperm.slane %v253, 0
    %v331 = vmul.f32 %v327, %v330
    %v332 = vmul.f32 %v328, %v330
    %v333 = vmul.f32 %v329, %v330
    %v334 = vperm.slane %v254, 0
    %v335 = vadd.f32 %v331, %v334
    %v336 = vadd.f32 %v332, %v334
    %v337 = vadd.f32 %v333, %v334
    %vm338 = vcmp.ge.s32.totalorder %v198, 0
    %vm339 = vcmp.lt.s32.totalorder %v198, 16
    %vm340 = vmand %vm338, %vm339
    %v341 = vsel %vm340, 1, 0
    %v342 = vcvt.s32.f32 %v341
    %vm343 = vcmp.ge.s32.totalorder %v198, 16
    %vm344 = vcmp.lt.s32.totalorder %v198, 32
    %vm345 = vmand %vm343, %vm344
    %v346 = vsel %vm345, 1, 0
    %v347 = vcvt.s32.f32 %v346
    %vm348 = vcmp.ge.s32.totalorder %v34, 0
    %vm349 = vcmp.ge.s32.totalorder %v35, 0
    %vm350 = vcmp.ge.s32.totalorder %v36, 0
    %vm351 = vcmp.lt.s32.totalorder %v34, 10
    %vm352 = vcmp.lt.s32.totalorder %v35, 10
    %vm353 = vcmp.lt.s32.totalorder %v36, 10
    %vm354 = vmand %vm348, %vm351
    %vm355 = vmand %vm349, %vm352
    %vm356 = vmand %vm350, %vm353
    %vm357 = vcmp.lt.s32.totalorder %v198, 10
    %vm358 = vmand %vm338, %vm357
    %vm359 = vmand %vm354, %vm358
    %vm360 = vmand %vm355, %vm358
    %vm361 = vmand %vm356, %vm358
    %vm362 = vcmp.ge.s32.totalorder %v34, 10
    %vm363 = vcmp.ge.s32.totalorder %v35, 10
    %vm364 = vcmp.ge.s32.totalorder %v36, 10
    %vm365 = vcmp.lt.s32.totalorder %v34, 20
    %vm366 = vcmp.lt.s32.totalorder %v35, 20
    %vm367 = vcmp.lt.s32.totalorder %v36, 20
    %vm368 = vmand %vm362, %vm365
    %vm369 = vmand %vm363, %vm366
    %vm370 = vmand %vm364, %vm367
    %vm371 = vcmp.ge.s32.totalorder %v198, 10
    %vm372 = vcmp.lt.s32.totalorder %v198, 20
    %vm373 = vmand %vm371, %vm372
    %vm374 = vmand %vm368, %vm373
    %vm375 = vmand %vm369, %vm373
    %vm376 = vmand %vm370, %vm373
    %vm377 = vmor %vm359, %vm374
    %vm378 = vmor %vm360, %vm375
    %vm379 = vmor %vm361, %vm376
    %v380 = vsel %vm377, 0.0, -1e+30
    %v381 = vsel %vm378, 0.0, -1e+30
    %v382 = vsel %vm379, 0.0, -1e+30
    %v383 = vld [vmem:[#allocation4 + $0xa8] sm:$0xff]
    %v384 = vld [vmem:[#allocation4 + $0xb0] sm:$0xff]
    %v385 = vld [vmem:[#allocation4 + $0xb8] sm:$0xff]
    %v386 = vld [vmem:[#allocation4 + $0xc0] sm:$0xff]
    %v387 = vld [vmem:[#allocation4 + $0xc8] sm:$0x1]
    %v388 = vperm.slane %v387, 0
    %v390 = vsel %vm255, %v335, 0
    %v393 = vsel %vm255, %v336, 0
    %v396 = vsel %vm255, %v337, 0
    %398 = vmatpush.msra.mxu0 0.0
    %399 = vmatpush.msra.mxu0 0.0
    %400 = vmatpush.msra.mxu0 0.0
    %401 = vmatpush.msra.mxu0 0.0
    %402 = vmatpush.msra.mxu0 0.0
    %403 = vmatpush.msra.mxu0 0.0
    %404 = vmatpush.msra.mxu0 0.0
    %405 = vmatpush.msra.mxu0 0.0
    %406 = vmatpush.msra.mxu0 0.0
    %407 = vmatpush.msra.mxu0 0.0
    %408 = vmatpush.msra.mxu0 0.0
    %409 = vmatpush.msra.mxu0 0.0
    %410 = vmatpush.msra.mxu0 %v386
    %411 = vmatpush.msra.mxu0 %v385
    %412 = vmatpush.msra.mxu0 %v384
    %413 = vmatpush.msra.mxu0 %v383
    %414 = vmatmul.f32.gmra.mxu0 %v390
    %v415 = vpop.f32.mrf.mxu0
    %v416 = vadd.f32 %v388, %v415
    %417 = vmatmul.f32.gmra.mxu0 %v393
    %v418 = vpop.f32.mrf.mxu0
    %v419 = vadd.f32 %v388, %v418
    %420 = vmatmul.f32.gmra.mxu0 %v396
    %v421 = vpop.f32.mrf.mxu0
    %v422 = vadd.f32 %v388, %v421
    %423 = vdwg.mxu0
    %v424 = vld [vmem:[#allocation4 + $0xd0] sm:$0xff]
    %v425 = vld [vmem:[#allocation4 + $0xd8] sm:$0xff]
    %v426 = vld [vmem:[#allocation4 + $0xe0] sm:$0xff]
    %v427 = vld [vmem:[#allocation4 + $0xe8] sm:$0xff]
    %v428 = vld [vmem:[#allocation4 + $0xf0] sm:$0x1]
    %v429 = vperm.slane %v428, 0
    %430 = vmatpush.msra.mxu0 0.0
    %431 = vmatpush.msra.mxu0 0.0
    %432 = vmatpush.msra.mxu0 0.0
    %433 = vmatpush.msra.mxu0 0.0
    %434 = vmatpush.msra.mxu0 0.0
    %435 = vmatpush.msra.mxu0 0.0
    %436 = vmatpush.msra.mxu0 0.0
    %437 = vmatpush.msra.mxu0 0.0
    %438 = vmatpush.msra.mxu0 0.0
    %439 = vmatpush.msra.mxu0 0.0
    %440 = vmatpush.msra.mxu0 0.0
    %441 = vmatpush.msra.mxu0 0.0
    %442 = vmatpush.msra.mxu0 %v427
    %443 = vmatpush.msra.mxu0 %v426
    %444 = vmatpush.msra.mxu0 %v425
    %445 = vmatpush.msra.mxu0 %v424
    %446 = vmatmul.f32.gmra.mxu0 %v390
    %v447 = vpop.f32.mrf.mxu0
    %v448 = vadd.f32 %v429, %v447
    %449 = vmatmul.f32.gmra.mxu0 %v393
    %v450 = vpop.f32.mrf.mxu0
    %v451 = vadd.f32 %v429, %v450
    %452 = vmatmul.f32.gmra.mxu0 %v396
    %v453 = vpop.f32.mrf.mxu0
    %v454 = vadd.f32 %v429, %v453
    %455 = vdwg.mxu0
    %v456 = vld [vmem:[#allocation4 + $0xf8] sm:$0xff]
    %v457 = vld [vmem:[#allocation4 + $0x100] sm:$0xff]
    %v458 = vld [vmem:[#allocation4 + $0x108] sm:$0xff]
    %v459 = vld [vmem:[#allocation4 + $0x110] sm:$0xff]
    %v460 = vld [vmem:[#allocation4 + $0x118] sm:$0x1]
    %v461 = vperm.slane %v460, 0
    %462 = vmatpush.msra.mxu0 0.0
    %463 = vmatpush.msra.mxu0 0.0
    %464 = vmatpush.msra.mxu0 0.0
    %465 = vmatpush.msra.mxu0 0.0
    %466 = vmatpush.msra.mxu0 0.0
    %467 = vmatpush.msra.mxu0 0.0
    %468 = vmatpush.msra.mxu0 0.0
    %469 = vmatpush.msra.mxu0 0.0
    %470 = vmatpush.msra.mxu0 0.0
    %471 = vmatpush.msra.mxu0 0.0
    %472 = vmatpush.msra.mxu0 0.0
    %473 = vmatpush.msra.mxu0 0.0
    %474 = vmatpush.msra.mxu0 %v459
    %475 = vmatpush.msra.mxu0 %v458
    %476 = vmatpush.msra.mxu0 %v457
    %477 = vmatpush.msra.mxu0 %v456
    %478 = vmatmul.f32.gmra.mxu0 %v390
    %v479 = vpop.f32.mrf.mxu0
    %v480 = vadd.f32 %v461, %v479
    %481 = vmatmul.f32.gmra.mxu0 %v393
    %v482 = vpop.f32.mrf.mxu0
    %v483 = vadd.f32 %v461, %v482
    %484 = vmatmul.f32.gmra.mxu0 %v396
    %v485 = vpop.f32.mrf.mxu0
    %v486 = vadd.f32 %v461, %v485
    %487 = vdwg.mxu0
    %v488 = vmul.f32 %v416, %v342
    %v489 = vmul.f32 %v419, %v342
    %v490 = vmul.f32 %v422, %v342
    %v492 = vsel %vm255, %v488, 0
    %v495 = vsel %vm255, %v489, 0
    %v498 = vsel %vm255, %v490, 0
    %v501 = vsel %vm255, %v448, 0
    %v504 = vsel %vm255, %v451, 0
    %v507 = vsel %vm255, %v454, 0
    %509 = vmatpush.xpose.msra.mxu0 0.0
    %510 = vmatpush.xpose.msra.mxu0 0.0
    %511 = vmatpush.xpose.msra.mxu0 0.0
    %512 = vmatpush.xpose.msra.mxu0 0.0
    %513 = vmatpush.xpose.msra.mxu0 0.0
    %514 = vmatpush.xpose.msra.mxu0 0.0
    %515 = vmatpush.xpose.msra.mxu0 0.0
    %516 = vmatpush.xpose.msra.mxu0 0.0
    %517 = vmatpush.xpose.msra.mxu0 0.0
    %518 = vmatpush.xpose.msra.mxu0 0.0
    %519 = vmatpush.xpose.msra.mxu0 0.0
    %520 = vmatpush.xpose.msra.mxu0 0.0
    %521 = vmatpush.xpose.msra.mxu0 0.0
    %522 = vmatpush.xpose.msra.mxu0 %v507
    %523 = vmatpush.xpose.msra.mxu0 %v504
    %524 = vmatpush.xpose.msra.mxu0 %v501
    %525 = vmatmul.f32.gmra.mxu0 %v492
    %v526 = vpop.f32.mrf.mxu0
    %v527 = vadd.f32 0.0, %v526
    %528 = vmatmul.f32.gmra.mxu0 %v495
    %v529 = vpop.f32.mrf.mxu0
    %v530 = vadd.f32 0.0, %v529
    %531 = vmatmul.f32.gmra.mxu0 %v498
    %v532 = vpop.f32.mrf.mxu0
    %v533 = vadd.f32 0.0, %v532
    %534 = vdwg.mxu0
    %v535 = vmul.f32 %v527, 0.25
    %v536 = vmul.f32 %v530, 0.25
    %v537 = vmul.f32 %v533, 0.25
    %v538 = vadd.f32 %v535, %v380
    %v539 = vadd.f32 %v536, %v381
    %v540 = vadd.f32 %v537, %v382
    %vm541 = vcmask 162816
    %v542 = vsel %vm541, %v538, -inf
    %543 = vmax.xlane.f32.xlu0 %v542
    %v544 = vpop.xlane.xlu0 %543
    %v545 = vsel %vm541, %v539, -inf
    %546 = vmax.xlane.f32.xlu0 %v545
    %v547 = vpop.xlane.xlu0 %546
    %vm548 = vcmask 158720
    %v549 = vsel %vm548, %v540, -inf
    %550 = vmax.xlane.f32.xlu0 %v549
    %v551 = vpop.xlane.xlu0 %550
    %v552 = vsub.f32 %v538, %v544
    %v553 = vsub.f32 %v539, %v547
    %v554 = vsub.f32 %v540, %v551
    %v555 = vmul.f32 %v552, 1.442695
    %v556 = vpow.pop %v555
    %v557 = vmul.f32 %v553, 1.442695
    %v558 = vpow.pop %v557
    %v559 = vmul.f32 %v554, 1.442695
    %v560 = vpow.pop %v559
    %v561 = vsel %vm541, %v556, 0.0
    %562 = vadd.xlane.f32.xlu0 %v561
    %v563 = vpop.xlane.xlu0 %562
    %v564 = vsel %vm541, %v558, 0.0
    %565 = vadd.xlane.f32.xlu0 %v564
    %v566 = vpop.xlane.xlu0 %565
    %v567 = vsel %vm548, %v560, 0.0
    %568 = vadd.xlane.f32.xlu0 %v567
    %v569 = vpop.xlane.xlu0 %568
    %v570 = vrcp.pop %v563
    %v571 = vrcp.pop %v566
    %v572 = vrcp.pop %v569
    %v573 = vmul.f32 %v556, %v570
    %v574 = vmul.f32 %v558, %v571
    %v575 = vmul.f32 %v560, %v572
    %v576 = vmul.f32 %v480, %v342
    %v577 = vmul.f32 %v483, %v342
    %v578 = vmul.f32 %v486, %v342
    %v579 = vmul.f32 %v416, %v347
    %v580 = vmul.f32 %v419, %v347
    %v581 = vmul.f32 %v422, %v347
    %v583 = vsel %vm255, %v579, 0
    %v586 = vsel %vm255, %v580, 0
    %v589 = vsel %vm255, %v581, 0
    %591 = vmatpush.xpose.msra.mxu0 0.0
    %592 = vmatpush.xpose.msra.mxu0 0.0
    %593 = vmatpush.xpose.msra.mxu0 0.0
    %594 = vmatpush.xpose.msra.mxu0 0.0
    %595 = vmatpush.xpose.msra.mxu0 0.0
    %596 = vmatpush.xpose.msra.mxu0 0.0
    %597 = vmatpush.xpose.msra.mxu0 0.0
    %598 = vmatpush.xpose.msra.mxu0 0.0
    %599 = vmatpush.xpose.msra.mxu0 0.0
    %600 = vmatpush.xpose.msra.mxu0 0.0
    %601 = vmatpush.xpose.msra.mxu0 0.0
    %602 = vmatpush.xpose.msra.mxu0 0.0
    %603 = vmatpush.xpose.msra.mxu0 0.0
    %604 = vmatpush.xpose.msra.mxu0 %v507
    %605 = vmatpush.xpose.msra.mxu0 %v504
    %606 = vmatpush.xpose.msra.mxu0 %v501
    %607 = vmatmul.f32.gmra.mxu0 %v583
    %v608 = vpop.f32.mrf.mxu0
    %v609 = vadd.f32 0.0, %v608
    %610 = vmatmul.f32.gmra.mxu0 %v586
    %v611 = vpop.f32.mrf.mxu0
    %v612 = vadd.f32 0.0, %v611
    %613 = vmatmul.f32.gmra.mxu0 %v589
    %v614 = vpop.f32.mrf.mxu0
    %v615 = vadd.f32 0.0, %v614
    %616 = vdwg.mxu0
    %v617 = vmul.f32 %v609, 0.25
    %v618 = vmul.f32 %v612, 0.25
    %v619 = vmul.f32 %v615, 0.25
    %v620 = vadd.f32 %v617, %v380
    %v621 = vadd.f32 %v618, %v381
    %v622 = vadd.f32 %v619, %v382
    %v623 = vsel %vm541, %v620, -inf
    %624 = vmax.xlane.f32.xlu0 %v623
    %v625 = vpop.xlane.xlu0 %624
    %v626 = vsel %vm541, %v621, -inf
    %627 = vmax.xlane.f32.xlu0 %v626
    %v628 = vpop.xlane.xlu0 %627
    %v629 = vsel %vm548, %v622, -inf
    %630 = vmax.xlane.f32.xlu0 %v629
    %v631 = vpop.xlane.xlu0 %630
    %v632 = vsub.f32 %v620, %v625
    %v633 = vsub.f32 %v621, %v628
    %v634 = vsub.f32 %v622, %v631
    %v635 = vmul.f32 %v632, 1.442695
    %v636 = vpow.pop %v635
    %v637 = vmul.f32 %v633, 1.442695
    %v638 = vpow.pop %v637
    %v639 = vmul.f32 %v634, 1.442695
    %v640 = vpow.pop %v639
    %v641 = vsel %vm541, %v636, 0.0
    %642 = vadd.xlane.f32.xlu0 %v641
    %v643 = vpop.xlane.xlu0 %642
    %v644 = vsel %vm541, %v638, 0.0
    %645 = vadd.xlane.f32.xlu0 %v644
    %v646 = vpop.xlane.xlu0 %645
    %v647 = vsel %vm548, %v640, 0.0
    %648 = vadd.xlane.f32.xlu0 %v647
    %v649 = vpop.xlane.xlu0 %648
    %v650 = vrcp.pop %v643
    %v651 = vrcp.pop %v646
    %v652 = vrcp.pop %v649
    %v653 = vmul.f32 %v636, %v650
    %v654 = vmul.f32 %v638, %v651
    %v655 = vmul.f32 %v640, %v652
    %v656 = vmul.f32 %v480, %v347
    %v657 = vmul.f32 %v483, %v347
    %v658 = vmul.f32 %v486, %v347
    %v660 = vsel %vm541, %v653, 0
    %v663 = vsel %vm541, %v654, 0
    %v666 = vsel %vm541, %v655, 0
    %vm668 = vcmask 1043456
    %v670 = vsel %vm668, %v658, 0
    %672 = vmatpush.msra.mxu0 0.0
    %673 = vmatpush.msra.mxu0 0.0
    %674 = vmatpush.msra.mxu0 0.0
    %675 = vmatpush.msra.mxu0 0.0
    %676 = vmatpush.msra.mxu0 0.0
    %677 = vmatpush.msra.mxu0 0.0
    %678 = vmatpush.msra.mxu0 0.0
    %679 = vmatpush.msra.mxu0 0.0
    %680 = vmatpush.msra.mxu0 0.0
    %681 = vmatpush.msra.mxu0 0.0
    %682 = vmatpush.msra.mxu0 0.0
    %683 = vmatpush.msra.mxu0 0.0
    %684 = vmatpush.msra.mxu0 0.0
    %685 = vmatpush.msra.mxu0 %v670
    %686 = vmatpush.msra.mxu0 %v657
    %687 = vmatpush.msra.mxu0 %v656
    %688 = vmatmul.f32.gmra.mxu0 %v660
    %v689 = vpop.f32.mrf.mxu0
    %v690 = vadd.f32 0.0, %v689
    %691 = vmatmul.f32.gmra.mxu0 %v663
    %v692 = vpop.f32.mrf.mxu0
    %v693 = vadd.f32 0.0, %v692
    %694 = vmatmul.f32.gmra.mxu0 %v666
    %v695 = vpop.f32.mrf.mxu0
    %v696 = vadd.f32 0.0, %v695
    %697 = vdwg.mxu0
    %v699 = vsel %vm541, %v573, 0
    %v702 = vsel %vm541, %v574, 0
    %v705 = vsel %vm541, %v575, 0
    %v708 = vsel %vm668, %v578, 0
    %710 = vmatpush.msra.mxu0 0.0
    %711 = vmatpush.msra.mxu0 0.0
    %712 = vmatpush.msra.mxu0 0.0
    %713 = vmatpush.msra.mxu0 0.0
    %714 = vmatpush.msra.mxu0 0.0
    %715 = vmatpush.msra.mxu0 0.0
    %716 = vmatpush.msra.mxu0 0.0
    %717 = vmatpush.msra.mxu0 0.0
    %718 = vmatpush.msra.mxu0 0.0
    %719 = vmatpush.msra.mxu0 0.0
    %720 = vmatpush.msra.mxu0 0.0
    %721 = vmatpush.msra.mxu0 0.0
    %722 = vmatpush.msra.mxu0 0.0
    %723 = vmatpush.msra.mxu0 %v708
    %724 = vmatpush.msra.mxu0 %v577
    %725 = vmatpush.msra.mxu0 %v576
    %726 = vmatmul.f32.gmra.mxu0 %v699
    %v727 = vpop.f32.mrf.mxu0
    %v728 = vadd.f32 %v690, %v727
    %729 = vmatmul.f32.gmra.mxu0 %v702
    %v730 = vpop.f32.mrf.mxu0
    %v731 = vadd.f32 %v693, %v730
    %732 = vmatmul.f32.gmra.mxu0 %v705
    %v733 = vpop.f32.mrf.mxu0
    %v734 = vadd.f32 %v696, %v733
    %735 = vdwg.mxu0
    %v736 = vld [vmem:[#allocation4 + $0x120] sm:$0xff]
    %v737 = vld [vmem:[#allocation4 + $0x128] sm:$0xff]
    %v738 = vld [vmem:[#allocation4 + $0x130] sm:$0xff]
    %v739 = vld [vmem:[#allocation4 + $0x138] sm:$0xff]
    %v740 = vld [vmem:[#allocation4 + $0x140] sm:$0x1]
    %v741 = vperm.slane %v740, 0
    %v743 = vsel %vm255, %v728, 0
    %v746 = vsel %vm255, %v731, 0
    %v749 = vsel %vm255, %v734, 0
    %751 = vmatpush.msra.mxu0 0.0
    %752 = vmatpush.msra.mxu0 0.0
    %753 = vmatpush.msra.mxu0 0.0
    %754 = vmatpush.msra.mxu0 0.0
    %755 = vmatpush.msra.mxu0 0.0
    %756 = vmatpush.msra.mxu0 0.0
    %757 = vmatpush.msra.mxu0 0.0
    %758 = vmatpush.msra.mxu0 0.0
    %759 = vmatpush.msra.mxu0 0.0
    %760 = vmatpush.msra.mxu0 0.0
    %761 = vmatpush.msra.mxu0 0.0
    %762 = vmatpush.msra.mxu0 0.0
    %763 = vmatpush.msra.mxu0 %v739
    %764 = vmatpush.msra.mxu0 %v738
    %765 = vmatpush.msra.mxu0 %v737
    %766 = vmatpush.msra.mxu0 %v736
    %767 = vmatmul.f32.gmra.mxu0 %v743
    %v768 = vpop.f32.mrf.mxu0
    %v769 = vadd.f32 %v741, %v768
    %770 = vmatmul.f32.gmra.mxu0 %v746
    %v771 = vpop.f32.mrf.mxu0
    %v772 = vadd.f32 %v741, %v771
    %773 = vmatmul.f32.gmra.mxu0 %v749
    %v774 = vpop.f32.mrf.mxu0
    %v775 = vadd.f32 %v741, %v774
    %776 = vdwg.mxu0
    %v777 = vadd.f32 %v335, %v769
    %v778 = vadd.f32 %v336, %v772
    %v779 = vadd.f32 %v337, %v775
    %v780 = vld [vmem:[#allocation4 + $0x148] sm:$0x1]
    %v781 = vld [vmem:[#allocation4 + $0x150] sm:$0x1]
    %v782 = vsel %vm255, %v777, 0.0
    %783 = vadd.xlane.f32.xlu0 %v782
    %v784 = vpop.xlane.xlu0 %783
    %v785 = vsel %vm255, %v778, 0.0
    %786 = vadd.xlane.f32.xlu0 %v785
    %v787 = vpop.xlane.xlu0 %786
    %v788 = vsel %vm262, %v779, 0.0
    %789 = vadd.xlane.f32.xlu0 %v788
    %v790 = vpop.xlane.xlu0 %789
    %v791 = vmul.f32 %v784, %v272
    %v792 = vmul.f32 %v787, %v272
    %v793 = vmul.f32 %v790, %v272
    %v794 = vsub.f32 %v777, %v791
    %v795 = vsub.f32 %v778, %v792
    %v796 = vsub.f32 %v779, %v793
    %v797 = vmul.f32 %v794, %v794
    %v798 = vmul.f32 %v795, %v795
    %v799 = vmul.f32 %v796, %v796
    %v800 = vsel %vm255, %v797, 0.0
    %801 = vadd.xlane.f32.xlu0 %v800
    %v802 = vpop.xlane.xlu0 %801
    %v803 = vsel %vm255, %v798, 0.0
    %804 = vadd.xlane.f32.xlu0 %v803
    %v805 = vpop.xlane.xlu0 %804
    %v806 = vsel %vm262, %v799, 0.0
    %807 = vadd.xlane.f32.xlu0 %v806
    %v808 = vpop.xlane.xlu0 %807
    %v809 = vmul.f32 %v802, %v272
    %v810 = vmul.f32 %v805, %v272
    %v811 = vmul.f32 %v808, %v272
    %v812 = vadd.f32 %v809, 1e-12
    %v813 = vadd.f32 %v810, 1e-12
    %v814 = vadd.f32 %v811, 1e-12
    %v815 = vrsqrt.pop %v812
    %v816 = vmul.f32 %v815, %v812
    %v817 = vmul.f32 %v816, %v815
    %v818 = vmul.f32 0.5, %v817
    %v819 = vsub.f32 1.5, %v818
    %v820 = vmul.f32 %v815, %v819
    %vm821 = vweird.f32 %v812
    %vm822 = vweird.f32 %v815
    %vm823 = vmor %vm821, %vm822
    %v824 = vsel %vm823, %v815, %v820
    %v825 = vrsqrt.pop %v813
    %v826 = vmul.f32 %v825, %v813
    %v827 = vmul.f32 %v826, %v825
    %v828 = vmul.f32 0.5, %v827
    %v829 = vsub.f32 1.5, %v828
    %v830 = vmul.f32 %v825, %v829
    %vm831 = vweird.f32 %v813
    %vm832 = vweird.f32 %v825
    %vm833 = vmor %vm831, %vm832
    %v834 = vsel %vm833, %v825, %v830
    %v835 = vrsqrt.pop %v814
    %v836 = vmul.f32 %v835, %v814
    %v837 = vmul.f32 %v836, %v835
    %v838 = vmul.f32 0.5, %v837
    %v839 = vsub.f32 1.5, %v838
    %v840 = vmul.f32 %v835, %v839
    %vm841 = vweird.f32 %v814
    %vm842 = vweird.f32 %v835
    %vm843 = vmor %vm841, %vm842
    %v844 = vsel %vm843, %v835, %v840
    %v845 = vmul.f32 %v794, %v824
    %v846 = vmul.f32 %v795, %v834
    %v847 = vmul.f32 %v796, %v844
    %v848 = vperm.slane %v780, 0
    %v849 = vmul.f32 %v845, %v848
    %v850 = vmul.f32 %v846, %v848
    %v851 = vmul.f32 %v847, %v848
    %v852 = vperm.slane %v781, 0
    %v853 = vadd.f32 %v849, %v852
    %v854 = vadd.f32 %v850, %v852
    %v855 = vadd.f32 %v851, %v852
    %v856 = vld [vmem:[#allocation4 + $0x158] sm:$0xff]
    %v857 = vld [vmem:[#allocation4 + $0x160] sm:$0xff]
    %v858 = vld [vmem:[#allocation4 + $0x168] sm:$0xff]
    %v859 = vld [vmem:[#allocation4 + $0x170] sm:$0xff]
    %v860 = vld [vmem:[#allocation4 + $0x178] sm:$0x1]
    %v861 = vperm.slane %v860, 0
    %v863 = vsel %vm255, %v853, 0
    %v866 = vsel %vm255, %v854, 0
    %v869 = vsel %vm255, %v855, 0
    %871 = vmatpush.msra.mxu0 0.0
    %872 = vmatpush.msra.mxu0 0.0
    %873 = vmatpush.msra.mxu0 0.0
    %874 = vmatpush.msra.mxu0 0.0
    %875 = vmatpush.msra.mxu0 0.0
    %876 = vmatpush.msra.mxu0 0.0
    %877 = vmatpush.msra.mxu0 0.0
    %878 = vmatpush.msra.mxu0 0.0
    %879 = vmatpush.msra.mxu0 0.0
    %880 = vmatpush.msra.mxu0 0.0
    %881 = vmatpush.msra.mxu0 0.0
    %882 = vmatpush.msra.mxu0 0.0
    %883 = vmatpush.msra.mxu0 %v859
    %884 = vmatpush.msra.mxu0 %v858
    %885 = vmatpush.msra.mxu0 %v857
    %886 = vmatpush.msra.mxu0 %v856
    %887 = vmatmul.f32.gmra.mxu0 %v863
    %v888 = vpop.f32.mrf.mxu0
    %v889 = vadd.f32 %v861, %v888
    %890 = vmatmul.f32.gmra.mxu0 %v866
    %v891 = vpop.f32.mrf.mxu0
    %v892 = vadd.f32 %v861, %v891
    %893 = vmatmul.f32.gmra.mxu0 %v869
    %v894 = vpop.f32.mrf.mxu0
    %v895 = vadd.f32 %v861, %v894
    %896 = vdwg.mxu0
    %v897 = vmul.f32 %v889, %v889
    %v898 = vmul.f32 %v892, %v892
    %v899 = vmul.f32 %v895, %v895
    %v900 = vmul.f32 %v889, %v897
    %v901 = vmul.f32 %v892, %v898
    %v902 = vmul.f32 %v895, %v899
    %v903 = vmul.f32 %v900, 0.044715
    %v904 = vmul.f32 %v901, 0.044715
    %v905 = vmul.f32 %v902, 0.044715
    %v906 = vadd.f32 %v889, %v903
    %v907 = vadd.f32 %v892, %v904
    %v908 = vadd.f32 %v895, %v905
    %v909 = vmul.f32 %v906, 0.7978846
    %v910 = vmul.f32 %v907, 0.7978846
    %v911 = vmul.f32 %v908, 0.7978846
    %v912 = vtanh.pop %v909
    %v913 = vtanh.pop %v910
    %v914 = vtanh.pop %v911
    %v915 = vadd.f32 %v912, 1.0
    %v916 = vadd.f32 %v913, 1.0
    %v917 = vadd.f32 %v914, 1.0
    %v918 = vmul.f32 %v915, 0.5
    %v919 = vmul.f32 %v916, 0.5
    %v920 = vmul.f32 %v917, 0.5
    %v921 = vmul.f32 %v889, %v918
    %v922 = vmul.f32 %v892, %v919
    %v923 = vmul.f32 %v895, %v920
    %v924 = vld [vmem:[#allocation4 + $0x180] sm:$0xff]
    %v925 = vld [vmem:[#allocation4 + $0x188] sm:$0xff]
    %v926 = vld [vmem:[#allocation4 + $0x190] sm:$0xff]
    %v927 = vld [vmem:[#allocation4 + $0x198] sm:$0xff]
    %v928 = vld [vmem:[#allocation4 + $0x1a0] sm:$0xff]
    %v929 = vld [vmem:[#allocation4 + $0x1a8] sm:$0xff]
    %v930 = vld [vmem:[#allocation4 + $0x1b0] sm:$0xff]
    %v931 = vld [vmem:[#allocation4 + $0x1b8] sm:$0xff]
    %v932 = vld [vmem:[#allocation4 + $0x1c0] sm:$0xff]
    %v933 = vld [vmem:[#allocation4 + $0x1c8] sm:$0xff]
    %v934 = vld [vmem:[#allocation4 + $0x1d0] sm:$0xff]
    %v935 = vld [vmem:[#allocation4 + $0x1d8] sm:$0xff]
    %v936 = vld [vmem:[#allocation4 + $0x1e0] sm:$0xff]
    %v937 = vld [vmem:[#allocation4 + $0x1e8] sm:$0xff]
    %v938 = vld [vmem:[#allocation4 + $0x1f0] sm:$0xff]
    %v939 = vld [vmem:[#allocation4 + $0x1f8] sm:$0xff]
    %v940 = vld [vmem:[#allocation4 + $0x200] sm:$0x1]
    %v941 = vperm.slane %v940, 0
    %942 = vmatpush.msra.mxu0 %v939
    %943 = vmatpush.msra.mxu0 %v938
    %944 = vmatpush.msra.mxu0 %v937
    %945 = vmatpush.msra.mxu0 %v936
    %946 = vmatpush.msra.mxu0 %v935
    %947 = vmatpush.msra.mxu0 %v934
    %948 = vmatpush.msra.mxu0 %v933
    %949 = vmatpush.msra.mxu0 %v932
    %950 = vmatpush.msra.mxu0 %v931
    %951 = vmatpush.msra.mxu0 %v930
    %952 = vmatpush.msra.mxu0 %v929
    %953 = vmatpush.msra.mxu0 %v928
    %954 = vmatpush.msra.mxu0 %v927
    %955 = vmatpush.msra.mxu0 %v926
    %956 = vmatpush.msra.mxu0 %v925
    %957 = vmatpush.msra.mxu0 %v924
    %958 = vmatmul.f32.gmra.mxu0 %v921
    %v959 = vpop.f32.mrf.mxu0
    %v960 = vadd.f32 %v941, %v959
    %961 = vmatmul.f32.gmra.mxu0 %v922
    %v962 = vpop.f32.mrf.mxu0
    %v963 = vadd.f32 %v941, %v962
    %964 = vmatmul.f32.gmra.mxu0 %v923
    %v965 = vpop.f32.mrf.mxu0
    %v966 = vadd.f32 %v941, %v965
    %967 = vdwg.mxu0
    %v968 = vadd.f32 %v853, %v960
    %v969 = vadd.f32 %v854, %v963
    %v970 = vadd.f32 %v855, %v966
    %v971 = vld [vmem:[#allocation4 + $0x208] sm:$0x1]
    %v972 = vld [vmem:[#allocation4 + $0x210] sm:$0x1]
    %v973 = vsel %vm255, %v968, 0.0
    %974 = vadd.xlane.f32.xlu0 %v973
    %v975 = vpop.xlane.xlu0 %974
    %v976 = vsel %vm255, %v969, 0.0
    %977 = vadd.xlane.f32.xlu0 %v976
    %v978 = vpop.xlane.xlu0 %977
    %v979 = vsel %vm262, %v970, 0.0
    %980 = vadd.xlane.f32.xlu0 %v979
    %v981 = vpop.xlane.xlu0 %980
    %v982 = vmul.f32 %v975, %v272
    %v983 = vmul.f32 %v978, %v272
    %v984 = vmul.f32 %v981, %v272
    %v985 = vsub.f32 %v968, %v982
    %v986 = vsub.f32 %v969, %v983
    %v987 = vsub.f32 %v970, %v984
    %v988 = vmul.f32 %v985, %v985
    %v989 = vmul.f32 %v986, %v986
    %v990 = vmul.f32 %v987, %v987
    %v991 = vsel %vm255, %v988, 0.0
    %992 = vadd.xlane.f32.xlu0 %v991
    %v993 = vpop.xlane.xlu0 %992
    %v994 = vsel %vm255, %v989, 0.0
    %995 = vadd.xlane.f32.xlu0 %v994
    %v996 = vpop.xlane.xlu0 %995
    %v997 = vsel %vm262, %v990, 0.0
    %998 = vadd.xlane.f32.xlu0 %v997
    %v999 = vpop.xlane.xlu0 %998
    %v1000 = vmul.f32 %v993, %v272
    %v1001 = vmul.f32 %v996, %v272
    %v1002 = vmul.f32 %v999, %v272
    %v1003 = vadd.f32 %v1000, 1e-12
    %v1004 = vadd.f32 %v1001, 1e-12
    %v1005 = vadd.f32 %v1002, 1e-12
    %v1006 = vrsqrt.pop %v1003
    %v1007 = vmul.f32 %v1006, %v1003
    %v1008 = vmul.f32 %v1007, %v1006
    %v1009 = vmul.f32 0.5, %v1008
    %v1010 = vsub.f32 1.5, %v1009
    %v1011 = vmul.f32 %v1006, %v1010
    %vm1012 = vweird.f32 %v1003
    %vm1013 = vweird.f32 %v1006
    %vm1014 = vmor %vm1012, %vm1013
    %v1015 = vsel %vm1014, %v1006, %v1011
    %v1016 = vrsqrt.pop %v1004
    %v1017 = vmul.f32 %v1016, %v1004
    %v1018 = vmul.f32 %v1017, %v1016
    %v1019 = vmul.f32 0.5, %v1018
    %v1020 = vsub.f32 1.5, %v1019
    %v1021 = vmul.f32 %v1016, %v1020
    %vm1022 = vweird.f32 %v1004
    %vm1023 = vweird.f32 %v1016
    %vm1024 = vmor %vm1022, %vm1023
    %v1025 = vsel %vm1024, %v1016, %v1021
    %v1026 = vrsqrt.pop %v1005
    %v1027 = vmul.f32 %v1026, %v1005
    %v1028 = vmul.f32 %v1027, %v1026
    %v1029 = vmul.f32 0.5, %v1028
    %v1030 = vsub.f32 1.5, %v1029
    %v1031 = vmul.f32 %v1026, %v1030
    %vm1032 = vweird.f32 %v1005
    %vm1033 = vweird.f32 %v1026
    %vm1034 = vmor %vm1032, %vm1033
    %v1035 = vsel %vm1034, %v1026, %v1031
    %v1036 = vmul.f32 %v985, %v1015
    %v1037 = vmul.f32 %v986, %v1025
    %v1038 = vmul.f32 %v987, %v1035
    %v1039 = vperm.slane %v971, 0
    %v1040 = vmul.f32 %v1036, %v1039
    %v1041 = vmul.f32 %v1037, %v1039
    %v1042 = vmul.f32 %v1038, %v1039
    %v1043 = vperm.slane %v972, 0
    %v1044 = vadd.f32 %v1040, %v1043
    %v1045 = vadd.f32 %v1041, %v1043
    %v1046 = vadd.f32 %v1042, %v1043
    %v1047 = vld [vmem:[#allocation4 + $0x218] sm:$0xff]
    %v1048 = vld [vmem:[#allocation4 + $0x220] sm:$0xff]
    %v1049 = vld [vmem:[#allocation4 + $0x228] sm:$0xff]
    %v1050 = vld [vmem:[#allocation4 + $0x230] sm:$0xff]
    %v1051 = vld [vmem:[#allocation4 + $0x238] sm:$0x1]
    %v1052 = vperm.slane %v1051, 0
    %v1054 = vsel %vm255, %v1044, 0
    %v1057 = vsel %vm255, %v1045, 0
    %v1060 = vsel %vm255, %v1046, 0
    %1062 = vmatpush.msra.mxu0 0.0
    %1063 = vmatpush.msra.mxu0 0.0
    %1064 = vmatpush.msra.mxu0 0.0
    %1065 = vmatpush.msra.mxu0 0.0
    %1066 = vmatpush.msra.mxu0 0.0
    %1067 = vmatpush.msra.mxu0 0.0
    %1068 = vmatpush.msra.mxu0 0.0
    %1069 = vmatpush.msra.mxu0 0.0
    %1070 = vmatpush.msra.mxu0 0.0
    %1071 = vmatpush.msra.mxu0 0.0
    %1072 = vmatpush.msra.mxu0 0.0
    %1073 = vmatpush.msra.mxu0 0.0
    %1074 = vmatpush.msra.mxu0 %v1050
    %1075 = vmatpush.msra.mxu0 %v1049
    %1076 = vmatpush.msra.mxu0 %v1048
    %1077 = vmatpush.msra.mxu0 %v1047
    %1078 = vmatmul.f32.gmra.mxu0 %v1054
    %v1079 = vpop.f32.mrf.mxu0
    %v1080 = vadd.f32 %v1052, %v1079
    %1081 = vmatmul.f32.gmra.mxu0 %v1057
    %v1082 = vpop.f32.mrf.mxu0
    %v1083 = vadd.f32 %v1052, %v1082
    %1084 = vmatmul.f32.gmra.mxu0 %v1060
    %v1085 = vpop.f32.mrf.mxu0
    %v1086 = vadd.f32 %v1052, %v1085
    %1087 = vdwg.mxu0
    %v1088 = vld [vmem:[#allocation4 + $0x240] sm:$0xff]
    %v1089 = vld [vmem:[#allocation4 + $0x248] sm:$0xff]
    %v1090 = vld [vmem:[#allocation4 + $0x250] sm:$0xff]
    %v1091 = vld [vmem:[#allocation4 + $0x258] sm:$0xff]
    %v1092 = vld [vmem:[#allocation4 + $0x260] sm:$0x1]
    %v1093 = vperm.slane %v1092, 0
    %1094 = vmatpush.msra.mxu0 0.0
    %1095 = vmatpush.msra.mxu0 0.0
    %1096 = vmatpush.msra.mxu0 0.0
    %1097 = vmatpush.msra.mxu0 0.0
    %1098 = vmatpush.msra.mxu0 0.0
    %1099 = vmatpush.msra.mxu0 0.0
    %1100 = vmatpush.msra.mxu0 0.0
    %1101 = vmatpush.msra.mxu0 0.0
    %1102 = vmatpush.msra.mxu0 0.0
    %1103 = vmatpush.msra.mxu0 0.0
    %1104 = vmatpush.msra.mxu0 0.0
    %1105 = vmatpush.msra.mxu0 0.0
    %1106 = vmatpush.msra.mxu0 %v1091
    %1107 = vmatpush.msra.mxu0 %v1090
    %1108 = vmatpush.msra.mxu0 %v1089
    %1109 = vmatpush.msra.mxu0 %v1088
    %1110 = vmatmul.f32.gmra.mxu0 %v1054
    %v1111 = vpop.f32.mrf.mxu0
    %v1112 = vadd.f32 %v1093, %v1111
    %1113 = vmatmul.f32.gmra.mxu0 %v1057
    %v1114 = vpop.f32.mrf.mxu0
    %v1115 = vadd.f32 %v1093, %v1114
    %1116 = vmatmul.f32.gmra.mxu0 %v1060
    %v1117 = vpop.f32.mrf.mxu0
    %v1118 = vadd.f32 %v1093, %v1117
    %1119 = vdwg.mxu0
    %v1120 = vld [vmem:[#allocation4 + $0x268] sm:$0xff]
    %v1121 = vld [vmem:[#allocation4 + $0x270] sm:$0xff]
    %v1122 = vld [vmem:[#allocation4 + $0x278] sm:$0xff]
    %v1123 = vld [vmem:[#allocation4 + $0x280] sm:$0xff]
    %v1124 = vld [vmem:[#allocation4 + $0x288] sm:$0x1]
    %v1125 = vperm.slane %v1124, 0
    %1126 = vmatpush.msra.mxu0 0.0
    %1127 = vmatpush.msra.mxu0 0.0
    %1128 = vmatpush.msra.mxu0 0.0
    %1129 = vmatpush.msra.mxu0 0.0
    %1130 = vmatpush.msra.mxu0 0.0
    %1131 = vmatpush.msra.mxu0 0.0
    %1132 = vmatpush.msra.mxu0 0.0
    %1133 = vmatpush.msra.mxu0 0.0
    %1134 = vmatpush.msra.mxu0 0.0
    %1135 = vmatpush.msra.mxu0 0.0
    %1136 = vmatpush.msra.mxu0 0.0
    %1137 = vmatpush.msra.mxu0 0.0
    %1138 = vmatpush.msra.mxu0 %v1123
    %1139 = vmatpush.msra.mxu0 %v1122
    %1140 = vmatpush.msra.mxu0 %v1121
    %1141 = vmatpush.msra.mxu0 %v1120
    %1142 = vmatmul.f32.gmra.mxu0 %v1054
    %v1143 = vpop.f32.mrf.mxu0
    %v1144 = vadd.f32 %v1125, %v1143
    %1145 = vmatmul.f32.gmra.mxu0 %v1057
    %v1146 = vpop.f32.mrf.mxu0
    %v1147 = vadd.f32 %v1125, %v1146
    %1148 = vmatmul.f32.gmra.mxu0 %v1060
    %v1149 = vpop.f32.mrf.mxu0
    %v1150 = vadd.f32 %v1125, %v1149
    %1151 = vdwg.mxu0
    %v1152 = vmul.f32 %v1080, %v342
    %v1153 = vmul.f32 %v1083, %v342
    %v1154 = vmul.f32 %v1086, %v342
    %v1156 = vsel %vm255, %v1152, 0
    %v1159 = vsel %vm255, %v1153, 0
    %v1162 = vsel %vm255, %v1154, 0
    %v1165 = vsel %vm255, %v1112, 0
    %v1168 = vsel %vm255, %v1115, 0
    %v1171 = vsel %vm255, %v1118, 0
    %1173 = vmatpush.xpose.msra.mxu0 0.0
    %1174 = vmatpush.xpose.msra.mxu0 0.0
    %1175 = vmatpush.xpose.msra.mxu0 0.0
    %1176 = vmatpush.xpose.msra.mxu0 0.0
    %1177 = vmatpush.xpose.msra.mxu0 0.0
    %1178 = vmatpush.xpose.msra.mxu0 0.0
    %1179 = vmatpush.xpose.msra.mxu0 0.0
    %1180 = vmatpush.xpose.msra.mxu0 0.0
    %1181 = vmatpush.xpose.msra.mxu0 0.0
    %1182 = vmatpush.xpose.msra.mxu0 0.0
    %1183 = vmatpush.xpose.msra.mxu0 0.0
    %1184 = vmatpush.xpose.msra.mxu0 0.0
    %1185 = vmatpush.xpose.msra.mxu0 0.0
    %1186 = vmatpush.xpose.msra.mxu0 %v1171
    %1187 = vmatpush.xpose.msra.mxu0 %v1168
    %1188 = vmatpush.xpose.msra.mxu0 %v1165
    %1189 = vmatmul.f32.gmra.mxu0 %v1156
    %v1190 = vpop.f32.mrf.mxu0
    %v1191 = vadd.f32 0.0, %v1190
    %1192 = vmatmul.f32.gmra.mxu0 %v1159
    %v1193 = vpop.f32.mrf.mxu0
    %v1194 = vadd.f32 0.0, %v1193
    %1195 = vmatmul.f32.gmra.mxu0 %v1162
    %v1196 = vpop.f32.mrf.mxu0
    %v1197 = vadd.f32 0.0, %v1196
    %1198 = vdwg.mxu0
    %v1199 = vmul.f32 %v1191, 0.25
    %v1200 = vmul.f32 %v1194, 0.25
    %v1201 = vmul.f32 %v1197, 0.25
    %v1202 = vadd.f32 %v1199, %v380
    %v1203 = vadd.f32 %v1200, %v381
    %v1204 = vadd.f32 %v1201, %v382
    %v1205 = vsel %vm541, %v1202, -inf
    %1206 = vmax.xlane.f32.xlu0 %v1205
    %v1207 = vpop.xlane.xlu0 %1206
    %v1208 = vsel %vm541, %v1203, -inf
    %1209 = vmax.xlane.f32.xlu0 %v1208
    %v1210 = vpop.xlane.xlu0 %1209
    %v1211 = vsel %vm548, %v1204, -inf
    %1212 = vmax.xlane.f32.xlu0 %v1211
    %v1213 = vpop.xlane.xlu0 %1212
    %v1214 = vsub.f32 %v1202, %v1207
    %v1215 = vsub.f32 %v1203, %v1210
    %v1216 = vsub.f32 %v1204, %v1213
    %v1217 = vmul.f32 %v1214, 1.442695
    %v1218 = vpow.pop %v1217
    %v1219 = vmul.f32 %v1215, 1.442695
    %v1220 = vpow.pop %v1219
    %v1221 = vmul.f32 %v1216, 1.442695
    %v1222 = vpow.pop %v1221
    %v1223 = vsel %vm541, %v1218, 0.0
    %1224 = vadd.xlane.f32.xlu0 %v1223
    %v1225 = vpop.xlane.xlu0 %1224
    %v1226 = vsel %vm541, %v1220, 0.0
    %1227 = vadd.xlane.f32.xlu0 %v1226
    %v1228 = vpop.xlane.xlu0 %1227
    %v1229 = vsel %vm548, %v1222, 0.0
    %1230 = vadd.xlane.f32.xlu0 %v1229
    %v1231 = vpop.xlane.xlu0 %1230
    %v1232 = vrcp.pop %v1225
    %v1233 = vrcp.pop %v1228
    %v1234 = vrcp.pop %v1231
    %v1235 = vmul.f32 %v1218, %v1232
    %v1236 = vmul.f32 %v1220, %v1233
    %v1237 = vmul.f32 %v1222, %v1234
    %v1238 = vmul.f32 %v1144, %v342
    %v1239 = vmul.f32 %v1147, %v342
    %v1240 = vmul.f32 %v1150, %v342
    %v1241 = vmul.f32 %v1080, %v347
    %v1242 = vmul.f32 %v1083, %v347
    %v1243 = vmul.f32 %v1086, %v347
    %v1245 = vsel %vm255, %v1241, 0
    %v1248 = vsel %vm255, %v1242, 0
    %v1251 = vsel %vm255, %v1243, 0
    %1253 = vmatpush.xpose.msra.mxu0 0.0
    %1254 = vmatpush.xpose.msra.mxu0 0.0
    %1255 = vmatpush.xpose.msra.mxu0 0.0
    %1256 = vmatpush.xpose.msra.mxu0 0.0
    %1257 = vmatpush.xpose.msra.mxu0 0.0
    %1258 = vmatpush.xpose.msra.mxu0 0.0
    %1259 = vmatpush.xpose.msra.mxu0 0.0
    %1260 = vmatpush.xpose.msra.mxu0 0.0
    %1261 = vmatpush.xpose.msra.mxu0 0.0
    %1262 = vmatpush.xpose.msra.mxu0 0.0
    %1263 = vmatpush.xpose.msra.mxu0 0.0
    %1264 = vmatpush.xpose.msra.mxu0 0.0
    %1265 = vmatpush.xpose.msra.mxu0 0.0
    %1266 = vmatpush.xpose.msra.mxu0 %v1171
    %1267 = vmatpush.xpose.msra.mxu0 %v1168
    %1268 = vmatpush.xpose.msra.mxu0 %v1165
    %1269 = vmatmul.f32.gmra.mxu0 %v1245
    %v1270 = vpop.f32.mrf.mxu0
    %v1271 = vadd.f32 0.0, %v1270
    %1272 = vmatmul.f32.gmra.mxu0 %v1248
    %v1273 = vpop.f32.mrf.mxu0
    %v1274 = vadd.f32 0.0, %v1273
    %1275 = vmatmul.f32.gmra.mxu0 %v1251
    %v1276 = vpop.f32.mrf.mxu0
    %v1277 = vadd.f32 0.0, %v1276
    %1278 = vdwg.mxu0
    %v1279 = vmul.f32 %v1271, 0.25
    %v1280 = vmul.f32 %v1274, 0.25
    %v1281 = vmul.f32 %v1277, 0.25
    %v1282 = vadd.f32 %v1279, %v380
    %v1283 = vadd.f32 %v1280, %v381
    %v1284 = vadd.f32 %v1281, %v382
    %v1285 = vsel %vm541, %v1282, -inf
    %1286 = vmax.xlane.f32.xlu0 %v1285
    %v1287 = vpop.xlane.xlu0 %1286
    %v1288 = vsel %vm541, %v1283, -inf
    %1289 = vmax.xlane.f32.xlu0 %v1288
    %v1290 = vpop.xlane.xlu0 %1289
    %v1291 = vsel %vm548, %v1284, -inf
    %1292 = vmax.xlane.f32.xlu0 %v1291
    %v1293 = vpop.xlane.xlu0 %1292
    %v1294 = vsub.f32 %v1282, %v1287
    %v1295 = vsub.f32 %v1283, %v1290
    %v1296 = vsub.f32 %v1284, %v1293
    %v1297 = vmul.f32 %v1294, 1.442695
    %v1298 = vpow.pop %v1297
    %v1299 = vmul.f32 %v1295, 1.442695
    %v1300 = vpow.pop %v1299
    %v1301 = vmul.f32 %v1296, 1.442695
    %v1302 = vpow.pop %v1301
    %v1303 = vsel %vm541, %v1298, 0.0
    %1304 = vadd.xlane.f32.xlu0 %v1303
    %v1305 = vpop.xlane.xlu0 %1304
    %v1306 = vsel %vm541, %v1300, 0.0
    %1307 = vadd.xlane.f32.xlu0 %v1306
    %v1308 = vpop.xlane.xlu0 %1307
    %v1309 = vsel %vm548, %v1302, 0.0
    %1310 = vadd.xlane.f32.xlu0 %v1309
    %v1311 = vpop.xlane.xlu0 %1310
    %v1312 = vrcp.pop %v1305
    %v1313 = vrcp.pop %v1308
    %v1314 = vrcp.pop %v1311
    %v1315 = vmul.f32 %v1298, %v1312
    %v1316 = vmul.f32 %v1300, %v1313
    %v1317 = vmul.f32 %v1302, %v1314
    %v1318 = vmul.f32 %v1144, %v347
    %v1319 = vmul.f32 %v1147, %v347
    %v1320 = vmul.f32 %v1150, %v347
    %v1322 = vsel %vm541, %v1315, 0
    %v1325 = vsel %vm541, %v1316, 0
    %v1328 = vsel %vm541, %v1317, 0
    %v1331 = vsel %vm668, %v1320, 0
    %1333 = vmatpush.msra.mxu0 0.0
    %1334 = vmatpush.msra.mxu0 0.0
    %1335 = vmatpush.msra.mxu0 0.0
    %1336 = vmatpush.msra.mxu0 0.0
    %1337 = vmatpush.msra.mxu0 0.0
    %1338 = vmatpush.msra.mxu0 0.0
    %1339 = vmatpush.msra.mxu0 0.0
    %1340 = vmatpush.msra.mxu0 0.0
    %1341 = vmatpush.msra.mxu0 0.0
    %1342 = vmatpush.msra.mxu0 0.0
    %1343 = vmatpush.msra.mxu0 0.0
    %1344 = vmatpush.msra.mxu0 0.0
    %1345 = vmatpush.msra.mxu0 0.0
    %1346 = vmatpush.msra.mxu0 %v1331
    %1347 = vmatpush.msra.mxu0 %v1319
    %1348 = vmatpush.msra.mxu0 %v1318
    %1349 = vmatmul.f32.gmra.mxu0 %v1322
    %v1350 = vpop.f32.mrf.mxu0
    %v1351 = vadd.f32 0.0, %v1350
    %1352 = vmatmul.f32.gmra.mxu0 %v1325
    %v1353 = vpop.f32.mrf.mxu0
    %v1354 = vadd.f32 0.0, %v1353
    %1355 = vmatmul.f32.gmra.mxu0 %v1328
    %v1356 = vpop.f32.mrf.mxu0
    %v1357 = vadd.f32 0.0, %v1356
    %1358 = vdwg.mxu0
    %v1360 = vsel %vm541, %v1235, 0
    %v1363 = vsel %vm541, %v1236, 0
    %v1366 = vsel %vm541, %v1237, 0
    %v1369 = vsel %vm668, %v1240, 0
    %1371 = vmatpush.msra.mxu0 0.0
    %1372 = vmatpush.msra.mxu0 0.0
    %1373 = vmatpush.msra.mxu0 0.0
    %1374 = vmatpush.msra.mxu0 0.0
    %1375 = vmatpush.msra.mxu0 0.0
    %1376 = vmatpush.msra.mxu0 0.0
    %1377 = vmatpush.msra.mxu0 0.0
    %1378 = vmatpush.msra.mxu0 0.0
    %1379 = vmatpush.msra.mxu0 0.0
    %1380 = vmatpush.msra.mxu0 0.0
    %1381 = vmatpush.msra.mxu0 0.0
    %1382 = vmatpush.msra.mxu0 0.0
    %1383 = vmatpush.msra.mxu0 0.0
    %1384 = vmatpush.msra.mxu0 %v1369
    %1385 = vmatpush.msra.mxu0 %v1239
    %1386 = vmatpush.msra.mxu0 %v1238
    %1387 = vmatmul.f32.gmra.mxu0 %v1360
    %v1388 = vpop.f32.mrf.mxu0
    %v1389 = vadd.f32 %v1351, %v1388
    %1390 = vmatmul.f32.gmra.mxu0 %v1363
    %v1391 = vpop.f32.mrf.mxu0
    %v1392 = vadd.f32 %v1354, %v1391
    %1393 = vmatmul.f32.gmra.mxu0 %v1366
    %v1394 = vpop.f32.mrf.mxu0
    %v1395 = vadd.f32 %v1357, %v1394
    %1396 = vdwg.mxu0
    %v1397 = vld [vmem:[#allocation4 + $0x290] sm:$0xff]
    %v1398 = vld [vmem:[#allocation4 + $0x298] sm:$0xff]
    %v1399 = vld [vmem:[#allocation4 + $0x2a0] sm:$0xff]
    %v1400 = vld [vmem:[#allocation4 + $0x2a8] sm:$0xff]
    %v1401 = vld [vmem:[#allocation4 + $0x2b0] sm:$0x1]
    %v1402 = vperm.slane %v1401, 0
    %v1404 = vsel %vm255, %v1389, 0
    %v1407 = vsel %vm255, %v1392, 0
    %v1410 = vsel %vm255, %v1395, 0
    %1412 = vmatpush.msra.mxu0 0.0
    %1413 = vmatpush.msra.mxu0 0.0
    %1414 = vmatpush.msra.mxu0 0.0
    %1415 = vmatpush.msra.mxu0 0.0
    %1416 = vmatpush.msra.mxu0 0.0
    %1417 = vmatpush.msra.mxu0 0.0
    %1418 = vmatpush.msra.mxu0 0.0
    %1419 = vmatpush.msra.mxu0 0.0
    %1420 = vmatpush.msra.mxu0 0.0
    %1421 = vmatpush.msra.mxu0 0.0
    %1422 = vmatpush.msra.mxu0 0.0
    %1423 = vmatpush.msra.mxu0 0.0
    %1424 = vmatpush.msra.mxu0 %v1400
    %1425 = vmatpush.msra.mxu0 %v1399
    %1426 = vmatpush.msra.mxu0 %v1398
    %1427 = vmatpush.msra.mxu0 %v1397
    %1428 = vmatmul.f32.gmra.mxu0 %v1404
    %v1429 = vpop.f32.mrf.mxu0
    %v1430 = vadd.f32 %v1402, %v1429
    %1431 = vmatmul.f32.gmra.mxu0 %v1407
    %v1432 = vpop.f32.mrf.mxu0
    %v1433 = vadd.f32 %v1402, %v1432
    %1434 = vmatmul.f32.gmra.mxu0 %v1410
    %v1435 = vpop.f32.mrf.mxu0
    %v1436 = vadd.f32 %v1402, %v1435
    %1437 = vdwg.mxu0
    %v1438 = vadd.f32 %v1044, %v1430
    %v1439 = vadd.f32 %v1045, %v1433
    %v1440 = vadd.f32 %v1046, %v1436
    %v1441 = vld [vmem:[#allocation4 + $0x2b8] sm:$0x1]
    %v1442 = vld [vmem:[#allocation4 + $0x2c0] sm:$0x1]
    %v1443 = vsel %vm255, %v1438, 0.0
    %1444 = vadd.xlane.f32.xlu0 %v1443
    %v1445 = vpop.xlane.xlu0 %1444
    %v1446 = vsel %vm255, %v1439, 0.0
    %1447 = vadd.xlane.f32.xlu0 %v1446
    %v1448 = vpop.xlane.xlu0 %1447
    %v1449 = vsel %vm262, %v1440, 0.0
    %1450 = vadd.xlane.f32.xlu0 %v1449
    %v1451 = vpop.xlane.xlu0 %1450
    %v1452 = vmul.f32 %v1445, %v272
    %v1453 = vmul.f32 %v1448, %v272
    %v1454 = vmul.f32 %v1451, %v272
    %v1455 = vsub.f32 %v1438, %v1452
    %v1456 = vsub.f32 %v1439, %v1453
    %v1457 = vsub.f32 %v1440, %v1454
    %v1458 = vmul.f32 %v1455, %v1455
    %v1459 = vmul.f32 %v1456, %v1456
    %v1460 = vmul.f32 %v1457, %v1457
    %v1461 = vsel %vm255, %v1458, 0.0
    %1462 = vadd.xlane.f32.xlu0 %v1461
    %v1463 = vpop.xlane.xlu0 %1462
    %v1464 = vsel %vm255, %v1459, 0.0
    %1465 = vadd.xlane.f32.xlu0 %v1464
    %v1466 = vpop.xlane.xlu0 %1465
    %v1467 = vsel %vm262, %v1460, 0.0
    %1468 = vadd.xlane.f32.xlu0 %v1467
    %v1469 = vpop.xlane.xlu0 %1468
    %v1470 = vmul.f32 %v1463, %v272
    %v1471 = vmul.f32 %v1466, %v272
    %v1472 = vmul.f32 %v1469, %v272
    %v1473 = vadd.f32 %v1470, 1e-12
    %v1474 = vadd.f32 %v1471, 1e-12
    %v1475 = vadd.f32 %v1472, 1e-12
    %v1476 = vrsqrt.pop %v1473
    %v1477 = vmul.f32 %v1476, %v1473
    %v1478 = vmul.f32 %v1477, %v1476
    %v1479 = vmul.f32 0.5, %v1478
    %v1480 = vsub.f32 1.5, %v1479
    %v1481 = vmul.f32 %v1476, %v1480
    %vm1482 = vweird.f32 %v1473
    %vm1483 = vweird.f32 %v1476
    %vm1484 = vmor %vm1482, %vm1483
    %v1485 = vsel %vm1484, %v1476, %v1481
    %v1486 = vrsqrt.pop %v1474
    %v1487 = vmul.f32 %v1486, %v1474
    %v1488 = vmul.f32 %v1487, %v1486
    %v1489 = vmul.f32 0.5, %v1488
    %v1490 = vsub.f32 1.5, %v1489
    %v1491 = vmul.f32 %v1486, %v1490
    %vm1492 = vweird.f32 %v1474
    %vm1493 = vweird.f32 %v1486
    %vm1494 = vmor %vm1492, %vm1493
    %v1495 = vsel %vm1494, %v1486, %v1491
    %v1496 = vrsqrt.pop %v1475
    %v1497 = vmul.f32 %v1496, %v1475
    %v1498 = vmul.f32 %v1497, %v1496
    %v1499 = vmul.f32 0.5, %v1498
    %v1500 = vsub.f32 1.5, %v1499
    %v1501 = vmul.f32 %v1496, %v1500
    %vm1502 = vweird.f32 %v1475
    %vm1503 = vweird.f32 %v1496
    %vm1504 = vmor %vm1502, %vm1503
    %v1505 = vsel %vm1504, %v1496, %v1501
    %v1506 = vmul.f32 %v1455, %v1485
    %v1507 = vmul.f32 %v1456, %v1495
    %v1508 = vmul.f32 %v1457, %v1505
    %v1509 = vperm.slane %v1441, 0
    %v1510 = vmul.f32 %v1506, %v1509
    %v1511 = vmul.f32 %v1507, %v1509
    %v1512 = vmul.f32 %v1508, %v1509
    %v1513 = vperm.slane %v1442, 0
    %v1514 = vadd.f32 %v1510, %v1513
    %v1515 = vadd.f32 %v1511, %v1513
    %v1516 = vadd.f32 %v1512, %v1513
    %v1517 = vld [vmem:[#allocation4 + $0x2c8] sm:$0xff]
    %v1518 = vld [vmem:[#allocation4 + $0x2d0] sm:$0xff]
    %v1519 = vld [vmem:[#allocation4 + $0x2d8] sm:$0xff]
    %v1520 = vld [vmem:[#allocation4 + $0x2e0] sm:$0xff]
    %v1521 = vld [vmem:[#allocation4 + $0x2e8] sm:$0x1]
    %v1522 = vperm.slane %v1521, 0
    %v1524 = vsel %vm255, %v1514, 0
    %v1527 = vsel %vm255, %v1515, 0
    %v1530 = vsel %vm255, %v1516, 0
    %1532 = vmatpush.msra.mxu0 0.0
    %1533 = vmatpush.msra.mxu0 0.0
    %1534 = vmatpush.msra.mxu0 0.0
    %1535 = vmatpush.msra.mxu0 0.0
    %1536 = vmatpush.msra.mxu0 0.0
    %1537 = vmatpush.msra.mxu0 0.0
    %1538 = vmatpush.msra.mxu0 0.0
    %1539 = vmatpush.msra.mxu0 0.0
    %1540 = vmatpush.msra.mxu0 0.0
    %1541 = vmatpush.msra.mxu0 0.0
    %1542 = vmatpush.msra.mxu0 0.0
    %1543 = vmatpush.msra.mxu0 0.0
    %1544 = vmatpush.msra.mxu0 %v1520
    %1545 = vmatpush.msra.mxu0 %v1519
    %1546 = vmatpush.msra.mxu0 %v1518
    %1547 = vmatpush.msra.mxu0 %v1517
    %1548 = vmatmul.f32.gmra.mxu0 %v1524
    %v1549 = vpop.f32.mrf.mxu0
    %v1550 = vadd.f32 %v1522, %v1549
    %1551 = vmatmul.f32.gmra.mxu0 %v1527
    %v1552 = vpop.f32.mrf.mxu0
    %v1553 = vadd.f32 %v1522, %v1552
    %1554 = vmatmul.f32.gmra.mxu0 %v1530
    %v1555 = vpop.f32.mrf.mxu0
    %v1556 = vadd.f32 %v1522, %v1555
    %1557 = vdwg.mxu0
    %v1558 = vmul.f32 %v1550, %v1550
    %v1559 = vmul.f32 %v1553, %v1553
    %v1560 = vmul.f32 %v1556, %v1556
    %v1561 = vmul.f32 %v1550, %v1558
    %v1562 = vmul.f32 %v1553, %v1559
    %v1563 = vmul.f32 %v1556, %v1560
    %v1564 = vmul.f32 %v1561, 0.044715
    %v1565 = vmul.f32 %v1562, 0.044715
    %v1566 = vmul.f32 %v1563, 0.044715
    %v1567 = vadd.f32 %v1550, %v1564
    %v1568 = vadd.f32 %v1553, %v1565
    %v1569 = vadd.f32 %v1556, %v1566
    %v1570 = vmul.f32 %v1567, 0.7978846
    %v1571 = vmul.f32 %v1568, 0.7978846
    %v1572 = vmul.f32 %v1569, 0.7978846
    %v1573 = vtanh.pop %v1570
    %v1574 = vtanh.pop %v1571
    %v1575 = vtanh.pop %v1572
    %v1576 = vadd.f32 %v1573, 1.0
    %v1577 = vadd.f32 %v1574, 1.0
    %v1578 = vadd.f32 %v1575, 1.0
    %v1579 = vmul.f32 %v1576, 0.5
    %v1580 = vmul.f32 %v1577, 0.5
    %v1581 = vmul.f32 %v1578, 0.5
    %v1582 = vmul.f32 %v1550, %v1579
    %v1583 = vmul.f32 %v1553, %v1580
    %v1584 = vmul.f32 %v1556, %v1581
    %v1585 = vld [vmem:[#allocation4 + $0x2f0] sm:$0xff]
    %v1586 = vld [vmem:[#allocation4 + $0x2f8] sm:$0xff]
    %v1587 = vld [vmem:[#allocation4 + $0x300] sm:$0xff]
    %v1588 = vld [vmem:[#allocation4 + $0x308] sm:$0xff]
    %v1589 = vld [vmem:[#allocation4 + $0x310] sm:$0xff]
    %v1590 = vld [vmem:[#allocation4 + $0x318] sm:$0xff]
    %v1591 = vld [vmem:[#allocation4 + $0x320] sm:$0xff]
    %v1592 = vld [vmem:[#allocation4 + $0x328] sm:$0xff]
    %v1593 = vld [vmem:[#allocation4 + $0x330] sm:$0xff]
    %v1594 = vld [vmem:[#allocation4 + $0x338] sm:$0xff]
    %v1595 = vld [vmem:[#allocation4 + $0x340] sm:$0xff]
    %v1596 = vld [vmem:[#allocation4 + $0x348] sm:$0xff]
    %v1597 = vld [vmem:[#allocation4 + $0x350] sm:$0xff]
    %v1598 = vld [vmem:[#allocation4 + $0x358] sm:$0xff]
    %v1599 = vld [vmem:[#allocation4 + $0x360] sm:$0xff]
    %v1600 = vld [vmem:[#allocation4 + $0x368] sm:$0xff]
    %v1601 = vld [vmem:[#allocation4 + $0x370] sm:$0x1]
    %v1602 = vperm.slane %v1601, 0
    %1603 = vmatpush.msra.mxu0 %v1600
    %1604 = vmatpush.msra.mxu0 %v1599
    %1605 = vmatpush.msra.mxu0 %v1598
    %1606 = vmatpush.msra.mxu0 %v1597
    %1607 = vmatpush.msra.mxu0 %v1596
    %1608 = vmatpush.msra.mxu0 %v1595
    %1609 = vmatpush.msra.mxu0 %v1594
    %1610 = vmatpush.msra.mxu0 %v1593
    %1611 = vmatpush.msra.mxu0 %v1592
    %1612 = vmatpush.msra.mxu0 %v1591
    %1613 = vmatpush.msra.mxu0 %v1590
    %1614 = vmatpush.msra.mxu0 %v1589
    %1615 = vmatpush.msra.mxu0 %v1588
    %1616 = vmatpush.msra.mxu0 %v1587
    %1617 = vmatpush.msra.mxu0 %v1586
    %1618 = vmatpush.msra.mxu0 %v1585
    %1619 = vmatmul.f32.gmra.mxu0 %v1582
    %v1620 = vpop.f32.mrf.mxu0
    %v1621 = vadd.f32 %v1602, %v1620
    %1622 = vmatmul.f32.gmra.mxu0 %v1583
    %v1623 = vpop.f32.mrf.mxu0
    %v1624 = vadd.f32 %v1602, %v1623
    %1625 = vmatmul.f32.gmra.mxu0 %v1584
    %v1626 = vpop.f32.mrf.mxu0
    %v1627 = vadd.f32 %v1602, %v1626
    %1628 = vdwg.mxu0
    %v1629 = vadd.f32 %v1514, %v1621
    %v1630 = vadd.f32 %v1515, %v1624
    %v1631 = vadd.f32 %v1516, %v1627
    %v1632 = vld [vmem:[#allocation4 + $0x378] sm:$0x1]
    %v1633 = vld [vmem:[#allocation4 + $0x380] sm:$0x1]
    %v1634 = vsel %vm255, %v1629, 0.0
    %1635 = vadd.xlane.f32.xlu0 %v1634
    %v1636 = vpop.xlane.xlu0 %1635
    %v1637 = vsel %vm255, %v1630, 0.0
    %1638 = vadd.xlane.f32.xlu0 %v1637
    %v1639 = vpop.xlane.xlu0 %1638
    %v1640 = vsel %vm262, %v1631, 0.0
    %1641 = vadd.xlane.f32.xlu0 %v1640
    %v1642 = vpop.xlane.xlu0 %1641
    %v1643 = vmul.f32 %v1636, %v272
    %v1644 = vmul.f32 %v1639, %v272
    %v1645 = vmul.f32 %v1642, %v272
    %v1646 = vsub.f32 %v1629, %v1643
    %v1647 = vsub.f32 %v1630, %v1644
    %v1648 = vsub.f32 %v1631, %v1645
    %v1649 = vmul.f32 %v1646, %v1646
    %v1650 = vmul.f32 %v1647, %v1647
    %v1651 = vmul.f32 %v1648, %v1648
    %v1652 = vsel %vm255, %v1649, 0.0
    %1653 = vadd.xlane.f32.xlu0 %v1652
    %v1654 = vpop.xlane.xlu0 %1653
    %v1655 = vsel %vm255, %v1650, 0.0
    %1656 = vadd.xlane.f32.xlu0 %v1655
    %v1657 = vpop.xlane.xlu0 %1656
    %v1658 = vsel %vm262, %v1651, 0.0
    %1659 = vadd.xlane.f32.xlu0 %v1658
    %v1660 = vpop.xlane.xlu0 %1659
    %v1661 = vmul.f32 %v1654, %v272
    %v1662 = vmul.f32 %v1657, %v272
    %v1663 = vmul.f32 %v1660, %v272
    %v1664 = vadd.f32 %v1661, 1e-12
    %v1665 = vadd.f32 %v1662, 1e-12
    %v1666 = vadd.f32 %v1663, 1e-12
    %v1667 = vrsqrt.pop %v1664
    %v1668 = vmul.f32 %v1667, %v1664
    %v1669 = vmul.f32 %v1668, %v1667
    %v1670 = vmul.f32 0.5, %v1669
    %v1671 = vsub.f32 1.5, %v1670
    %v1672 = vmul.f32 %v1667, %v1671
    %vm1673 = vweird.f32 %v1664
    %vm1674 = vweird.f32 %v1667
    %vm1675 = vmor %vm1673, %vm1674
    %v1676 = vsel %vm1675, %v1667, %v1672
    %v1677 = vrsqrt.pop %v1665
    %v1678 = vmul.f32 %v1677, %v1665
    %v1679 = vmul.f32 %v1678, %v1677
    %v1680 = vmul.f32 0.5, %v1679
    %v1681 = vsub.f32 1.5, %v1680
    %v1682 = vmul.f32 %v1677, %v1681
    %vm1683 = vweird.f32 %v1665
    %vm1684 = vweird.f32 %v1677
    %vm1685 = vmor %vm1683, %vm1684
    %v1686 = vsel %vm1685, %v1677, %v1682
    %v1687 = vrsqrt.pop %v1666
    %v1688 = vmul.f32 %v1687, %v1666
    %v1689 = vmul.f32 %v1688, %v1687
    %v1690 = vmul.f32 0.5, %v1689
    %v1691 = vsub.f32 1.5, %v1690
    %v1692 = vmul.f32 %v1687, %v1691
    %vm1693 = vweird.f32 %v1666
    %vm1694 = vweird.f32 %v1687
    %vm1695 = vmor %vm1693, %vm1694
    %v1696 = vsel %vm1695, %v1687, %v1692
    %v1697 = vmul.f32 %v1646, %v1676
    %v1698 = vmul.f32 %v1647, %v1686
    %v1699 = vmul.f32 %v1648, %v1696
    %v1700 = vperm.slane %v1632, 0
    %v1701 = vmul.f32 %v1697, %v1700
    %v1702 = vmul.f32 %v1698, %v1700
    %v1703 = vmul.f32 %v1699, %v1700
    %v1704 = vperm.slane %v1633, 0
    %v1705 = vadd.f32 %v1701, %v1704
    %v1706 = vadd.f32 %v1702, %v1704
    %v1707 = vadd.f32 %v1703, %v1704
    %v1708 = vld [vmem:[#allocation4 + $0x388] sm:$0xff]
    %v1709 = vld [vmem:[#allocation4 + $0x390] sm:$0xff]
    %v1710 = vld [vmem:[#allocation4 + $0x398] sm:$0xff]
    %v1711 = vld [vmem:[#allocation4 + $0x3a0] sm:$0xff]
    %v1712 = vld [vmem:[#allocation4 + $0x3a8] sm:$0x1]
    %v1713 = vperm.slane %v1712, 0
    %v1715 = vsel %vm255, %v1705, 0
    %v1718 = vsel %vm255, %v1706, 0
    %v1721 = vsel %vm255, %v1707, 0
    %1723 = vmatpush.msra.mxu0 0.0
    %1724 = vmatpush.msra.mxu0 0.0
    %1725 = vmatpush.msra.mxu0 0.0
    %1726 = vmatpush.msra.mxu0 0.0
    %1727 = vmatpush.msra.mxu0 0.0
    %1728 = vmatpush.msra.mxu0 0.0
    %1729 = vmatpush.msra.mxu0 0.0
    %1730 = vmatpush.msra.mxu0 0.0
    %1731 = vmatpush.msra.mxu0 0.0
    %1732 = vmatpush.msra.mxu0 0.0
    %1733 = vmatpush.msra.mxu0 0.0
    %1734 = vmatpush.msra.mxu0 0.0
    %1735 = vmatpush.msra.mxu0 %v1711
    %1736 = vmatpush.msra.mxu0 %v1710
    %1737 = vmatpush.msra.mxu0 %v1709
    %1738 = vmatpush.msra.mxu0 %v1708
    %1739 = vmatmul.f32.gmra.mxu0 %v1715
    %v1740 = vpop.f32.mrf.mxu0
    %v1741 = vadd.f32 %v1713, %v1740
    %1742 = vmatmul.f32.gmra.mxu0 %v1718
    %v1743 = vpop.f32.mrf.mxu0
    %v1744 = vadd.f32 %v1713, %v1743
    %1745 = vmatmul.f32.gmra.mxu0 %v1721
    %v1746 = vpop.f32.mrf.mxu0
    %v1747 = vadd.f32 %v1713, %v1746
    %1748 = vdwg.mxu0
    %v1749 = vmax.f32 %v1741, 0.0
    %v1750 = vmax.f32 %v1744, 0.0
    %v1751 = vmax.f32 %v1747, 0.0
    %v1752 = vld [vmem:[#allocation4 + $0x3b0] sm:$0xff]
    %v1753 = vld [vmem:[#allocation4 + $0x3b8] sm:$0xff]
    %v1754 = vld [vmem:[#allocation4 + $0x3c0] sm:$0xff]
    %v1755 = vld [vmem:[#allocation4 + $0x3c8] sm:$0xff]
    %v1757 = vsel %vm255, %v1749, 0
    %v1760 = vsel %vm255, %v1750, 0
    %v1763 = vsel %vm255, %v1751, 0
    %1765 = vmatpush.msra.mxu0 0.0
    %1766 = vmatpush.msra.mxu0 0.0
    %1767 = vmatpush.msra.mxu0 0.0
    %1768 = vmatpush.msra.mxu0 0.0
    %1769 = vmatpush.msra.mxu0 0.0
    %1770 = vmatpush.msra.mxu0 0.0
    %1771 = vmatpush.msra.mxu0 0.0
    %1772 = vmatpush.msra.mxu0 0.0
    %1773 = vmatpush.msra.mxu0 0.0
    %1774 = vmatpush.msra.mxu0 0.0
    %1775 = vmatpush.msra.mxu0 0.0
    %1776 = vmatpush.msra.mxu0 0.0
    %1777 = vmatpush.msra.mxu0 %v1755
    %1778 = vmatpush.msra.mxu0 %v1754
    %1779 = vmatpush.msra.mxu0 %v1753
    %1780 = vmatpush.msra.mxu0 %v1752
    %1781 = vmatmul.f32.gmra.mxu0 %v1757
    %v1782 = vpop.f32.mrf.mxu0
    %v1783 = vadd.f32 0.0, %v1782
    %1784 = vmatmul.f32.gmra.mxu0 %v1760
    %v1785 = vpop.f32.mrf.mxu0
    %v1786 = vadd.f32 0.0, %v1785
    %1787 = vmatmul.f32.gmra.mxu0 %v1763
    %v1788 = vpop.f32.mrf.mxu0
    %v1789 = vadd.f32 0.0, %v1788
    %1790 = vdwg.mxu0
    %vm1791 = vmor %vm37, %vm117
    %vm1792 = vmor %vm38, %vm118
    %vm1793 = vmor %vm39, %vm119
    %v1794 = vsel %vm1791, 1, 0
    %v1795 = vsel %vm1792, 1, 0
    %v1796 = vsel %vm1793, 1, 0
    %vm1797 = vcmp.eq.s32.totalorder %v1794, 1
    %vm1798 = vcmp.eq.s32.totalorder %v1795, 1
    %vm1799 = vcmp.eq.s32.totalorder %v1796, 1
    %v1800 = vsel %vm1797, %v1783, 0.0
    %v1801 = vsel %vm1798, %v1786, 0.0
    %v1802 = vsel %vm1799, %v1789, 0.0
    %v1803 = vadd.f32 %v1800, 0.0
    %v1804 = vadd.f32 %v1801, 0.0
    %v1805 = vadd.f32 %v1802, 0.0
    %v1806 = vld [vmem:[#allocation4 + $0x3d0] sm:$0xff]
    %v1807 = vld [vmem:[#allocation4 + $0x3d8] sm:$0xff]
    %v1808 = vld [vmem:[#allocation4 + $0x3e0] sm:$0xff]
    %v1809 = vld [vmem:[#allocation4 + $0x3e8] sm:$0xff]
    %1810 = vmatpush.msra.mxu0 0.0
    %1811 = vmatpush.msra.mxu0 0.0
    %1812 = vmatpush.msra.mxu0 0.0
    %1813 = vmatpush.msra.mxu0 0.0
    %1814 = vmatpush.msra.mxu0 0.0
    %1815 = vmatpush.msra.mxu0 0.0
    %1816 = vmatpush.msra.mxu0 0.0
    %1817 = vmatpush.msra.mxu0 0.0
    %1818 = vmatpush.msra.mxu0 0.0
    %1819 = vmatpush.msra.mxu0 0.0
    %1820 = vmatpush.msra.mxu0 0.0
    %1821 = vmatpush.msra.mxu0 0.0
    %1822 = vmatpush.msra.mxu0 %v1809
    %1823 = vmatpush.msra.mxu0 %v1808
    %1824 = vmatpush.msra.mxu0 %v1807
    %1825 = vmatpush.msra.mxu0 %v1806
    %1826 = vmatmul.f32.gmra.mxu0 %v1757
    %v1827 = vpop.f32.mrf.mxu0
    %v1828 = vadd.f32 0.0, %v1827
    %1829 = vmatmul.f32.gmra.mxu0 %v1760
    %v1830 = vpop.f32.mrf.mxu0
    %v1831 = vadd.f32 0.0, %v1830
    %1832 = vmatmul.f32.gmra.mxu0 %v1763
    %v1833 = vpop.f32.mrf.mxu0
    %v1834 = vadd.f32 0.0, %v1833
    %1835 = vdwg.mxu0
    %vm1836 = vmor %vm45, %vm125
    %vm1837 = vmor %vm46, %vm126
    %vm1838 = vmor %vm47, %vm127
    %v1839 = vsel %vm1836, 1, 0
    %v1840 = vsel %vm1837, 1, 0
    %v1841 = vsel %vm1838, 1, 0
    %vm1842 = vcmp.eq.s32.totalorder %v1839, 1
    %vm1843 = vcmp.eq.s32.totalorder %v1840, 1
    %vm1844 = vcmp.eq.s32.totalorder %v1841, 1
    %v1845 = vsel %vm1842, %v1828, 0.0
    %v1846 = vsel %vm1843, %v1831, 0.0
    %v1847 = vsel %vm1844, %v1834, 0.0
    %v1848 = vadd.f32 %v1803, %v1845
    %v1849 = vadd.f32 %v1804, %v1846
    %v1850 = vadd.f32 %v1805, %v1847
    %v1851 = vld [vmem:[#allocation4 + $0x3f0] sm:$0xff]
    %v1852 = vld [vmem:[#allocation4 + $0x3f8] sm:$0xff]
    %v1853 = vld [vmem:[#allocation4 + $0x400] sm:$0xff]
    %v1854 = vld [vmem:[#allocation4 + $0x408] sm:$0xff]
    %1855 = vmatpush.msra.mxu0 0.0
    %1856 = vmatpush.msra.mxu0 0.0
    %1857 = vmatpush.msra.mxu0 0.0
    %1858 = vmatpush.msra.mxu0 0.0
    %1859 = vmatpush.msra.mxu0 0.0
    %1860 = vmatpush.msra.mxu0 0.0
    %1861 = vmatpush.msra.mxu0 0.0
    %1862 = vmatpush.msra.mxu0 0.0
    %1863 = vmatpush.msra.mxu0 0.0
    %1864 = vmatpush.msra.mxu0 0.0
    %1865 = vmatpush.msra.mxu0 0.0
    %1866 = vmatpush.msra.mxu0 0.0
    %1867 = vmatpush.msra.mxu0 %v1854
    %1868 = vmatpush.msra.mxu0 %v1853
    %1869 = vmatpush.msra.mxu0 %v1852
    %1870 = vmatpush.msra.mxu0 %v1851
    %1871 = vmatmul.f32.gmra.mxu0 %v1757
    %v1872 = vpop.f32.mrf.mxu0
    %v1873 = vadd.f32 0.0, %v1872
    %1874 = vmatmul.f32.gmra.mxu0 %v1760
    %v1875 = vpop.f32.mrf.mxu0
    %v1876 = vadd.f32 0.0, %v1875
    %1877 = vmatmul.f32.gmra.mxu0 %v1763
    %v1878 = vpop.f32.mrf.mxu0
    %v1879 = vadd.f32 0.0, %v1878
    %1880 = vdwg.mxu0
    %vm1881 = vmor %vm53, %vm133
    %vm1882 = vmor %vm54, %vm134
    %vm1883 = vmor %vm55, %vm135
    %v1884 = vsel %vm1881, 1, 0
    %v1885 = vsel %vm1882, 1, 0
    %v1886 = vsel %vm1883, 1, 0
    %vm1887 = vcmp.eq.s32.totalorder %v1884, 1
    %vm1888 = vcmp.eq.s32.totalorder %v1885, 1
    %vm1889 = vcmp.eq.s32.totalorder %v1886, 1
    %v1890 = vsel %vm1887, %v1873, 0.0
    %v1891 = vsel %vm1888, %v1876, 0.0
    %v1892 = vsel %vm1889, %v1879, 0.0
    %v1893 = vadd.f32 %v1848, %v1890
    %v1894 = vadd.f32 %v1849, %v1891
    %v1895 = vadd.f32 %v1850, %v1892
    %v1896 = vld [vmem:[#allocation4 + $0x410] sm:$0xff]
    %v1897 = vld [vmem:[#allocation4 + $0x418] sm:$0xff]
    %v1898 = vld [vmem:[#allocation4 + $0x420] sm:$0xff]
    %v1899 = vld [vmem:[#allocation4 + $0x428] sm:$0xff]
    %1900 = vmatpush.msra.mxu0 0.0
    %1901 = vmatpush.msra.mxu0 0.0
    %1902 = vmatpush.msra.mxu0 0.0
    %1903 = vmatpush.msra.mxu0 0.0
    %1904 = vmatpush.msra.mxu0 0.0
    %1905 = vmatpush.msra.mxu0 0.0
    %1906 = vmatpush.msra.mxu0 0.0
    %1907 = vmatpush.msra.mxu0 0.0
    %1908 = vmatpush.msra.mxu0 0.0
    %1909 = vmatpush.msra.mxu0 0.0
    %1910 = vmatpush.msra.mxu0 0.0
    %1911 = vmatpush.msra.mxu0 0.0
    %1912 = vmatpush.msra.mxu0 %v1899
    %1913 = vmatpush.msra.mxu0 %v1898
    %1914 = vmatpush.msra.mxu0 %v1897
    %1915 = vmatpush.msra.mxu0 %v1896
    %1916 = vmatmul.f32.gmra.mxu0 %v1757
    %v1917 = vpop.f32.mrf.mxu0
    %v1918 = vadd.f32 0.0, %v1917
    %1919 = vmatmul.f32.gmra.mxu0 %v1760
    %v1920 = vpop.f32.mrf.mxu0
    %v1921 = vadd.f32 0.0, %v1920
    %1922 = vmatmul.f32.gmra.mxu0 %v1763
    %v1923 = vpop.f32.mrf.mxu0
    %v1924 = vadd.f32 0.0, %v1923
    %1925 = vdwg.mxu0
    %vm1926 = vmor %vm61, %vm141
    %vm1927 = vmor %vm62, %vm142
    %vm1928 = vmor %vm63, %vm143
    %v1929 = vsel %vm1926, 1, 0
    %v1930 = vsel %vm1927, 1, 0
    %v1931 = vsel %vm1928, 1, 0
    %vm1932 = vcmp.eq.s32.totalorder %v1929, 1
    %vm1933 = vcmp.eq.s32.totalorder %v1930, 1
    %vm1934 = vcmp.eq.s32.totalorder %v1931, 1
    %v1935 = vsel %vm1932, %v1918, 0.0
    %v1936 = vsel %vm1933, %v1921, 0.0
    %v1937 = vsel %vm1934, %v1924, 0.0
    %v1938 = vadd.f32 %v1893, %v1935
    %v1939 = vadd.f32 %v1894, %v1936
    %v1940 = vadd.f32 %v1895, %v1937
    %v1941 = vld [vmem:[#allocation4 + $0x430] sm:$0xff]
    %v1942 = vld [vmem:[#allocation4 + $0x438] sm:$0xff]
    %v1943 = vld [vmem:[#allocation4 + $0x440] sm:$0xff]
    %v1944 = vld [vmem:[#allocation4 + $0x448] sm:$0xff]
    %1945 = vmatpush.msra.mxu0 0.0
    %1946 = vmatpush.msra.mxu0 0.0
    %1947 = vmatpush.msra.mxu0 0.0
    %1948 = vmatpush.msra.mxu0 0.0
    %1949 = vmatpush.msra.mxu0 0.0
    %1950 = vmatpush.msra.mxu0 0.0
    %1951 = vmatpush.msra.mxu0 0.0
    %1952 = vmatpush.msra.mxu0 0.0
    %1953 = vmatpush.msra.mxu0 0.0
    %1954 = vmatpush.msra.mxu0 0.0
    %1955 = vmatpush.msra.mxu0 0.0
    %1956 = vmatpush.msra.mxu0 0.0
    %1957 = vmatpush.msra.mxu0 %v1944
    %1958 = vmatpush.msra.mxu0 %v1943
    %1959 = vmatpush.msra.mxu0 %v1942
    %1960 = vmatpush.msra.mxu0 %v1941
    %1961 = vmatmul.f32.gmra.mxu0 %v1757
    %v1962 = vpop.f32.mrf.mxu0
    %v1963 = vadd.f32 0.0, %v1962
    %1964 = vmatmul.f32.gmra.mxu0 %v1760
    %v1965 = vpop.f32.mrf.mxu0
    %v1966 = vadd.f32 0.0, %v1965
    %1967 = vmatmul.f32.gmra.mxu0 %v1763
    %v1968 = vpop.f32.mrf.mxu0
    %v1969 = vadd.f32 0.0, %v1968
    %1970 = vdwg.mxu0
    %vm1971 = vmor %vm69, %vm149
    %vm1972 = vmor %vm70, %vm150
    %vm1973 = vmor %vm71, %vm151
    %v1974 = vsel %vm1971, 1, 0
    %v1975 = vsel %vm1972, 1, 0
    %v1976 = vsel %vm1973, 1, 0
    %vm1977 = vcmp.eq.s32.totalorder %v1974, 1
    %vm1978 = vcmp.eq.s32.totalorder %v1975, 1
    %vm1979 = vcmp.eq.s32.totalorder %v1976, 1
    %v1980 = vsel %vm1977, %v1963, 0.0
    %v1981 = vsel %vm1978, %v1966, 0.0
    %v1982 = vsel %vm1979, %v1969, 0.0
    %v1983 = vadd.f32 %v1938, %v1980
    %v1984 = vadd.f32 %v1939, %v1981
    %v1985 = vadd.f32 %v1940, %v1982
    %v1986 = vld [vmem:[#allocation4 + $0x450] sm:$0xff]
    %v1987 = vld [vmem:[#allocation4 + $0x458] sm:$0xff]
    %v1988 = vld [vmem:[#allocation4 + $0x460] sm:$0xff]
    %v1989 = vld [vmem:[#allocation4 + $0x468] sm:$0xff]
    %1990 = vmatpush.msra.mxu0 0.0
    %1991 = vmatpush.msra.mxu0 0.0
    %1992 = vmatpush.msra.mxu0 0.0
    %1993 = vmatpush.msra.mxu0 0.0
    %1994 = vmatpush.msra.mxu0 0.0
    %1995 = vmatpush.msra.mxu0 0.0
    %1996 = vmatpush.msra.mxu0 0.0
    %1997 = vmatpush.msra.mxu0 0.0
    %1998 = vmatpush.msra.mxu0 0.0
    %1999 = vmatpush.msra.mxu0 0.0
    %2000 = vmatpush.msra.mxu0 0.0
    %2001 = vmatpush.msra.mxu0 0.0
    %2002 = vmatpush.msra.mxu0 %v1989
    %2003 = vmatpush.msra.mxu0 %v1988
    %2004 = vmatpush.msra.mxu0 %v1987
    %2005 = vmatpush.msra.mxu0 %v1986
    %2006 = vmatmul.f32.gmra.mxu0 %v1757
    %v2007 = vpop.f32.mrf.mxu0
    %v2008 = vadd.f32 0.0, %v2007
    %2009 = vmatmul.f32.gmra.mxu0 %v1760
    %v2010 = vpop.f32.mrf.mxu0
    %v2011 = vadd.f32 0.0, %v2010
    %2012 = vmatmul.f32.gmra.mxu0 %v1763
    %v2013 = vpop.f32.mrf.mxu0
    %v2014 = vadd.f32 0.0, %v2013
    %2015 = vdwg.mxu0
    %vm2016 = vmor %vm77, %vm157
    %vm2017 = vmor %vm78, %vm158
    %vm2018 = vmor %vm79, %vm159
    %v2019 = vsel %vm2016, 1, 0
    %v2020 = vsel %vm2017, 1, 0
    %v2021 = vsel %vm2018, 1, 0
    %vm2022 = vcmp.eq.s32.totalorder %v2019, 1
    %vm2023 = vcmp.eq.s32.totalorder %v2020, 1
    %vm2024 = vcmp.eq.s32.totalorder %v2021, 1
    %v2025 = vsel %vm2022, %v2008, 0.0
    %v2026 = vsel %vm2023, %v2011, 0.0
    %v2027 = vsel %vm2024, %v2014, 0.0
    %v2028 = vadd.f32 %v1983, %v2025
    %v2029 = vadd.f32 %v1984, %v2026
    %v2030 = vadd.f32 %v1985, %v2027
    %v2031 = vld [vmem:[#allocation4 + $0x470] sm:$0xff]
    %v2032 = vld [vmem:[#allocation4 + $0x478] sm:$0xff]
    %v2033 = vld [vmem:[#allocation4 + $0x480] sm:$0xff]
    %v2034 = vld [vmem:[#allocation4 + $0x488] sm:$0xff]
    %2035 = vmatpush.msra.mxu0 0.0
    %2036 = vmatpush.msra.mxu0 0.0
    %2037 = vmatpush.msra.mxu0 0.0
    %2038 = vmatpush.msra.mxu0 0.0
    %2039 = vmatpush.msra.mxu0 0.0
    %2040 = vmatpush.msra.mxu0 0.0
    %2041 = vmatpush.msra.mxu0 0.0
    %2042 = vmatpush.msra.mxu0 0.0
    %2043 = vmatpush.msra.mxu0 0.0
    %2044 = vmatpush.msra.mxu0 0.0
    %2045 = vmatpush.msra.mxu0 0.0
    %2046 = vmatpush.msra.mxu0 0.0
    %2047 = vmatpush.msra.mxu0 %v2034
    %2048 = vmatpush.msra.mxu0 %v2033
    %2049 = vmatpush.msra.mxu0 %v2032
    %2050 = vmatpush.msra.mxu0 %v2031
    %2051 = vmatmul.f32.gmra.mxu0 %v1757
    %v2052 = vpop.f32.mrf.mxu0
    %v2053 = vadd.f32 0.0, %v2052
    %2054 = vmatmul.f32.gmra.mxu0 %v1760
    %v2055 = vpop.f32.mrf.mxu0
    %v2056 = vadd.f32 0.0, %v2055
    %2057 = vmatmul.f32.gmra.mxu0 %v1763
    %v2058 = vpop.f32.mrf.mxu0
    %v2059 = vadd.f32 0.0, %v2058
    %2060 = vdwg.mxu0
    %vm2061 = vmor %vm85, %vm165
    %vm2062 = vmor %vm86, %vm166
    %vm2063 = vmor %vm87, %vm167
    %v2064 = vsel %vm2061, 1, 0
    %v2065 = vsel %vm2062, 1, 0
    %v2066 = vsel %vm2063, 1, 0
    %vm2067 = vcmp.eq.s32.totalorder %v2064, 1
    %vm2068 = vcmp.eq.s32.totalorder %v2065, 1
    %vm2069 = vcmp.eq.s32.totalorder %v2066, 1
    %v2070 = vsel %vm2067, %v2053, 0.0
    %v2071 = vsel %vm2068, %v2056, 0.0
    %v2072 = vsel %vm2069, %v2059, 0.0
    %v2073 = vadd.f32 %v2028, %v2070
    %v2074 = vadd.f32 %v2029, %v2071
    %v2075 = vadd.f32 %v2030, %v2072
    %v2076 = vld [vmem:[#allocation4 + $0x490] sm:$0xff]
    %v2077 = vld [vmem:[#allocation4 + $0x498] sm:$0xff]
    %v2078 = vld [vmem:[#allocation4 + $0x4a0] sm:$0xff]
    %v2079 = vld [vmem:[#allocation4 + $0x4a8] sm:$0xff]
    %2080 = vmatpush.msra.mxu0 0.0
    %2081 = vmatpush.msra.mxu0 0.0
    %2082 = vmatpush.msra.mxu0 0.0
    %2083 = vmatpush.msra.mxu0 0.0
    %2084 = vmatpush.msra.mxu0 0.0
    %2085 = vmatpush.msra.mxu0 0.0
    %2086 = vmatpush.msra.mxu0 0.0
    %2087 = vmatpush.msra.mxu0 0.0
    %2088 = vmatpush.msra.mxu0 0.0
    %2089 = vmatpush.msra.mxu0 0.0
    %2090 = vmatpush.msra.mxu0 0.0
    %2091 = vmatpush.msra.mxu0 0.0
    %2092 = vmatpush.msra.mxu0 %v2079
    %2093 = vmatpush.msra.mxu0 %v2078
    %2094 = vmatpush.msra.mxu0 %v2077
    %2095 = vmatpush.msra.mxu0 %v2076
    %2096 = vmatmul.f32.gmra.mxu0 %v1757
    %v2097 = vpop.f32.mrf.mxu0
    %v2098 = vadd.f32 0.0, %v2097
    %2099 = vmatmul.f32.gmra.mxu0 %v1760
    %v2100 = vpop.f32.mrf.mxu0
    %v2101 = vadd.f32 0.0, %v2100
    %2102 = vmatmul.f32.gmra.mxu0 %v1763
    %v2103 = vpop.f32.mrf.mxu0
    %v2104 = vadd.f32 0.0, %v2103
    %2105 = vdwg.mxu0
    %vm2106 = vmor %vm93, %vm173
    %vm2107 = vmor %vm94, %vm174
    %vm2108 = vmor %vm95, %vm175
    %v2109 = vsel %vm2106, 1, 0
    %v2110 = vsel %vm2107, 1, 0
    %v2111 = vsel %vm2108, 1, 0
    %vm2112 = vcmp.eq.s32.totalorder %v2109, 1
    %vm2113 = vcmp.eq.s32.totalorder %v2110, 1
    %vm2114 = vcmp.eq.s32.totalorder %v2111, 1
    %v2115 = vsel %vm2112, %v2098, 0.0
    %v2116 = vsel %vm2113, %v2101, 0.0
    %v2117 = vsel %vm2114, %v2104, 0.0
    %v2118 = vadd.f32 %v2073, %v2115
    %v2119 = vadd.f32 %v2074, %v2116
    %v2120 = vadd.f32 %v2075, %v2117
    %v2121 = vld [vmem:[#allocation4 + $0x4b0] sm:$0xff]
    %v2122 = vld [vmem:[#allocation4 + $0x4b8] sm:$0xff]
    %v2123 = vld [vmem:[#allocation4 + $0x4c0] sm:$0xff]
    %v2124 = vld [vmem:[#allocation4 + $0x4c8] sm:$0xff]
    %2125 = vmatpush.msra.mxu0 0.0
    %2126 = vmatpush.msra.mxu0 0.0
    %2127 = vmatpush.msra.mxu0 0.0
    %2128 = vmatpush.msra.mxu0 0.0
    %2129 = vmatpush.msra.mxu0 0.0
    %2130 = vmatpush.msra.mxu0 0.0
    %2131 = vmatpush.msra.mxu0 0.0
    %2132 = vmatpush.msra.mxu0 0.0
    %2133 = vmatpush.msra.mxu0 0.0
    %2134 = vmatpush.msra.mxu0 0.0
    %2135 = vmatpush.msra.mxu0 0.0
    %2136 = vmatpush.msra.mxu0 0.0
    %2137 = vmatpush.msra.mxu0 %v2124
    %2138 = vmatpush.msra.mxu0 %v2123
    %2139 = vmatpush.msra.mxu0 %v2122
    %2140 = vmatpush.msra.mxu0 %v2121
    %2141 = vmatmul.f32.gmra.mxu0 %v1757
    %v2142 = vpop.f32.mrf.mxu0
    %v2143 = vadd.f32 0.0, %v2142
    %2144 = vmatmul.f32.gmra.mxu0 %v1760
    %v2145 = vpop.f32.mrf.mxu0
    %v2146 = vadd.f32 0.0, %v2145
    %2147 = vmatmul.f32.gmra.mxu0 %v1763
    %v2148 = vpop.f32.mrf.mxu0
    %v2149 = vadd.f32 0.0, %v2148
    %2150 = vdwg.mxu0
    %vm2151 = vmor %vm101, %vm181
    %vm2152 = vmor %vm102, %vm182
    %vm2153 = vmor %vm103, %vm183
    %v2154 = vsel %vm2151, 1, 0
    %v2155 = vsel %vm2152, 1, 0
    %v2156 = vsel %vm2153, 1, 0
    %vm2157 = vcmp.eq.s32.totalorder %v2154, 1
    %vm2158 = vcmp.eq.s32.totalorder %v2155, 1
    %vm2159 = vcmp.eq.s32.totalorder %v2156, 1
    %v2160 = vsel %vm2157, %v2143, 0.0
    %v2161 = vsel %vm2158, %v2146, 0.0
    %v2162 = vsel %vm2159, %v2149, 0.0
    %v2163 = vadd.f32 %v2118, %v2160
    %v2164 = vadd.f32 %v2119, %v2161
    %v2165 = vadd.f32 %v2120, %v2162
    %v2166 = vld [vmem:[#allocation4 + $0x4d0] sm:$0xff]
    %v2167 = vld [vmem:[#allocation4 + $0x4d8] sm:$0xff]
    %v2168 = vld [vmem:[#allocation4 + $0x4e0] sm:$0xff]
    %v2169 = vld [vmem:[#allocation4 + $0x4e8] sm:$0xff]
    %2170 = vmatpush.msra.mxu0 0.0
    %2171 = vmatpush.msra.mxu0 0.0
    %2172 = vmatpush.msra.mxu0 0.0
    %2173 = vmatpush.msra.mxu0 0.0
    %2174 = vmatpush.msra.mxu0 0.0
    %2175 = vmatpush.msra.mxu0 0.0
    %2176 = vmatpush.msra.mxu0 0.0
    %2177 = vmatpush.msra.mxu0 0.0
    %2178 = vmatpush.msra.mxu0 0.0
    %2179 = vmatpush.msra.mxu0 0.0
    %2180 = vmatpush.msra.mxu0 0.0
    %2181 = vmatpush.msra.mxu0 0.0
    %2182 = vmatpush.msra.mxu0 %v2169
    %2183 = vmatpush.msra.mxu0 %v2168
    %2184 = vmatpush.msra.mxu0 %v2167
    %2185 = vmatpush.msra.mxu0 %v2166
    %2186 = vmatmul.f32.gmra.mxu0 %v1757
    %v2187 = vpop.f32.mrf.mxu0
    %v2188 = vadd.f32 0.0, %v2187
    %2189 = vmatmul.f32.gmra.mxu0 %v1760
    %v2190 = vpop.f32.mrf.mxu0
    %v2191 = vadd.f32 0.0, %v2190
    %2192 = vmatmul.f32.gmra.mxu0 %v1763
    %v2193 = vpop.f32.mrf.mxu0
    %v2194 = vadd.f32 0.0, %v2193
    %2195 = vdwg.mxu0
    %vm2196 = vmor %vm109, %vm189
    %vm2197 = vmor %vm110, %vm190
    %vm2198 = vmor %vm111, %vm191
    %v2199 = vsel %vm2196, 1, 0
    %v2200 = vsel %vm2197, 1, 0
    %v2201 = vsel %vm2198, 1, 0
    %vm2202 = vcmp.eq.s32.totalorder %v2199, 1
    %vm2203 = vcmp.eq.s32.totalorder %v2200, 1
    %vm2204 = vcmp.eq.s32.totalorder %v2201, 1
    %v2205 = vsel %vm2202, %v2188, 0.0
    %v2206 = vsel %vm2203, %v2191, 0.0
    %v2207 = vsel %vm2204, %v2194, 0.0
    %v2208 = vadd.f32 %v2163, %v2205
    %v2209 = vadd.f32 %v2164, %v2206
    %v2210 = vadd.f32 %v2165, %v2207
    %v2211 = vmul.u32 %v34, 10
    %vm2212 = vcmp.ge.s32.totalorder %v198, %v2211
    %v2213 = vadd.s32 %v34, 1
    %v2214 = vmul.u32 %v2213, 10
    %vm2215 = vcmp.lt.s32.totalorder %v198, %v2214
    %vm2216 = vmand %vm2212, %vm2215
    %v2217 = vsel %vm2216, 1, 0
    %v2218 = vcvt.s32.f32 %v2217
    %v2219 = vld [vmem:[#allocation4 + $0x4f0] sm:$0x1]
    %v2220 = vperm.slane %v2219, 0
    %v2222 = vsel %vm541, %v2218, 0
    %v2225 = vsel %vm668, %v2210, 0
    %2227 = vmatpush.msra.mxu0 0.0
    %2228 = vmatpush.msra.mxu0 0.0
    %2229 = vmatpush.msra.mxu0 0.0
    %2230 = vmatpush.msra.mxu0 0.0
    %2231 = vmatpush.msra.mxu0 0.0
    %2232 = vmatpush.msra.mxu0 0.0
    %2233 = vmatpush.msra.mxu0 0.0
    %2234 = vmatpush.msra.mxu0 0.0
    %2235 = vmatpush.msra.mxu0 0.0
    %2236 = vmatpush.msra.mxu0 0.0
    %2237 = vmatpush.msra.mxu0 0.0
    %2238 = vmatpush.msra.mxu0 0.0
    %2239 = vmatpush.msra.mxu0 0.0
    %2240 = vmatpush.msra.mxu0 %v2225
    %2241 = vmatpush.msra.mxu0 %v2209
    %2242 = vmatpush.msra.mxu0 %v2208
    %2243 = vmatmul.f32.gmra.mxu0 %v2222
    %v2244 = vpop.f32.mrf.mxu0
    %v2245 = vadd.f32 %v2220, %v2244
    %2246 = vdwg.mxu0
    %v2247 = vmax.f32 %v2245, 0.0
    %v2248 = vld [vmem:[#allocation4 + $0x4f8] sm:$0xff]
    %v2249 = vld [vmem:[#allocation4 + $0x500] sm:$0xff]
    %v2250 = vld [vmem:[#allocation4 + $0x508] sm:$0xff]
    %v2251 = vld [vmem:[#allocation4 + $0x510] sm:$0xff]
    %v2252 = vld [vmem:[#allocation4 + $0x518] sm:$0xff]
    %v2253 = vld [vmem:[#allocation4 + $0x520] sm:$0xff]
    %v2254 = vld [vmem:[#allocation4 + $0x528] sm:$0xff]
    %v2255 = vld [vmem:[#allocation4 + $0x530] sm:$0xff]
    %v2256 = vld [vmem:[#allocation4 + $0x538] sm:$0xff]
    %v2257 = vld [vmem:[#allocation4 + $0x540] sm:$0xff]
    %v2258 = vld [vmem:[#allocation4 + $0x548] sm:$0xff]
    %v2259 = vld [vmem:[#allocation4 + $0x550] sm:$0xff]
    %v2260 = vld [vmem:[#allocation4 + $0x558] sm:$0xff]
    %v2261 = vld [vmem:[#allocation4 + $0x560] sm:$0xff]
    %v2262 = vld [vmem:[#allocation4 + $0x568] sm:$0xff]
    %v2263 = vld [vmem:[#allocation4 + $0x570] sm:$0xff]
    %v2264 = vld [vmem:[#allocation4 + $0x578] sm:$0x1]
    %v2265 = vperm.slane %v2264, 0
    %2266 = vmatpush.msra.mxu0 %v2263
    %2267 = vmatpush.msra.mxu0 %v2262
    %2268 = vmatpush.msra.mxu0 %v2261
    %2269 = vmatpush.msra.mxu0 %v2260
    %2270 = vmatpush.msra.mxu0 %v2259
    %2271 = vmatpush.msra.mxu0 %v2258
    %2272 = vmatpush.msra.mxu0 %v2257
    %2273 = vmatpush.msra.mxu0 %v2256
    %2274 = vmatpush.msra.mxu0 %v2255
    %2275 = vmatpush.msra.mxu0 %v2254
    %2276 = vmatpush.msra.mxu0 %v2253
    %2277 = vmatpush.msra.mxu0 %v2252
    %2278 = vmatpush.msra.mxu0 %v2251
    %2279 = vmatpush.msra.mxu0 %v2250
    %2280 = vmatpush.msra.mxu0 %v2249
    %2281 = vmatpush.msra.mxu0 %v2248
    %2282 = vmatmul.f32.gmra.mxu0 %v2247
    %v2283 = vpop.f32.mrf.mxu0
    %v2284 = vadd.f32 %v2265, %v2283
    %2285 = vdwg.mxu0
    %v2286 = vmax.f32 %v2284, 0.0
    %v2287 = vld [vmem:[#allocation4 + $0x580] sm:$0xff]
    %v2288 = vld [vmem:[#allocation4 + $0x588] sm:$0xff]
    %v2289 = vld [vmem:[#allocation4 + $0x590] sm:$0xff]
    %v2290 = vld [vmem:[#allocation4 + $0x598] sm:$0xff]
    %v2291 = vld [vmem:[#allocation4 + $0x5a0] sm:$0xff]
    %v2292 = vld [vmem:[#allocation4 + $0x5a8] sm:$0xff]
    %v2293 = vld [vmem:[#allocation4 + $0x5b0] sm:$0xff]
    %v2294 = vld [vmem:[#allocation4 + $0x5b8] sm:$0xff]
    %v2295 = vld [vmem:[#allocation4 + $0x5c0] sm:$0x1]
    %v2296 = vperm.slane %v2295, 0
    %vm2297 = vcmask 523264
    %v2299 = vsel %vm2297, %v2286, 0
    %2301 = vmatpush.msra.mxu0 0.0
    %2302 = vmatpush.msra.mxu0 0.0
    %2303 = vmatpush.msra.mxu0 0.0
    %2304 = vmatpush.msra.mxu0 0.0
    %2305 = vmatpush.msra.mxu0 0.0
    %2306 = vmatpush.msra.mxu0 0.0
    %2307 = vmatpush.msra.mxu0 0.0
    %2308 = vmatpush.msra.mxu0 0.0
    %2309 = vmatpush.msra.mxu0 %v2294
    %2310 = vmatpush.msra.mxu0 %v2293
    %2311 = vmatpush.msra.mxu0 %v2292
    %2312 = vmatpush.msra.mxu0 %v2291
    %2313 = vmatpush.msra.mxu0 %v2290
    %2314 = vmatpush.msra.mxu0 %v2289
    %2315 = vmatpush.msra.mxu0 %v2288
    %2316 = vmatpush.msra.mxu0 %v2287
    %2317 = vmatmul.f32.gmra.mxu0 %v2299
    %v2318 = vpop.f32.mrf.mxu0
    %v2319 = vadd.f32 %v2296, %v2318
    %2320 = vdwg.mxu0
    %2321 = vst [vmem:[%s2] sm:$0x3] %v2319
    // Predicated region
    $region10: #{bert_forward.1} parent=1 // pred_check
      _
    $region11: #{bert_forward.1} parent=1 // pred_check_branch
      %2323 = sbr.rel (0) target = $region13
    $region12: #{bert_forward.1} parent=1 // pred_region
      _
    $region13: #{bert_forward.1} parent=1 // pred_fallthru
      _
    // Predicated region
    $region14: #{bert_forward.1} parent=1 // pred_check
      _
    $region15: #{bert_forward.1} parent=1 // pred_check_branch
      %2325 = sbr.rel (0) target = $region17
    $region16: #{bert_forward.1} parent=1 // pred_region
      _
    $region17: #{bert_forward.1} parent=1 // pred_fallthru
      _
    %2326 = vsyncpa [#allocation5], 1

</llo_original>
